<compile_context>
chip_gen: v7x
topology: tpu7x:2x2x1
jax: 0.10.0
libtpu: 0.0.40
codegen_flags: <defaults>
</compile_context>

<pallas_src>
import functools
import math

import jax
import jax.numpy as jnp
from jax import lax
from jax.experimental import pallas as pl
from jax.experimental.pallas import tpu as pltpu


# --------------------------- in-kernel math helpers ---------------------------

_SQRT_2_OVER_PI = 0.7978845608028654


def _layernorm(x, g, b, eps):
    mu = jnp.mean(x, axis=-1, keepdims=True)
    var = jnp.mean((x - mu) ** 2, axis=-1, keepdims=True)
    return (x - mu) * lax.rsqrt(var + eps) * g + b


def _gelu(x):
    # TODO(synk): HF Camembert uses exact erf GELU; tanh approximation keeps the
    # kernel on guaranteed-lowerable EUP ops (~1e-3 relative deviation).
    return 0.5 * x * (1.0 + jnp.tanh(_SQRT_2_OVER_PI * (x + 0.044715 * x * x * x)))


def _bdot(a, b, ca, cb):
    """Leading-dim-batched dot_general, f32 accumulation, no transposes."""
    return lax.dot_general(a, b, (((ca,), (cb,)), ((0,), (0,))),
                           preferred_element_type=jnp.float32)


# ------------------------------- fused kernel --------------------------------

def _camembert_pos_kernel(emb_ref, mask_ref, embg_ref, embb_ref,
                          wq_ref, bq_ref, wk_ref, bk_ref, wv_ref, bv_ref,
                          wo_ref, bo_ref, ln1g_ref, ln1b_ref,
                          w1_ref, b1_ref, w2_ref, b2_ref, ln2g_ref, ln2b_ref,
                          posw_ref, posb_ref, o_ref, *, L, nH, scale, eps):
    """Whole model for one batch row-block: embed-LN -> L encoder layers -> head."""
    # Embedding LayerNorm (dropout: eval mode => identity).
    h = _layernorm(emb_ref[...], embg_ref[...], embb_ref[...], eps)      # (S, H)
    mask = mask_ref[...]                                                 # (1, 1, S) additive

    for l in range(L):  # L is a tiny compile-time constant
        # ---- self-attention: heads batched on the leading dim ----
        # (no lane-misaligned qkv column slices, no k.T, no head concatenation)
        xh = jnp.broadcast_to(h, (nH,) + h.shape)                        # (nH, S, H)
        q = _bdot(xh, wq_ref[l], 2, 1) + bq_ref[l]                       # (nH, S, dH)
        k = _bdot(xh, wk_ref[l], 2, 1) + bk_ref[l]
        v = _bdot(xh, wv_ref[l], 2, 1) + bv_ref[l]

        s = _bdot(q, k, 2, 2) * scale + mask                             # (nH, S, S)
        s = s - jnp.max(s, axis=-1, keepdims=True)
        p = jnp.exp(s)
        # divide -> EUP reciprocal (free slot vs VALU divide)
        p = p * pl.reciprocal(jnp.sum(p, axis=-1, keepdims=True), approx=True)
        ctx = _bdot(p, v, 2, 1)                                          # (nH, S, dH)

        # per-head output projection, summed over heads (no scatter / concat)
        proj = _bdot(ctx, wo_ref[l], 2, 1)                               # (nH, S, H)
        attn = proj[0]
        for hh in range(1, nH):
            attn = attn + proj[hh]
        attn = attn + bo_ref[l]                                          # (S, H)
        h = _layernorm(attn + h, ln1g_ref[l], ln1b_ref[l], eps)

        # ---- FFN: Linear -> GELU -> Linear, residual + LayerNorm 2 ----
        ff = jnp.dot(h, w1_ref[l], preferred_element_type=jnp.float32) + b1_ref[l]
        ff = _gelu(ff)
        ff = jnp.dot(ff, w2_ref[l], preferred_element_type=jnp.float32) + b2_ref[l]
        h = _layernorm(ff + h, ln2g_ref[l], ln2b_ref[l], eps)

    # ---- POS head into a lane-dense (S, 128) padded slab ----
    o_ref[...] = (jnp.dot(h, posw_ref[...], preferred_element_type=jnp.float32)
                  + posb_ref[...]).astype(o_ref.dtype)


# ---------------------------- model (small config) ----------------------------

CFG = dict(
    vocab_size=100,
    hidden_size=32,
    num_heads=2,
    num_layers=2,
    intermediate_size=64,
    max_position=64,
    nb_tags=18,
    layer_norm_eps=1e-5,
    pad_token_id=1,
)


def init_params(key, cfg):
    H, I = cfg["hidden_size"], cfg["intermediate_size"]

    def nrm(k, shape, scale=0.02):
        return scale * jax.random.normal(k, shape, dtype=jnp.float32)

    keys = iter(jax.random.split(key, 8 + 12 * cfg["num_layers"]))
    params = {
        "word_emb": nrm(next(keys), (cfg["vocab_size"], H)),
        "pos_emb": nrm(next(keys), (cfg["max_position"], H)),
        "type_emb": nrm(next(keys), (1, H)),
        "emb_ln_g": jnp.ones((H,), jnp.float32),
        "emb_ln_b": jnp.zeros((H,), jnp.float32),
        "pos_w": nrm(next(keys), (H, cfg["nb_tags"])),
        "pos_b": jnp.zeros((cfg["nb_tags"],), jnp.float32),
        "layers": [],
    }
    for _ in range(cfg["num_layers"]):
        lyr = {
            "wq": nrm(next(keys), (H, H)), "bq": jnp.zeros((H,), jnp.float32),
            "wk": nrm(next(keys), (H, H)), "bk": jnp.zeros((H,), jnp.float32),
            "wv": nrm(next(keys), (H, H)), "bv": jnp.zeros((H,), jnp.float32),
            "wo": nrm(next(keys), (H, H)), "bo": jnp.zeros((H,), jnp.float32),
            "ln1_g": jnp.ones((H,), jnp.float32), "ln1_b": jnp.zeros((H,), jnp.float32),
            "w1": nrm(next(keys), (H, I)), "b1": jnp.zeros((I,), jnp.float32),
            "w2": nrm(next(keys), (I, H)), "b2": jnp.zeros((H,), jnp.float32),
            "ln2_g": jnp.ones((H,), jnp.float32), "ln2_b": jnp.zeros((H,), jnp.float32),
        }
        params["layers"].append(lyr)
    return params


def camembert_pos_forward(params, input_ids, attention_mask, cfg=CFG):
    B, S = input_ids.shape
    H = cfg["hidden_size"]
    nH = cfg["num_heads"]
    dH = H // nH
    I = cfg["intermediate_size"]
    L = cfg["num_layers"]
    eps = cfg["layer_norm_eps"]
    pad = cfg["pad_token_id"]
    nb_tags = cfg["nb_tags"]
    assert H % nH == 0

    # --- embeddings (gathers in plain JAX) ---
    # RoBERTa/Camembert position ids derive from non-pad *input_ids*:
    #   cumsum(id != pad) * (id != pad) + padding_idx
    not_pad = (input_ids != pad).astype(jnp.int32)
    pos_ids = jnp.cumsum(not_pad, axis=1) * not_pad + pad
    word = params["word_emb"][input_ids]
    pos = params["pos_emb"][pos_ids]
    tok = params["type_emb"][jnp.zeros((B, S), jnp.int32)]
    emb = (word + pos + tok).astype(jnp.float32).reshape(B * S, H)

    # Additive attention mask, shaped (B, 1, S) for a clean per-batch BlockSpec.
    add_mask = ((1.0 - attention_mask.astype(jnp.float32)) * -1e9).reshape(B, 1, S)
    scale = 1.0 / math.sqrt(dH)

    # --- weight prep (cheap XLA ops, outside the kernel) ---
    def stack(name):
        return jnp.stack([lyr[name] for lyr in params["layers"]])

    # Per-head Q/K/V/O weights: head becomes a leading batch dim so the kernel
    # never slices lanes at non-128-aligned offsets.
    wq = stack("wq").reshape(L, H, nH, dH).transpose(0, 2, 1, 3)   # (L, nH, H, dH)
    wk = stack("wk").reshape(L, H, nH, dH).transpose(0, 2, 1, 3)
    wv = stack("wv").reshape(L, H, nH, dH).transpose(0, 2, 1, 3)
    bq = stack("bq").reshape(L, nH, 1, dH)
    bk = stack("bk").reshape(L, nH, 1, dH)
    bv = stack("bv").reshape(L, nH, 1, dH)
    wo = stack("wo").reshape(L, nH, dH, H)                          # (L, nH, dH, H)
    bo = stack("bo").reshape(L, 1, H)
    ln1g = stack("ln1_g").reshape(L, 1, H)
    ln1b = stack("ln1_b").reshape(L, 1, H)
    w1 = stack("w1")                                                # (L, H, I)
    b1 = stack("b1").reshape(L, 1, I)
    w2 = stack("w2")                                                # (L, I, H)
    b2 = stack("b2").reshape(L, 1, H)
    ln2g = stack("ln2_g").reshape(L, 1, H)
    ln2b = stack("ln2_b").reshape(L, 1, H)

    emb_g = params["emb_ln_g"].reshape(1, H)
    emb_b = params["emb_ln_b"].reshape(1, H)

    # POS head padded to a lane-dense 128-wide slab (unmasked vector stores).
    out_cols = 128 * ((nb_tags + 127) // 128)
    posw = jnp.pad(params["pos_w"], ((0, 0), (0, out_cols - nb_tags)))
    posb = jnp.pad(params["pos_b"], (0, out_cols - nb_tags)).reshape(1, out_cols)

    kernel = functools.partial(_camembert_pos_kernel, L=L, nH=nH,
                               scale=scale, eps=eps)

    def fs(shape):
        # Full-array block with a constant block index: DMA'd once, reused
        # across grid steps (no re-fetch between consecutive iterations).
        return pl.BlockSpec(shape, lambda b: (0,) * len(shape))

    logits_pad = pl.pallas_call(
        kernel,
        out_shape=jax.ShapeDtypeStruct((B * S, out_cols), jnp.float32),
        grid=(B,),
        in_specs=[
            pl.BlockSpec((S, H), lambda b: (b, 0)),            # emb rows of batch b
            pl.BlockSpec((1, 1, S), lambda b: (b, 0, 0)),      # additive mask
            fs((1, H)), fs((1, H)),                            # embedding LN
            fs((L, nH, H, dH)), fs((L, nH, 1, dH)),            # Q
            fs((L, nH, H, dH)), fs((L, nH, 1, dH)),            # K
            fs((L, nH, H, dH)), fs((L, nH, 1, dH)),            # V
            fs((L, nH, dH, H)), fs((L, 1, H)),                 # O
            fs((L, 1, H)), fs((L, 1, H)),                      # LN1
            fs((L, H, I)), fs((L, 1, I)),                      # FFN in
            fs((L, I, H)), fs((L, 1, H)),                      # FFN out
            fs((L, 1, H)), fs((L, 1, H)),                      # LN2
            fs((H, out_cols)), fs((1, out_cols)),              # POS head
        ],
        out_specs=pl.BlockSpec((S, out_cols), lambda b: (b, 0)),
        compiler_params=pltpu.CompilerParams(
            dimension_semantics=("parallel",)),                 # 2 TCs on v7x
    )(emb, add_mask, emb_g, emb_b,
      wq, bq, wk, bk, wv, bv, wo, bo, ln1g, ln1b,
      w1, b1, w2, b2, ln2g, ln2b, posw, posb)

    return logits_pad[:, :nb_tags].reshape(B, S, nb_tags)


if __name__ == "__main__":
    key = jax.random.PRNGKey(0)
    kp, kid = jax.random.split(key)

    B, S = 2, 8
    params = init_params(kp, CFG)
    input_ids = jax.random.randint(kid, (B, S), 3, CFG["vocab_size"], dtype=jnp.int32)
    attention_mask = jnp.ones((B, S), dtype=jnp.int32)

    fwd = jax.jit(camembert_pos_forward)
    logits = fwd(params, input_ids, attention_mask)
    jax.block_until_ready(logits)

    assert logits.shape == (B, S, CFG["nb_tags"]), logits.shape
    assert logits.dtype == jnp.float32
    assert bool(jnp.all(jnp.isfinite(logits)))
    print("KERNEL_OK")
</pallas_src>

<mosaic_0001>
module attributes {stable_mosaic.version = 11 : i64} {
  func.func @_camembert_pos_kernel(%arg0: i32, %arg1: memref<8x32xf32, #tpu.memory_space<vmem>>, %arg2: memref<1x1x8xf32, #tpu.memory_space<vmem>>, %arg3: memref<1x32xf32, #tpu.memory_space<vmem>>, %arg4: memref<1x32xf32, #tpu.memory_space<vmem>>, %arg5: memref<2x2x32x16xf32, #tpu.memory_space<vmem>>, %arg6: memref<2x2x1x16xf32, #tpu.memory_space<vmem>>, %arg7: memref<2x2x32x16xf32, #tpu.memory_space<vmem>>, %arg8: memref<2x2x1x16xf32, #tpu.memory_space<vmem>>, %arg9: memref<2x2x32x16xf32, #tpu.memory_space<vmem>>, %arg10: memref<2x2x1x16xf32, #tpu.memory_space<vmem>>, %arg11: memref<2x2x16x32xf32, #tpu.memory_space<vmem>>, %arg12: memref<2x1x32xf32, #tpu.memory_space<vmem>>, %arg13: memref<2x1x32xf32, #tpu.memory_space<vmem>>, %arg14: memref<2x1x32xf32, #tpu.memory_space<vmem>>, %arg15: memref<2x32x64xf32, #tpu.memory_space<vmem>>, %arg16: memref<2x1x64xf32, #tpu.memory_space<vmem>>, %arg17: memref<2x64x32xf32, #tpu.memory_space<vmem>>, %arg18: memref<2x1x32xf32, #tpu.memory_space<vmem>>, %arg19: memref<2x1x32xf32, #tpu.memory_space<vmem>>, %arg20: memref<2x1x32xf32, #tpu.memory_space<vmem>>, %arg21: memref<32x128xf32, #tpu.memory_space<vmem>>, %arg22: memref<1x128xf32, #tpu.memory_space<vmem>>, %arg23: memref<8x128xf32, #tpu.memory_space<vmem>>) attributes {dimension_semantics = [#tpu.dimension_semantics<parallel>], iteration_bounds = array<i64: 2>, scalar_prefetch = 0 : i64, scratch_operands = 0 : i64, tpu.core_type = #tpu.core_type<tc>, window_params = [{transform_indices = @transform_0, window_bounds = array<i64: 8, 32>}, {transform_indices = @transform_1, window_bounds = array<i64: 1, 1, 8>}, {pipeline_mode = #tpu.pipeline_mode<synchronous>, transform_indices = @transform_2, window_bounds = array<i64: 1, 32>}, {pipeline_mode = #tpu.pipeline_mode<synchronous>, transform_indices = @transform_3, window_bounds = array<i64: 1, 32>}, {pipeline_mode = #tpu.pipeline_mode<synchronous>, transform_indices = @transform_4, window_bounds = array<i64: 2, 2, 32, 16>}, {pipeline_mode = #tpu.pipeline_mode<synchronous>, transform_indices = @transform_5, window_bounds = array<i64: 2, 2, 1, 16>}, {pipeline_mode = #tpu.pipeline_mode<synchronous>, transform_indices = @transform_6, window_bounds = array<i64: 2, 2, 32, 16>}, {pipeline_mode = #tpu.pipeline_mode<synchronous>, transform_indices = @transform_7, window_bounds = array<i64: 2, 2, 1, 16>}, {pipeline_mode = #tpu.pipeline_mode<synchronous>, transform_indices = @transform_8, window_bounds = array<i64: 2, 2, 32, 16>}, {pipeline_mode = #tpu.pipeline_mode<synchronous>, transform_indices = @transform_9, window_bounds = array<i64: 2, 2, 1, 16>}, {pipeline_mode = #tpu.pipeline_mode<synchronous>, transform_indices = @transform_10, window_bounds = array<i64: 2, 2, 16, 32>}, {pipeline_mode = #tpu.pipeline_mode<synchronous>, transform_indices = @transform_11, window_bounds = array<i64: 2, 1, 32>}, {pipeline_mode = #tpu.pipeline_mode<synchronous>, transform_indices = @transform_12, window_bounds = array<i64: 2, 1, 32>}, {pipeline_mode = #tpu.pipeline_mode<synchronous>, transform_indices = @transform_13, window_bounds = array<i64: 2, 1, 32>}, {pipeline_mode = #tpu.pipeline_mode<synchronous>, transform_indices = @transform_14, window_bounds = array<i64: 2, 32, 64>}, {pipeline_mode = #tpu.pipeline_mode<synchronous>, transform_indices = @transform_15, window_bounds = array<i64: 2, 1, 64>}, {pipeline_mode = #tpu.pipeline_mode<synchronous>, transform_indices = @transform_16, window_bounds = array<i64: 2, 64, 32>}, {pipeline_mode = #tpu.pipeline_mode<synchronous>, transform_indices = @transform_17, window_bounds = array<i64: 2, 1, 32>}, {pipeline_mode = #tpu.pipeline_mode<synchronous>, transform_indices = @transform_18, window_bounds = array<i64: 2, 1, 32>}, {pipeline_mode = #tpu.pipeline_mode<synchronous>, transform_indices = @transform_19, window_bounds = array<i64: 2, 1, 32>}, {pipeline_mode = #tpu.pipeline_mode<synchronous>, transform_indices = @transform_20, window_bounds = array<i64: 32, 128>}, {pipeline_mode = #tpu.pipeline_mode<synchronous>, transform_indices = @transform_21, window_bounds = array<i64: 1, 128>}, {transform_indices = @transform_22, window_bounds = array<i64: 8, 128>}]} {
    %c0 = arith.constant 0 : index
    %c0_0 = arith.constant 0 : index
    %0 = vector.load %arg1[%c0, %c0_0] : memref<8x32xf32, #tpu.memory_space<vmem>>, vector<8x32xf32>
    %c0_1 = arith.constant 0 : index
    %c0_2 = arith.constant 0 : index
    %1 = vector.load %arg3[%c0_1, %c0_2] : memref<1x32xf32, #tpu.memory_space<vmem>>, vector<1x32xf32>
    %c0_3 = arith.constant 0 : index
    %c0_4 = arith.constant 0 : index
    %2 = vector.load %arg4[%c0_3, %c0_4] : memref<1x32xf32, #tpu.memory_space<vmem>>, vector<1x32xf32>
    %cst = arith.constant dense<0.000000e+00> : vector<8xf32>
    %3 = vector.multi_reduction <add>, %0, %cst [1] : vector<8x32xf32> to vector<8xf32>
    %4 = vector.shape_cast %3 : vector<8xf32> to vector<8x1xf32>
    %cst_5 = arith.constant 3.200000e+01 : f32
    %5 = vector.broadcast %cst_5 : f32 to vector<8x1xf32>
    %6 = arith.divf %4, %5 : vector<8x1xf32>
    %7 = vector.broadcast %6 : vector<8x1xf32> to vector<8x32xf32>
    %8 = arith.subf %0, %7 : vector<8x32xf32>
    %9 = arith.mulf %8, %8 : vector<8x32xf32>
    %cst_6 = arith.constant dense<0.000000e+00> : vector<8xf32>
    %10 = vector.multi_reduction <add>, %9, %cst_6 [1] : vector<8x32xf32> to vector<8xf32>
    %11 = vector.shape_cast %10 : vector<8xf32> to vector<8x1xf32>
    %cst_7 = arith.constant 3.200000e+01 : f32
    %12 = vector.broadcast %cst_7 : f32 to vector<8x1xf32>
    %13 = arith.divf %11, %12 : vector<8x1xf32>
    %14 = vector.broadcast %6 : vector<8x1xf32> to vector<8x32xf32>
    %15 = arith.subf %0, %14 : vector<8x32xf32>
    %cst_8 = arith.constant 9.99999974E-6 : f32
    %16 = vector.broadcast %cst_8 : f32 to vector<8x1xf32>
    %17 = arith.addf %13, %16 : vector<8x1xf32>
    %18 = math.rsqrt %17 : vector<8x1xf32>
    %19 = vector.broadcast %18 : vector<8x1xf32> to vector<8x32xf32>
    %20 = arith.mulf %15, %19 : vector<8x32xf32>
    %21 = vector.broadcast %1 : vector<1x32xf32> to vector<8x32xf32>
    %22 = arith.mulf %20, %21 : vector<8x32xf32>
    %23 = vector.broadcast %2 : vector<1x32xf32> to vector<8x32xf32>
    %24 = arith.addf %22, %23 : vector<8x32xf32>
    %c0_9 = arith.constant 0 : index
    %c0_10 = arith.constant 0 : index
    %c0_11 = arith.constant 0 : index
    %25 = vector.load %arg2[%c0_9, %c0_10, %c0_11] : memref<1x1x8xf32, #tpu.memory_space<vmem>>, vector<1x1x8xf32>
    %26 = vector.shape_cast %24 : vector<8x32xf32> to vector<1x8x32xf32>
    %27 = vector.broadcast %26 : vector<1x8x32xf32> to vector<2x8x32xf32>
    %c0_12 = arith.constant 0 : index
    %c0_13 = arith.constant 0 : index
    %c0_14 = arith.constant 0 : index
    %c0_15 = arith.constant 0 : index
    %28 = vector.load %arg5[%c0_12, %c0_13, %c0_14, %c0_15] : memref<2x2x32x16xf32, #tpu.memory_space<vmem>>, vector<1x2x32x16xf32>
    %29 = vector.shape_cast %28 : vector<1x2x32x16xf32> to vector<2x32x16xf32>
    %cst_16 = arith.constant dense<0.000000e+00> : vector<2x8x16xf32>
    %30 = tpu.matmul %27, %29, %cst_16 {dimension_numbers = #tpu.dot_dimension_numbers<[2], [1], [1], [2], [0, 0, 0, 1, 1, 2], [0], [0]>} : vector<2x8x32xf32>, vector<2x32x16xf32>, vector<2x8x16xf32> -> vector<2x8x16xf32>
    %c0_17 = arith.constant 0 : index
    %c0_18 = arith.constant 0 : index
    %c0_19 = arith.constant 0 : index
    %c0_20 = arith.constant 0 : index
    %31 = vector.load %arg6[%c0_17, %c0_18, %c0_19, %c0_20] : memref<2x2x1x16xf32, #tpu.memory_space<vmem>>, vector<1x2x1x16xf32>
    %32 = vector.shape_cast %31 : vector<1x2x1x16xf32> to vector<2x1x16xf32>
    %33 = vector.broadcast %32 : vector<2x1x16xf32> to vector<2x8x16xf32>
    %34 = arith.addf %30, %33 : vector<2x8x16xf32>
    %c0_21 = arith.constant 0 : index
    %c0_22 = arith.constant 0 : index
    %c0_23 = arith.constant 0 : index
    %c0_24 = arith.constant 0 : index
    %35 = vector.load %arg7[%c0_21, %c0_22, %c0_23, %c0_24] : memref<2x2x32x16xf32, #tpu.memory_space<vmem>>, vector<1x2x32x16xf32>
    %36 = vector.shape_cast %35 : vector<1x2x32x16xf32> to vector<2x32x16xf32>
    %cst_25 = arith.constant dense<0.000000e+00> : vector<2x8x16xf32>
    %37 = tpu.matmul %27, %36, %cst_25 {dimension_numbers = #tpu.dot_dimension_numbers<[2], [1], [1], [2], [0, 0, 0, 1, 1, 2], [0], [0]>} : vector<2x8x32xf32>, vector<2x32x16xf32>, vector<2x8x16xf32> -> vector<2x8x16xf32>
    %c0_26 = arith.constant 0 : index
    %c0_27 = arith.constant 0 : index
    %c0_28 = arith.constant 0 : index
    %c0_29 = arith.constant 0 : index
    %38 = vector.load %arg8[%c0_26, %c0_27, %c0_28, %c0_29] : memref<2x2x1x16xf32, #tpu.memory_space<vmem>>, vector<1x2x1x16xf32>
    %39 = vector.shape_cast %38 : vector<1x2x1x16xf32> to vector<2x1x16xf32>
    %40 = vector.broadcast %39 : vector<2x1x16xf32> to vector<2x8x16xf32>
    %41 = arith.addf %37, %40 : vector<2x8x16xf32>
    %c0_30 = arith.constant 0 : index
    %c0_31 = arith.constant 0 : index
    %c0_32 = arith.constant 0 : index
    %c0_33 = arith.constant 0 : index
    %42 = vector.load %arg9[%c0_30, %c0_31, %c0_32, %c0_33] : memref<2x2x32x16xf32, #tpu.memory_space<vmem>>, vector<1x2x32x16xf32>
    %43 = vector.shape_cast %42 : vector<1x2x32x16xf32> to vector<2x32x16xf32>
    %cst_34 = arith.constant dense<0.000000e+00> : vector<2x8x16xf32>
    %44 = tpu.matmul %27, %43, %cst_34 {dimension_numbers = #tpu.dot_dimension_numbers<[2], [1], [1], [2], [0, 0, 0, 1, 1, 2], [0], [0]>} : vector<2x8x32xf32>, vector<2x32x16xf32>, vector<2x8x16xf32> -> vector<2x8x16xf32>
    %c0_35 = arith.constant 0 : index
    %c0_36 = arith.constant 0 : index
    %c0_37 = arith.constant 0 : index
    %c0_38 = arith.constant 0 : index
    %45 = vector.load %arg10[%c0_35, %c0_36, %c0_37, %c0_38] : memref<2x2x1x16xf32, #tpu.memory_space<vmem>>, vector<1x2x1x16xf32>
    %46 = vector.shape_cast %45 : vector<1x2x1x16xf32> to vector<2x1x16xf32>
    %47 = vector.broadcast %46 : vector<2x1x16xf32> to vector<2x8x16xf32>
    %48 = arith.addf %44, %47 : vector<2x8x16xf32>
    %cst_39 = arith.constant dense<0.000000e+00> : vector<2x8x8xf32>
    %49 = tpu.matmul %34, %41, %cst_39 {dimension_numbers = #tpu.dot_dimension_numbers<[2], [2], [1], [1], [0, 0, 0, 1, 1, 1], [0], [0]>} : vector<2x8x16xf32>, vector<2x8x16xf32>, vector<2x8x8xf32> -> vector<2x8x8xf32>
    %cst_40 = arith.constant 2.500000e-01 : f32
    %50 = vector.broadcast %cst_40 : f32 to vector<2x8x8xf32>
    %51 = arith.mulf %49, %50 : vector<2x8x8xf32>
    %52 = vector.broadcast %25 : vector<1x1x8xf32> to vector<2x8x8xf32>
    %53 = arith.addf %51, %52 : vector<2x8x8xf32>
    %cst_41 = arith.constant dense<0xFF800000> : vector<2x8xf32>
    %54 = vector.multi_reduction <maximumf>, %53, %cst_41 [2] : vector<2x8x8xf32> to vector<2x8xf32>
    %55 = vector.shape_cast %54 : vector<2x8xf32> to vector<2x8x1xf32>
    %56 = vector.broadcast %55 : vector<2x8x1xf32> to vector<2x8x8xf32>
    %57 = arith.subf %53, %56 : vector<2x8x8xf32>
    %58 = math.exp %57 : vector<2x8x8xf32>
    %cst_42 = arith.constant dense<0.000000e+00> : vector<2x8xf32>
    %59 = vector.multi_reduction <add>, %58, %cst_42 [2] : vector<2x8x8xf32> to vector<2x8xf32>
    %60 = vector.shape_cast %59 : vector<2x8xf32> to vector<2x8x1xf32>
    %61 = tpu.reciprocal %60 {approx = true} : vector<2x8x1xf32> -> vector<2x8x1xf32>
    %62 = vector.broadcast %61 : vector<2x8x1xf32> to vector<2x8x8xf32>
    %63 = arith.mulf %58, %62 : vector<2x8x8xf32>
    %cst_43 = arith.constant dense<0.000000e+00> : vector<2x8x16xf32>
    %64 = tpu.matmul %63, %48, %cst_43 {dimension_numbers = #tpu.dot_dimension_numbers<[2], [1], [1], [2], [0, 0, 0, 1, 1, 2], [0], [0]>} : vector<2x8x8xf32>, vector<2x8x16xf32>, vector<2x8x16xf32> -> vector<2x8x16xf32>
    %c0_44 = arith.constant 0 : index
    %c0_45 = arith.constant 0 : index
    %c0_46 = arith.constant 0 : index
    %c0_47 = arith.constant 0 : index
    %65 = vector.load %arg11[%c0_44, %c0_45, %c0_46, %c0_47] : memref<2x2x16x32xf32, #tpu.memory_space<vmem>>, vector<1x2x16x32xf32>
    %66 = vector.shape_cast %65 : vector<1x2x16x32xf32> to vector<2x16x32xf32>
    %cst_48 = arith.constant dense<0.000000e+00> : vector<2x8x32xf32>
    %67 = tpu.matmul %64, %66, %cst_48 {dimension_numbers = #tpu.dot_dimension_numbers<[2], [1], [1], [2], [0, 0, 0, 1, 1, 2], [0], [0]>} : vector<2x8x16xf32>, vector<2x16x32xf32>, vector<2x8x32xf32> -> vector<2x8x32xf32>
    %68 = vector.extract_strided_slice %67 {offsets = [0, 0, 0], sizes = [1, 8, 32], strides = [1, 1, 1]} : vector<2x8x32xf32> to vector<1x8x32xf32>
    %69 = vector.shape_cast %68 : vector<1x8x32xf32> to vector<8x32xf32>
    %70 = vector.extract_strided_slice %67 {offsets = [1, 0, 0], sizes = [1, 8, 32], strides = [1, 1, 1]} : vector<2x8x32xf32> to vector<1x8x32xf32>
    %71 = vector.shape_cast %70 : vector<1x8x32xf32> to vector<8x32xf32>
    %72 = arith.addf %69, %71 : vector<8x32xf32>
    %c0_49 = arith.constant 0 : index
    %c0_50 = arith.constant 0 : index
    %c0_51 = arith.constant 0 : index
    %73 = vector.load %arg12[%c0_49, %c0_50, %c0_51] : memref<2x1x32xf32, #tpu.memory_space<vmem>>, vector<1x1x32xf32>
    %74 = vector.shape_cast %73 : vector<1x1x32xf32> to vector<1x32xf32>
    %75 = vector.broadcast %74 : vector<1x32xf32> to vector<8x32xf32>
    %76 = arith.addf %72, %75 : vector<8x32xf32>
    %77 = arith.addf %76, %24 : vector<8x32xf32>
    %c0_52 = arith.constant 0 : index
    %c0_53 = arith.constant 0 : index
    %c0_54 = arith.constant 0 : index
    %78 = vector.load %arg13[%c0_52, %c0_53, %c0_54] : memref<2x1x32xf32, #tpu.memory_space<vmem>>, vector<1x1x32xf32>
    %79 = vector.shape_cast %78 : vector<1x1x32xf32> to vector<1x32xf32>
    %c0_55 = arith.constant 0 : index
    %c0_56 = arith.constant 0 : index
    %c0_57 = arith.constant 0 : index
    %80 = vector.load %arg14[%c0_55, %c0_56, %c0_57] : memref<2x1x32xf32, #tpu.memory_space<vmem>>, vector<1x1x32xf32>
    %81 = vector.shape_cast %80 : vector<1x1x32xf32> to vector<1x32xf32>
    %cst_58 = arith.constant dense<0.000000e+00> : vector<8xf32>
    %82 = vector.multi_reduction <add>, %77, %cst_58 [1] : vector<8x32xf32> to vector<8xf32>
    %83 = vector.shape_cast %82 : vector<8xf32> to vector<8x1xf32>
    %cst_59 = arith.constant 3.200000e+01 : f32
    %84 = vector.broadcast %cst_59 : f32 to vector<8x1xf32>
    %85 = arith.divf %83, %84 : vector<8x1xf32>
    %86 = vector.broadcast %85 : vector<8x1xf32> to vector<8x32xf32>
    %87 = arith.subf %77, %86 : vector<8x32xf32>
    %88 = arith.mulf %87, %87 : vector<8x32xf32>
    %cst_60 = arith.constant dense<0.000000e+00> : vector<8xf32>
    %89 = vector.multi_reduction <add>, %88, %cst_60 [1] : vector<8x32xf32> to vector<8xf32>
    %90 = vector.shape_cast %89 : vector<8xf32> to vector<8x1xf32>
    %cst_61 = arith.constant 3.200000e+01 : f32
    %91 = vector.broadcast %cst_61 : f32 to vector<8x1xf32>
    %92 = arith.divf %90, %91 : vector<8x1xf32>
    %93 = vector.broadcast %85 : vector<8x1xf32> to vector<8x32xf32>
    %94 = arith.subf %77, %93 : vector<8x32xf32>
    %cst_62 = arith.constant 9.99999974E-6 : f32
    %95 = vector.broadcast %cst_62 : f32 to vector<8x1xf32>
    %96 = arith.addf %92, %95 : vector<8x1xf32>
    %97 = math.rsqrt %96 : vector<8x1xf32>
    %98 = vector.broadcast %97 : vector<8x1xf32> to vector<8x32xf32>
    %99 = arith.mulf %94, %98 : vector<8x32xf32>
    %100 = vector.broadcast %79 : vector<1x32xf32> to vector<8x32xf32>
    %101 = arith.mulf %99, %100 : vector<8x32xf32>
    %102 = vector.broadcast %81 : vector<1x32xf32> to vector<8x32xf32>
    %103 = arith.addf %101, %102 : vector<8x32xf32>
    %c0_63 = arith.constant 0 : index
    %c0_64 = arith.constant 0 : index
    %c0_65 = arith.constant 0 : index
    %104 = vector.load %arg15[%c0_63, %c0_64, %c0_65] : memref<2x32x64xf32, #tpu.memory_space<vmem>>, vector<1x32x64xf32>
    %105 = vector.shape_cast %104 : vector<1x32x64xf32> to vector<32x64xf32>
    %cst_66 = arith.constant dense<0.000000e+00> : vector<8x64xf32>
    %106 = tpu.matmul %103, %105, %cst_66 {dimension_numbers = #tpu.dot_dimension_numbers<[1], [0], [0], [1], [0, 0, 1, 1], [], []>} : vector<8x32xf32>, vector<32x64xf32>, vector<8x64xf32> -> vector<8x64xf32>
    %c0_67 = arith.constant 0 : index
    %c0_68 = arith.constant 0 : index
    %c0_69 = arith.constant 0 : index
    %107 = vector.load %arg16[%c0_67, %c0_68, %c0_69] : memref<2x1x64xf32, #tpu.memory_space<vmem>>, vector<1x1x64xf32>
    %108 = vector.shape_cast %107 : vector<1x1x64xf32> to vector<1x64xf32>
    %109 = vector.broadcast %108 : vector<1x64xf32> to vector<8x64xf32>
    %110 = arith.addf %106, %109 : vector<8x64xf32>
    %cst_70 = arith.constant 5.000000e-01 : f32
    %111 = vector.broadcast %cst_70 : f32 to vector<8x64xf32>
    %112 = arith.mulf %111, %110 : vector<8x64xf32>
    %cst_71 = arith.constant 4.471500e-02 : f32
    %113 = vector.broadcast %cst_71 : f32 to vector<8x64xf32>
    %114 = arith.mulf %113, %110 : vector<8x64xf32>
    %115 = arith.mulf %114, %110 : vector<8x64xf32>
    %116 = arith.mulf %115, %110 : vector<8x64xf32>
    %117 = arith.addf %110, %116 : vector<8x64xf32>
    %cst_72 = arith.constant 0.797884583 : f32
    %118 = vector.broadcast %cst_72 : f32 to vector<8x64xf32>
    %119 = arith.mulf %118, %117 : vector<8x64xf32>
    %120 = math.tanh %119 : vector<8x64xf32>
    %cst_73 = arith.constant 1.000000e+00 : f32
    %121 = vector.broadcast %cst_73 : f32 to vector<8x64xf32>
    %122 = arith.addf %121, %120 : vector<8x64xf32>
    %123 = arith.mulf %112, %122 : vector<8x64xf32>
    %c0_74 = arith.constant 0 : index
    %c0_75 = arith.constant 0 : index
    %c0_76 = arith.constant 0 : index
    %124 = vector.load %arg17[%c0_74, %c0_75, %c0_76] : memref<2x64x32xf32, #tpu.memory_space<vmem>>, vector<1x64x32xf32>
    %125 = vector.shape_cast %124 : vector<1x64x32xf32> to vector<64x32xf32>
    %cst_77 = arith.constant dense<0.000000e+00> : vector<8x32xf32>
    %126 = tpu.matmul %123, %125, %cst_77 {dimension_numbers = #tpu.dot_dimension_numbers<[1], [0], [0], [1], [0, 0, 1, 1], [], []>} : vector<8x64xf32>, vector<64x32xf32>, vector<8x32xf32> -> vector<8x32xf32>
    %c0_78 = arith.constant 0 : index
    %c0_79 = arith.constant 0 : index
    %c0_80 = arith.constant 0 : index
    %127 = vector.load %arg18[%c0_78, %c0_79, %c0_80] : memref<2x1x32xf32, #tpu.memory_space<vmem>>, vector<1x1x32xf32>
    %128 = vector.shape_cast %127 : vector<1x1x32xf32> to vector<1x32xf32>
    %129 = vector.broadcast %128 : vector<1x32xf32> to vector<8x32xf32>
    %130 = arith.addf %126, %129 : vector<8x32xf32>
    %131 = arith.addf %130, %103 : vector<8x32xf32>
    %c0_81 = arith.constant 0 : index
    %c0_82 = arith.constant 0 : index
    %c0_83 = arith.constant 0 : index
    %132 = vector.load %arg19[%c0_81, %c0_82, %c0_83] : memref<2x1x32xf32, #tpu.memory_space<vmem>>, vector<1x1x32xf32>
    %133 = vector.shape_cast %132 : vector<1x1x32xf32> to vector<1x32xf32>
    %c0_84 = arith.constant 0 : index
    %c0_85 = arith.constant 0 : index
    %c0_86 = arith.constant 0 : index
    %134 = vector.load %arg20[%c0_84, %c0_85, %c0_86] : memref<2x1x32xf32, #tpu.memory_space<vmem>>, vector<1x1x32xf32>
    %135 = vector.shape_cast %134 : vector<1x1x32xf32> to vector<1x32xf32>
    %cst_87 = arith.constant dense<0.000000e+00> : vector<8xf32>
    %136 = vector.multi_reduction <add>, %131, %cst_87 [1] : vector<8x32xf32> to vector<8xf32>
    %137 = vector.shape_cast %136 : vector<8xf32> to vector<8x1xf32>
    %cst_88 = arith.constant 3.200000e+01 : f32
    %138 = vector.broadcast %cst_88 : f32 to vector<8x1xf32>
    %139 = arith.divf %137, %138 : vector<8x1xf32>
    %140 = vector.broadcast %139 : vector<8x1xf32> to vector<8x32xf32>
    %141 = arith.subf %131, %140 : vector<8x32xf32>
    %142 = arith.mulf %141, %141 : vector<8x32xf32>
    %cst_89 = arith.constant dense<0.000000e+00> : vector<8xf32>
    %143 = vector.multi_reduction <add>, %142, %cst_89 [1] : vector<8x32xf32> to vector<8xf32>
    %144 = vector.shape_cast %143 : vector<8xf32> to vector<8x1xf32>
    %cst_90 = arith.constant 3.200000e+01 : f32
    %145 = vector.broadcast %cst_90 : f32 to vector<8x1xf32>
    %146 = arith.divf %144, %145 : vector<8x1xf32>
    %147 = vector.broadcast %139 : vector<8x1xf32> to vector<8x32xf32>
    %148 = arith.subf %131, %147 : vector<8x32xf32>
    %cst_91 = arith.constant 9.99999974E-6 : f32
    %149 = vector.broadcast %cst_91 : f32 to vector<8x1xf32>
    %150 = arith.addf %146, %149 : vector<8x1xf32>
    %151 = math.rsqrt %150 : vector<8x1xf32>
    %152 = vector.broadcast %151 : vector<8x1xf32> to vector<8x32xf32>
    %153 = arith.mulf %148, %152 : vector<8x32xf32>
    %154 = vector.broadcast %133 : vector<1x32xf32> to vector<8x32xf32>
    %155 = arith.mulf %153, %154 : vector<8x32xf32>
    %156 = vector.broadcast %135 : vector<1x32xf32> to vector<8x32xf32>
    %157 = arith.addf %155, %156 : vector<8x32xf32>
    %158 = vector.shape_cast %157 : vector<8x32xf32> to vector<1x8x32xf32>
    %159 = vector.broadcast %158 : vector<1x8x32xf32> to vector<2x8x32xf32>
    %c1 = arith.constant 1 : index
    %c0_92 = arith.constant 0 : index
    %c0_93 = arith.constant 0 : index
    %c0_94 = arith.constant 0 : index
    %160 = vector.load %arg5[%c1, %c0_92, %c0_93, %c0_94] : memref<2x2x32x16xf32, #tpu.memory_space<vmem>>, vector<1x2x32x16xf32>
    %161 = vector.shape_cast %160 : vector<1x2x32x16xf32> to vector<2x32x16xf32>
    %cst_95 = arith.constant dense<0.000000e+00> : vector<2x8x16xf32>
    %162 = tpu.matmul %159, %161, %cst_95 {dimension_numbers = #tpu.dot_dimension_numbers<[2], [1], [1], [2], [0, 0, 0, 1, 1, 2], [0], [0]>} : vector<2x8x32xf32>, vector<2x32x16xf32>, vector<2x8x16xf32> -> vector<2x8x16xf32>
    %c1_96 = arith.constant 1 : index
    %c0_97 = arith.constant 0 : index
    %c0_98 = arith.constant 0 : index
    %c0_99 = arith.constant 0 : index
    %163 = vector.load %arg6[%c1_96, %c0_97, %c0_98, %c0_99] : memref<2x2x1x16xf32, #tpu.memory_space<vmem>>, vector<1x2x1x16xf32>
    %164 = vector.shape_cast %163 : vector<1x2x1x16xf32> to vector<2x1x16xf32>
    %165 = vector.broadcast %164 : vector<2x1x16xf32> to vector<2x8x16xf32>
    %166 = arith.addf %162, %165 : vector<2x8x16xf32>
    %c1_100 = arith.constant 1 : index
    %c0_101 = arith.constant 0 : index
    %c0_102 = arith.constant 0 : index
    %c0_103 = arith.constant 0 : index
    %167 = vector.load %arg7[%c1_100, %c0_101, %c0_102, %c0_103] : memref<2x2x32x16xf32, #tpu.memory_space<vmem>>, vector<1x2x32x16xf32>
    %168 = vector.shape_cast %167 : vector<1x2x32x16xf32> to vector<2x32x16xf32>
    %cst_104 = arith.constant dense<0.000000e+00> : vector<2x8x16xf32>
    %169 = tpu.matmul %159, %168, %cst_104 {dimension_numbers = #tpu.dot_dimension_numbers<[2], [1], [1], [2], [0, 0, 0, 1, 1, 2], [0], [0]>} : vector<2x8x32xf32>, vector<2x32x16xf32>, vector<2x8x16xf32> -> vector<2x8x16xf32>
    %c1_105 = arith.constant 1 : index
    %c0_106 = arith.constant 0 : index
    %c0_107 = arith.constant 0 : index
    %c0_108 = arith.constant 0 : index
    %170 = vector.load %arg8[%c1_105, %c0_106, %c0_107, %c0_108] : memref<2x2x1x16xf32, #tpu.memory_space<vmem>>, vector<1x2x1x16xf32>
    %171 = vector.shape_cast %170 : vector<1x2x1x16xf32> to vector<2x1x16xf32>
    %172 = vector.broadcast %171 : vector<2x1x16xf32> to vector<2x8x16xf32>
    %173 = arith.addf %169, %172 : vector<2x8x16xf32>
    %c1_109 = arith.constant 1 : index
    %c0_110 = arith.constant 0 : index
    %c0_111 = arith.constant 0 : index
    %c0_112 = arith.constant 0 : index
    %174 = vector.load %arg9[%c1_109, %c0_110, %c0_111, %c0_112] : memref<2x2x32x16xf32, #tpu.memory_space<vmem>>, vector<1x2x32x16xf32>
    %175 = vector.shape_cast %174 : vector<1x2x32x16xf32> to vector<2x32x16xf32>
    %cst_113 = arith.constant dense<0.000000e+00> : vector<2x8x16xf32>
    %176 = tpu.matmul %159, %175, %cst_113 {dimension_numbers = #tpu.dot_dimension_numbers<[2], [1], [1], [2], [0, 0, 0, 1, 1, 2], [0], [0]>} : vector<2x8x32xf32>, vector<2x32x16xf32>, vector<2x8x16xf32> -> vector<2x8x16xf32>
    %c1_114 = arith.constant 1 : index
    %c0_115 = arith.constant 0 : index
    %c0_116 = arith.constant 0 : index
    %c0_117 = arith.constant 0 : index
    %177 = vector.load %arg10[%c1_114, %c0_115, %c0_116, %c0_117] : memref<2x2x1x16xf32, #tpu.memory_space<vmem>>, vector<1x2x1x16xf32>
    %178 = vector.shape_cast %177 : vector<1x2x1x16xf32> to vector<2x1x16xf32>
    %179 = vector.broadcast %178 : vector<2x1x16xf32> to vector<2x8x16xf32>
    %180 = arith.addf %176, %179 : vector<2x8x16xf32>
    %cst_118 = arith.constant dense<0.000000e+00> : vector<2x8x8xf32>
    %181 = tpu.matmul %166, %173, %cst_118 {dimension_numbers = #tpu.dot_dimension_numbers<[2], [2], [1], [1], [0, 0, 0, 1, 1, 1], [0], [0]>} : vector<2x8x16xf32>, vector<2x8x16xf32>, vector<2x8x8xf32> -> vector<2x8x8xf32>
    %cst_119 = arith.constant 2.500000e-01 : f32
    %182 = vector.broadcast %cst_119 : f32 to vector<2x8x8xf32>
    %183 = arith.mulf %181, %182 : vector<2x8x8xf32>
    %184 = vector.broadcast %25 : vector<1x1x8xf32> to vector<2x8x8xf32>
    %185 = arith.addf %183, %184 : vector<2x8x8xf32>
    %cst_120 = arith.constant dense<0xFF800000> : vector<2x8xf32>
    %186 = vector.multi_reduction <maximumf>, %185, %cst_120 [2] : vector<2x8x8xf32> to vector<2x8xf32>
    %187 = vector.shape_cast %186 : vector<2x8xf32> to vector<2x8x1xf32>
    %188 = vector.broadcast %187 : vector<2x8x1xf32> to vector<2x8x8xf32>
    %189 = arith.subf %185, %188 : vector<2x8x8xf32>
    %190 = math.exp %189 : vector<2x8x8xf32>
    %cst_121 = arith.constant dense<0.000000e+00> : vector<2x8xf32>
    %191 = vector.multi_reduction <add>, %190, %cst_121 [2] : vector<2x8x8xf32> to vector<2x8xf32>
    %192 = vector.shape_cast %191 : vector<2x8xf32> to vector<2x8x1xf32>
    %193 = tpu.reciprocal %192 {approx = true} : vector<2x8x1xf32> -> vector<2x8x1xf32>
    %194 = vector.broadcast %193 : vector<2x8x1xf32> to vector<2x8x8xf32>
    %195 = arith.mulf %190, %194 : vector<2x8x8xf32>
    %cst_122 = arith.constant dense<0.000000e+00> : vector<2x8x16xf32>
    %196 = tpu.matmul %195, %180, %cst_122 {dimension_numbers = #tpu.dot_dimension_numbers<[2], [1], [1], [2], [0, 0, 0, 1, 1, 2], [0], [0]>} : vector<2x8x8xf32>, vector<2x8x16xf32>, vector<2x8x16xf32> -> vector<2x8x16xf32>
    %c1_123 = arith.constant 1 : index
    %c0_124 = arith.constant 0 : index
    %c0_125 = arith.constant 0 : index
    %c0_126 = arith.constant 0 : index
    %197 = vector.load %arg11[%c1_123, %c0_124, %c0_125, %c0_126] : memref<2x2x16x32xf32, #tpu.memory_space<vmem>>, vector<1x2x16x32xf32>
    %198 = vector.shape_cast %197 : vector<1x2x16x32xf32> to vector<2x16x32xf32>
    %cst_127 = arith.constant dense<0.000000e+00> : vector<2x8x32xf32>
    %199 = tpu.matmul %196, %198, %cst_127 {dimension_numbers = #tpu.dot_dimension_numbers<[2], [1], [1], [2], [0, 0, 0, 1, 1, 2], [0], [0]>} : vector<2x8x16xf32>, vector<2x16x32xf32>, vector<2x8x32xf32> -> vector<2x8x32xf32>
    %200 = vector.extract_strided_slice %199 {offsets = [0, 0, 0], sizes = [1, 8, 32], strides = [1, 1, 1]} : vector<2x8x32xf32> to vector<1x8x32xf32>
    %201 = vector.shape_cast %200 : vector<1x8x32xf32> to vector<8x32xf32>
    %202 = vector.extract_strided_slice %199 {offsets = [1, 0, 0], sizes = [1, 8, 32], strides = [1, 1, 1]} : vector<2x8x32xf32> to vector<1x8x32xf32>
    %203 = vector.shape_cast %202 : vector<1x8x32xf32> to vector<8x32xf32>
    %204 = arith.addf %201, %203 : vector<8x32xf32>
    %c1_128 = arith.constant 1 : index
    %c0_129 = arith.constant 0 : index
    %c0_130 = arith.constant 0 : index
    %205 = vector.load %arg12[%c1_128, %c0_129, %c0_130] : memref<2x1x32xf32, #tpu.memory_space<vmem>>, vector<1x1x32xf32>
    %206 = vector.shape_cast %205 : vector<1x1x32xf32> to vector<1x32xf32>
    %207 = vector.broadcast %206 : vector<1x32xf32> to vector<8x32xf32>
    %208 = arith.addf %204, %207 : vector<8x32xf32>
    %209 = arith.addf %208, %157 : vector<8x32xf32>
    %c1_131 = arith.constant 1 : index
    %c0_132 = arith.constant 0 : index
    %c0_133 = arith.constant 0 : index
    %210 = vector.load %arg13[%c1_131, %c0_132, %c0_133] : memref<2x1x32xf32, #tpu.memory_space<vmem>>, vector<1x1x32xf32>
    %211 = vector.shape_cast %210 : vector<1x1x32xf32> to vector<1x32xf32>
    %c1_134 = arith.constant 1 : index
    %c0_135 = arith.constant 0 : index
    %c0_136 = arith.constant 0 : index
    %212 = vector.load %arg14[%c1_134, %c0_135, %c0_136] : memref<2x1x32xf32, #tpu.memory_space<vmem>>, vector<1x1x32xf32>
    %213 = vector.shape_cast %212 : vector<1x1x32xf32> to vector<1x32xf32>
    %cst_137 = arith.constant dense<0.000000e+00> : vector<8xf32>
    %214 = vector.multi_reduction <add>, %209, %cst_137 [1] : vector<8x32xf32> to vector<8xf32>
    %215 = vector.shape_cast %214 : vector<8xf32> to vector<8x1xf32>
    %cst_138 = arith.constant 3.200000e+01 : f32
    %216 = vector.broadcast %cst_138 : f32 to vector<8x1xf32>
    %217 = arith.divf %215, %216 : vector<8x1xf32>
    %218 = vector.broadcast %217 : vector<8x1xf32> to vector<8x32xf32>
    %219 = arith.subf %209, %218 : vector<8x32xf32>
    %220 = arith.mulf %219, %219 : vector<8x32xf32>
    %cst_139 = arith.constant dense<0.000000e+00> : vector<8xf32>
    %221 = vector.multi_reduction <add>, %220, %cst_139 [1] : vector<8x32xf32> to vector<8xf32>
    %222 = vector.shape_cast %221 : vector<8xf32> to vector<8x1xf32>
    %cst_140 = arith.constant 3.200000e+01 : f32
    %223 = vector.broadcast %cst_140 : f32 to vector<8x1xf32>
    %224 = arith.divf %222, %223 : vector<8x1xf32>
    %225 = vector.broadcast %217 : vector<8x1xf32> to vector<8x32xf32>
    %226 = arith.subf %209, %225 : vector<8x32xf32>
    %cst_141 = arith.constant 9.99999974E-6 : f32
    %227 = vector.broadcast %cst_141 : f32 to vector<8x1xf32>
    %228 = arith.addf %224, %227 : vector<8x1xf32>
    %229 = math.rsqrt %228 : vector<8x1xf32>
    %230 = vector.broadcast %229 : vector<8x1xf32> to vector<8x32xf32>
    %231 = arith.mulf %226, %230 : vector<8x32xf32>
    %232 = vector.broadcast %211 : vector<1x32xf32> to vector<8x32xf32>
    %233 = arith.mulf %231, %232 : vector<8x32xf32>
    %234 = vector.broadcast %213 : vector<1x32xf32> to vector<8x32xf32>
    %235 = arith.addf %233, %234 : vector<8x32xf32>
    %c1_142 = arith.constant 1 : index
    %c0_143 = arith.constant 0 : index
    %c0_144 = arith.constant 0 : index
    %236 = vector.load %arg15[%c1_142, %c0_143, %c0_144] : memref<2x32x64xf32, #tpu.memory_space<vmem>>, vector<1x32x64xf32>
    %237 = vector.shape_cast %236 : vector<1x32x64xf32> to vector<32x64xf32>
    %cst_145 = arith.constant dense<0.000000e+00> : vector<8x64xf32>
    %238 = tpu.matmul %235, %237, %cst_145 {dimension_numbers = #tpu.dot_dimension_numbers<[1], [0], [0], [1], [0, 0, 1, 1], [], []>} : vector<8x32xf32>, vector<32x64xf32>, vector<8x64xf32> -> vector<8x64xf32>
    %c1_146 = arith.constant 1 : index
    %c0_147 = arith.constant 0 : index
    %c0_148 = arith.constant 0 : index
    %239 = vector.load %arg16[%c1_146, %c0_147, %c0_148] : memref<2x1x64xf32, #tpu.memory_space<vmem>>, vector<1x1x64xf32>
    %240 = vector.shape_cast %239 : vector<1x1x64xf32> to vector<1x64xf32>
    %241 = vector.broadcast %240 : vector<1x64xf32> to vector<8x64xf32>
    %242 = arith.addf %238, %241 : vector<8x64xf32>
    %cst_149 = arith.constant 5.000000e-01 : f32
    %243 = vector.broadcast %cst_149 : f32 to vector<8x64xf32>
    %244 = arith.mulf %243, %242 : vector<8x64xf32>
    %cst_150 = arith.constant 4.471500e-02 : f32
    %245 = vector.broadcast %cst_150 : f32 to vector<8x64xf32>
    %246 = arith.mulf %245, %242 : vector<8x64xf32>
    %247 = arith.mulf %246, %242 : vector<8x64xf32>
    %248 = arith.mulf %247, %242 : vector<8x64xf32>
    %249 = arith.addf %242, %248 : vector<8x64xf32>
    %cst_151 = arith.constant 0.797884583 : f32
    %250 = vector.broadcast %cst_151 : f32 to vector<8x64xf32>
    %251 = arith.mulf %250, %249 : vector<8x64xf32>
    %252 = math.tanh %251 : vector<8x64xf32>
    %cst_152 = arith.constant 1.000000e+00 : f32
    %253 = vector.broadcast %cst_152 : f32 to vector<8x64xf32>
    %254 = arith.addf %253, %252 : vector<8x64xf32>
    %255 = arith.mulf %244, %254 : vector<8x64xf32>
    %c1_153 = arith.constant 1 : index
    %c0_154 = arith.constant 0 : index
    %c0_155 = arith.constant 0 : index
    %256 = vector.load %arg17[%c1_153, %c0_154, %c0_155] : memref<2x64x32xf32, #tpu.memory_space<vmem>>, vector<1x64x32xf32>
    %257 = vector.shape_cast %256 : vector<1x64x32xf32> to vector<64x32xf32>
    %cst_156 = arith.constant dense<0.000000e+00> : vector<8x32xf32>
    %258 = tpu.matmul %255, %257, %cst_156 {dimension_numbers = #tpu.dot_dimension_numbers<[1], [0], [0], [1], [0, 0, 1, 1], [], []>} : vector<8x64xf32>, vector<64x32xf32>, vector<8x32xf32> -> vector<8x32xf32>
    %c1_157 = arith.constant 1 : index
    %c0_158 = arith.constant 0 : index
    %c0_159 = arith.constant 0 : index
    %259 = vector.load %arg18[%c1_157, %c0_158, %c0_159] : memref<2x1x32xf32, #tpu.memory_space<vmem>>, vector<1x1x32xf32>
    %260 = vector.shape_cast %259 : vector<1x1x32xf32> to vector<1x32xf32>
    %261 = vector.broadcast %260 : vector<1x32xf32> to vector<8x32xf32>
    %262 = arith.addf %258, %261 : vector<8x32xf32>
    %263 = arith.addf %262, %235 : vector<8x32xf32>
    %c1_160 = arith.constant 1 : index
    %c0_161 = arith.constant 0 : index
    %c0_162 = arith.constant 0 : index
    %264 = vector.load %arg19[%c1_160, %c0_161, %c0_162] : memref<2x1x32xf32, #tpu.memory_space<vmem>>, vector<1x1x32xf32>
    %265 = vector.shape_cast %264 : vector<1x1x32xf32> to vector<1x32xf32>
    %c1_163 = arith.constant 1 : index
    %c0_164 = arith.constant 0 : index
    %c0_165 = arith.constant 0 : index
    %266 = vector.load %arg20[%c1_163, %c0_164, %c0_165] : memref<2x1x32xf32, #tpu.memory_space<vmem>>, vector<1x1x32xf32>
    %267 = vector.shape_cast %266 : vector<1x1x32xf32> to vector<1x32xf32>
    %cst_166 = arith.constant dense<0.000000e+00> : vector<8xf32>
    %268 = vector.multi_reduction <add>, %263, %cst_166 [1] : vector<8x32xf32> to vector<8xf32>
    %269 = vector.shape_cast %268 : vector<8xf32> to vector<8x1xf32>
    %cst_167 = arith.constant 3.200000e+01 : f32
    %270 = vector.broadcast %cst_167 : f32 to vector<8x1xf32>
    %271 = arith.divf %269, %270 : vector<8x1xf32>
    %272 = vector.broadcast %271 : vector<8x1xf32> to vector<8x32xf32>
    %273 = arith.subf %263, %272 : vector<8x32xf32>
    %274 = arith.mulf %273, %273 : vector<8x32xf32>
    %cst_168 = arith.constant dense<0.000000e+00> : vector<8xf32>
    %275 = vector.multi_reduction <add>, %274, %cst_168 [1] : vector<8x32xf32> to vector<8xf32>
    %276 = vector.shape_cast %275 : vector<8xf32> to vector<8x1xf32>
    %cst_169 = arith.constant 3.200000e+01 : f32
    %277 = vector.broadcast %cst_169 : f32 to vector<8x1xf32>
    %278 = arith.divf %276, %277 : vector<8x1xf32>
    %279 = vector.broadcast %271 : vector<8x1xf32> to vector<8x32xf32>
    %280 = arith.subf %263, %279 : vector<8x32xf32>
    %cst_170 = arith.constant 9.99999974E-6 : f32
    %281 = vector.broadcast %cst_170 : f32 to vector<8x1xf32>
    %282 = arith.addf %278, %281 : vector<8x1xf32>
    %283 = math.rsqrt %282 : vector<8x1xf32>
    %284 = vector.broadcast %283 : vector<8x1xf32> to vector<8x32xf32>
    %285 = arith.mulf %280, %284 : vector<8x32xf32>
    %286 = vector.broadcast %265 : vector<1x32xf32> to vector<8x32xf32>
    %287 = arith.mulf %285, %286 : vector<8x32xf32>
    %288 = vector.broadcast %267 : vector<1x32xf32> to vector<8x32xf32>
    %289 = arith.addf %287, %288 : vector<8x32xf32>
    %c0_171 = arith.constant 0 : index
    %c0_172 = arith.constant 0 : index
    %290 = vector.load %arg21[%c0_171, %c0_172] : memref<32x128xf32, #tpu.memory_space<vmem>>, vector<32x128xf32>
    %cst_173 = arith.constant dense<0.000000e+00> : vector<8x128xf32>
    %291 = tpu.matmul %289, %290, %cst_173 {dimension_numbers = #tpu.dot_dimension_numbers<[1], [0], [0], [1], [0, 0, 1, 1], [], []>} : vector<8x32xf32>, vector<32x128xf32>, vector<8x128xf32> -> vector<8x128xf32>
    %c0_174 = arith.constant 0 : index
    %c0_175 = arith.constant 0 : index
    %292 = vector.load %arg22[%c0_174, %c0_175] : memref<1x128xf32, #tpu.memory_space<vmem>>, vector<1x128xf32>
    %293 = vector.broadcast %292 : vector<1x128xf32> to vector<8x128xf32>
    %294 = arith.addf %291, %293 : vector<8x128xf32>
    %c0_176 = arith.constant 0 : index
    %c0_177 = arith.constant 0 : index
    %295 = vector.load %arg23[%c0_176, %c0_177] : memref<8x128xf32, #tpu.memory_space<vmem>>, vector<8x128xf32>
    tpu.vector_store %arg23[%c0_176, %c0_177], %294 {strides = array<i32>} : memref<8x128xf32, #tpu.memory_space<vmem>>, vector<8x128xf32>,
    return
  }
  func.func @transform_0(%arg0: i32) -> (i32, i32) {
    %c0_i32 = arith.constant 0 : i32
    %c0_i32_0 = arith.constant 0 : i32
    return %arg0, %c0_i32 : i32, i32
  }
  func.func @transform_1(%arg0: i32) -> (i32, i32, i32) {
    %c0_i32 = arith.constant 0 : i32
    %c0_i32_0 = arith.constant 0 : i32
    %c0_i32_1 = arith.constant 0 : i32
    return %arg0, %c0_i32, %c0_i32_0 : i32, i32, i32
  }
  func.func @transform_2(%arg0: i32) -> (i32, i32) {
    %c0_i32 = arith.constant 0 : i32
    %c0_i32_0 = arith.constant 0 : i32
    %c0_i32_1 = arith.constant 0 : i32
    return %c0_i32, %c0_i32_0 : i32, i32
  }
  func.func @transform_3(%arg0: i32) -> (i32, i32) {
    %c0_i32 = arith.constant 0 : i32
    %c0_i32_0 = arith.constant 0 : i32
    %c0_i32_1 = arith.constant 0 : i32
    return %c0_i32, %c0_i32_0 : i32, i32
  }
  func.func @transform_4(%arg0: i32) -> (i32, i32, i32, i32) {
    %c0_i32 = arith.constant 0 : i32
    %c0_i32_0 = arith.constant 0 : i32
    %c0_i32_1 = arith.constant 0 : i32
    %c0_i32_2 = arith.constant 0 : i32
    %c0_i32_3 = arith.constant 0 : i32
    return %c0_i32, %c0_i32_0, %c0_i32_1, %c0_i32_2 : i32, i32, i32, i32
  }
  func.func @transform_5(%arg0: i32) -> (i32, i32, i32, i32) {
    %c0_i32 = arith.constant 0 : i32
    %c0_i32_0 = arith.constant 0 : i32
    %c0_i32_1 = arith.constant 0 : i32
    %c0_i32_2 = arith.constant 0 : i32
    %c0_i32_3 = arith.constant 0 : i32
    return %c0_i32, %c0_i32_0, %c0_i32_1, %c0_i32_2 : i32, i32, i32, i32
  }
  func.func @transform_6(%arg0: i32) -> (i32, i32, i32, i32) {
    %c0_i32 = arith.constant 0 : i32
    %c0_i32_0 = arith.constant 0 : i32
    %c0_i32_1 = arith.constant 0 : i32
    %c0_i32_2 = arith.constant 0 : i32
    %c0_i32_3 = arith.constant 0 : i32
    return %c0_i32, %c0_i32_0, %c0_i32_1, %c0_i32_2 : i32, i32, i32, i32
  }
  func.func @transform_7(%arg0: i32) -> (i32, i32, i32, i32) {
    %c0_i32 = arith.constant 0 : i32
    %c0_i32_0 = arith.constant 0 : i32
    %c0_i32_1 = arith.constant 0 : i32
    %c0_i32_2 = arith.constant 0 : i32
    %c0_i32_3 = arith.constant 0 : i32
    return %c0_i32, %c0_i32_0, %c0_i32_1, %c0_i32_2 : i32, i32, i32, i32
  }
  func.func @transform_8(%arg0: i32) -> (i32, i32, i32, i32) {
    %c0_i32 = arith.constant 0 : i32
    %c0_i32_0 = arith.constant 0 : i32
    %c0_i32_1 = arith.constant 0 : i32
    %c0_i32_2 = arith.constant 0 : i32
    %c0_i32_3 = arith.constant 0 : i32
    return %c0_i32, %c0_i32_0, %c0_i32_1, %c0_i32_2 : i32, i32, i32, i32
  }
  func.func @transform_9(%arg0: i32) -> (i32, i32, i32, i32) {
    %c0_i32 = arith.constant 0 : i32
    %c0_i32_0 = arith.constant 0 : i32
    %c0_i32_1 = arith.constant 0 : i32
    %c0_i32_2 = arith.constant 0 : i32
    %c0_i32_3 = arith.constant 0 : i32
    return %c0_i32, %c0_i32_0, %c0_i32_1, %c0_i32_2 : i32, i32, i32, i32
  }
  func.func @transform_10(%arg0: i32) -> (i32, i32, i32, i32) {
    %c0_i32 = arith.constant 0 : i32
    %c0_i32_0 = arith.constant 0 : i32
    %c0_i32_1 = arith.constant 0 : i32
    %c0_i32_2 = arith.constant 0 : i32
    %c0_i32_3 = arith.constant 0 : i32
    return %c0_i32, %c0_i32_0, %c0_i32_1, %c0_i32_2 : i32, i32, i32, i32
  }
  func.func @transform_11(%arg0: i32) -> (i32, i32, i32) {
    %c0_i32 = arith.constant 0 : i32
    %c0_i32_0 = arith.constant 0 : i32
    %c0_i32_1 = arith.constant 0 : i32
    %c0_i32_2 = arith.constant 0 : i32
    return %c0_i32, %c0_i32_0, %c0_i32_1 : i32, i32, i32
  }
  func.func @transform_12(%arg0: i32) -> (i32, i32, i32) {
    %c0_i32 = arith.constant 0 : i32
    %c0_i32_0 = arith.constant 0 : i32
    %c0_i32_1 = arith.constant 0 : i32
    %c0_i32_2 = arith.constant 0 : i32
    return %c0_i32, %c0_i32_0, %c0_i32_1 : i32, i32, i32
  }
  func.func @transform_13(%arg0: i32) -> (i32, i32, i32) {
    %c0_i32 = arith.constant 0 : i32
    %c0_i32_0 = arith.constant 0 : i32
    %c0_i32_1 = arith.constant 0 : i32
    %c0_i32_2 = arith.constant 0 : i32
    return %c0_i32, %c0_i32_0, %c0_i32_1 : i32, i32, i32
  }
  func.func @transform_14(%arg0: i32) -> (i32, i32, i32) {
    %c0_i32 = arith.constant 0 : i32
    %c0_i32_0 = arith.constant 0 : i32
    %c0_i32_1 = arith.constant 0 : i32
    %c0_i32_2 = arith.constant 0 : i32
    return %c0_i32, %c0_i32_0, %c0_i32_1 : i32, i32, i32
  }
  func.func @transform_15(%arg0: i32) -> (i32, i32, i32) {
    %c0_i32 = arith.constant 0 : i32
    %c0_i32_0 = arith.constant 0 : i32
    %c0_i32_1 = arith.constant 0 : i32
    %c0_i32_2 = arith.constant 0 : i32
    return %c0_i32, %c0_i32_0, %c0_i32_1 : i32, i32, i32
  }
  func.func @transform_16(%arg0: i32) -> (i32, i32, i32) {
    %c0_i32 = arith.constant 0 : i32
    %c0_i32_0 = arith.constant 0 : i32
    %c0_i32_1 = arith.constant 0 : i32
    %c0_i32_2 = arith.constant 0 : i32
    return %c0_i32, %c0_i32_0, %c0_i32_1 : i32, i32, i32
  }
  func.func @transform_17(%arg0: i32) -> (i32, i32, i32) {
    %c0_i32 = arith.constant 0 : i32
    %c0_i32_0 = arith.constant 0 : i32
    %c0_i32_1 = arith.constant 0 : i32
    %c0_i32_2 = arith.constant 0 : i32
    return %c0_i32, %c0_i32_0, %c0_i32_1 : i32, i32, i32
  }
  func.func @transform_18(%arg0: i32) -> (i32, i32, i32) {
    %c0_i32 = arith.constant 0 : i32
    %c0_i32_0 = arith.constant 0 : i32
    %c0_i32_1 = arith.constant 0 : i32
    %c0_i32_2 = arith.constant 0 : i32
    return %c0_i32, %c0_i32_0, %c0_i32_1 : i32, i32, i32
  }
  func.func @transform_19(%arg0: i32) -> (i32, i32, i32) {
    %c0_i32 = arith.constant 0 : i32
    %c0_i32_0 = arith.constant 0 : i32
    %c0_i32_1 = arith.constant 0 : i32
    %c0_i32_2 = arith.constant 0 : i32
    return %c0_i32, %c0_i32_0, %c0_i32_1 : i32, i32, i32
  }
  func.func @transform_20(%arg0: i32) -> (i32, i32) {
    %c0_i32 = arith.constant 0 : i32
    %c0_i32_0 = arith.constant 0 : i32
    %c0_i32_1 = arith.constant 0 : i32
    return %c0_i32, %c0_i32_0 : i32, i32
  }
  func.func @transform_21(%arg0: i32) -> (i32, i32) {
    %c0_i32 = arith.constant 0 : i32
    %c0_i32_0 = arith.constant 0 : i32
    %c0_i32_1 = arith.constant 0 : i32
    return %c0_i32, %c0_i32_0 : i32, i32
  }
  func.func @transform_22(%arg0: i32) -> (i32, i32) {
    %c0_i32 = arith.constant 0 : i32
    %c0_i32_0 = arith.constant 0 : i32
    return %arg0, %c0_i32 : i32, i32
  }
}

</mosaic_0001>

<llo_original>
// kernel: camembert_pos_forward.1
$region0: #{camembert_pos_forward.1}
  #allocation0 [shape = 'u32[]', space=smem, size = 0x4, offset = 0x4, fixed_abs, tag = 'smem constant byte address 0x4 - core index']
  #allocation1 [shape = 'u32[144,128]{1,0:T(1,128)}', space=vmem, size = 0x12000, scoped, tag = 'internal scratch']
  %s0 = inlined_call_operand.vmem [shape: f32[16,32], index: 0, kind: input, shape index: {}]
  %s1 = inlined_call_operand.vmem [shape: f32[2,1,8], index: 1, kind: input, shape index: {}]
  %s2 = inlined_call_operand.vmem [shape: f32[1,32], index: 2, kind: input, shape index: {}]
  %s3 = inlined_call_operand.vmem [shape: f32[1,32], index: 3, kind: input, shape index: {}]
  %s4 = inlined_call_operand.vmem [shape: f32[2,2,32,16], index: 4, kind: input, shape index: {}]
  %s5 = inlined_call_operand.vmem [shape: f32[2,2,1,16], index: 5, kind: input, shape index: {}]
  %s6 = inlined_call_operand.vmem [shape: f32[2,2,32,16], index: 6, kind: input, shape index: {}]
  %s7 = inlined_call_operand.vmem [shape: f32[2,2,1,16], index: 7, kind: input, shape index: {}]
  %s8 = inlined_call_operand.vmem [shape: f32[2,2,32,16], index: 8, kind: input, shape index: {}]
  %s9 = inlined_call_operand.vmem [shape: f32[2,2,1,16], index: 9, kind: input, shape index: {}]
  %s10 = inlined_call_operand.vmem [shape: f32[2,2,16,32], index: 10, kind: input, shape index: {}]
  %s11 = inlined_call_operand.vmem [shape: f32[2,1,32], index: 11, kind: input, shape index: {}]
  %s12 = inlined_call_operand.vmem [shape: f32[2,1,32], index: 12, kind: input, shape index: {}]
  %s13 = inlined_call_operand.vmem [shape: f32[2,1,32], index: 13, kind: input, shape index: {}]
  %s14 = inlined_call_operand.vmem [shape: f32[2,32,64], index: 14, kind: input, shape index: {}]
  %s15 = inlined_call_operand.vmem [shape: f32[2,1,64], index: 15, kind: input, shape index: {}]
  %s16 = inlined_call_operand.vmem [shape: f32[2,64,32], index: 16, kind: input, shape index: {}]
  %s17 = inlined_call_operand.vmem [shape: f32[2,1,32], index: 17, kind: input, shape index: {}]
  %s18 = inlined_call_operand.vmem [shape: f32[2,1,32], index: 18, kind: input, shape index: {}]
  %s19 = inlined_call_operand.vmem [shape: f32[2,1,32], index: 19, kind: input, shape index: {}]
  %s20 = inlined_call_operand.vmem [shape: f32[32,128], index: 20, kind: input, shape index: {}]
  %s21 = inlined_call_operand.vmem [shape: f32[1,128], index: 21, kind: input, shape index: {}]
  %s22 = inlined_call_operand.vmem [shape: f32[16,128], index: 22, kind: output, shape index: {}]
  %s23 = sld [smem:[#allocation0]]
  $region121: #{camembert_pos_forward.1} parent=0
    _
  %s25 = ssub.s32 1, %s23
  %s26 = scalar_select 0, %s25, %s23
  loop: start=0, step=1, limit=4
  $region2: #{camembert_pos_forward.1} parent=0 // loop_pre_header
    _
  $region3: #{camembert_pos_forward.1} parent=0 // loop_header
    %s28 = sphi 0, %s32
    %p29 = scmp.ge.s32.totalorder %s28, 4
    %s38 = sphi 0, %s40
    %s41 = sphi 0, %s38
    %s42 = sphi 0, %s41
    %s58 = sphi 0, %s42
    %s64 = sphi 0, %s66
    %s67 = sphi 0, %s64
    %s68 = sphi 0, %s67
    %s84 = sphi 0, %s68
    %s88 = sphi 0, %s88
    %s90 = sphi 0, %s88
    %s91 = sphi 0, %s90
    %s105 = sphi 0, %s91
    %s109 = sphi 0, %s109
    %s111 = sphi 0, %s109
    %s112 = sphi 0, %s111
    %s126 = sphi 0, %s112
    %s130 = sphi 0, %s130
    %s132 = sphi 0, %s130
    %s133 = sphi 0, %s132
    %s147 = sphi 0, %s133
    %s151 = sphi 0, %s151
    %s153 = sphi 0, %s151
    %s154 = sphi 0, %s153
    %s168 = sphi 0, %s154
    %s172 = sphi 0, %s172
    %s174 = sphi 0, %s172
    %s175 = sphi 0, %s174
    %s189 = sphi 0, %s175
    %s193 = sphi 0, %s193
    %s195 = sphi 0, %s193
    %s196 = sphi 0, %s195
    %s210 = sphi 0, %s196
    %s214 = sphi 0, %s214
    %s216 = sphi 0, %s214
    %s217 = sphi 0, %s216
    %s231 = sphi 0, %s217
    %s235 = sphi 0, %s235
    %s237 = sphi 0, %s235
    %s238 = sphi 0, %s237
    %s252 = sphi 0, %s238
    %s256 = sphi 0, %s256
    %s258 = sphi 0, %s256
    %s259 = sphi 0, %s258
    %s273 = sphi 0, %s259
    %s277 = sphi 0, %s277
    %s279 = sphi 0, %s277
    %s280 = sphi 0, %s279
    %s294 = sphi 0, %s280
    %s298 = sphi 0, %s298
    %s300 = sphi 0, %s298
    %s301 = sphi 0, %s300
    %s315 = sphi 0, %s301
    %s319 = sphi 0, %s319
    %s321 = sphi 0, %s319
    %s322 = sphi 0, %s321
    %s336 = sphi 0, %s322
    %s340 = sphi 0, %s340
    %s342 = sphi 0, %s340
    %s343 = sphi 0, %s342
    %s357 = sphi 0, %s343
    %s361 = sphi 0, %s361
    %s363 = sphi 0, %s361
    %s364 = sphi 0, %s363
    %s378 = sphi 0, %s364
    %s382 = sphi 0, %s382
    %s384 = sphi 0, %s382
    %s385 = sphi 0, %s384
    %s399 = sphi 0, %s385
    %s403 = sphi 0, %s403
    %s405 = sphi 0, %s403
    %s406 = sphi 0, %s405
    %s420 = sphi 0, %s406
    %s424 = sphi 0, %s424
    %s426 = sphi 0, %s424
    %s427 = sphi 0, %s426
    %s441 = sphi 0, %s427
    %s445 = sphi 0, %s445
    %s447 = sphi 0, %s445
    %s448 = sphi 0, %s447
    %s462 = sphi 0, %s448
    %s466 = sphi 0, %s466
    %s468 = sphi 0, %s466
    %s469 = sphi 0, %s468
    %s483 = sphi 0, %s469
    %s487 = sphi 0, %s487
    %s489 = sphi 0, %s487
    %s490 = sphi 0, %s489
    %s504 = sphi 0, %s490
    %s510 = sphi 0, %s512
    %s513 = sphi 0, %s510
    %s514 = sphi 0, %s513
    %s530 = sphi 0, %s514
  $region4: #{camembert_pos_forward.1} parent=0 // loop_header_branch
    %31 = sbr.rel (%p29) target = $region8
  $region5: #{camembert_pos_forward.1} parent=0 // loop_body
    %s33 = ssub.s32 %s28, 1
    %s34 = ssub.s32 %s28, 2
    %s35 = sadd.s32 %s28, 1
    %s36 = ssub.s32 %s28, %s35
    %p37 = scmp.eq.s32.totalorder %s36, 0
    %s39 = sadd.s32 %s38, 1
    %s40 = scalar_select %p37, %s38, %s39
    %p43 = pneg %p37
    %p44 = scmp.eq.s32.totalorder %s28, 1
    %p45 = por %p43, %p44
    %p46 = scmp.ne.s32.totalorder %s38, %s41
    %p47 = scmp.eq.s32.totalorder %s28, 0
    %p48 = por %p46, %p47
    %p49 = scmp.ne.s32.totalorder %s38, %s41
    %p50 = scmp.eq.s32.totalorder %s33, 1
    %p51 = por %p49, %p50
    %p52 = scmp.ne.s32.totalorder %s41, %s42
    %p53 = scmp.eq.s32.totalorder %s33, 0
    %p54 = por %p52, %p53
    %p55 = scmp.ne.s32.totalorder %s41, %s42
    %p56 = scmp.eq.s32.totalorder %s34, 1
    %p57 = por %p55, %p56
    %p59 = scmp.ne.s32.totalorder %s42, %s58
    %p60 = scmp.eq.s32.totalorder %s34, 0
    %p61 = por %p59, %p60
    %s62 = ssub.s32 %s28, %s35
    %p63 = scmp.eq.s32.totalorder %s62, 0
    %s65 = sadd.s32 %s64, 1
    %s66 = scalar_select %p63, %s64, %s65
    %p69 = pneg %p63
    %p70 = scmp.eq.s32.totalorder %s28, 1
    %p71 = por %p69, %p70
    %p72 = scmp.ne.s32.totalorder %s64, %s67
    %p73 = scmp.eq.s32.totalorder %s28, 0
    %p74 = por %p72, %p73
    %p75 = scmp.ne.s32.totalorder %s64, %s67
    %p76 = scmp.eq.s32.totalorder %s33, 1
    %p77 = por %p75, %p76
    %p78 = scmp.ne.s32.totalorder %s67, %s68
    %p79 = scmp.eq.s32.totalorder %s33, 0
    %p80 = por %p78, %p79
    %p81 = scmp.ne.s32.totalorder %s67, %s68
    %p82 = scmp.eq.s32.totalorder %s34, 1
    %p83 = por %p81, %p82
    %p85 = scmp.ne.s32.totalorder %s68, %s84
    %p86 = scmp.eq.s32.totalorder %s34, 0
    %p87 = por %p85, %p86
    %s89 = sadd.s32 %s88, 1
    %p92 = scmp.eq.s32.totalorder %s28, 1
    %p93 = scmp.ne.s32.totalorder %s88, %s90
    %p94 = scmp.eq.s32.totalorder %s28, 0
    %p95 = por %p93, %p94
    %p96 = scmp.ne.s32.totalorder %s88, %s90
    %p97 = scmp.eq.s32.totalorder %s33, 1
    %p98 = por %p96, %p97
    %p99 = scmp.ne.s32.totalorder %s90, %s91
    %p100 = scmp.eq.s32.totalorder %s33, 0
    %p101 = por %p99, %p100
    %p102 = scmp.ne.s32.totalorder %s90, %s91
    %p103 = scmp.eq.s32.totalorder %s34, 1
    %p104 = por %p102, %p103
    %p106 = scmp.ne.s32.totalorder %s91, %s105
    %p107 = scmp.eq.s32.totalorder %s34, 0
    %p108 = por %p106, %p107
    %s110 = sadd.s32 %s109, 1
    %p113 = scmp.eq.s32.totalorder %s28, 1
    %p114 = scmp.ne.s32.totalorder %s109, %s111
    %p115 = scmp.eq.s32.totalorder %s28, 0
    %p116 = por %p114, %p115
    %p117 = scmp.ne.s32.totalorder %s109, %s111
    %p118 = scmp.eq.s32.totalorder %s33, 1
    %p119 = por %p117, %p118
    %p120 = scmp.ne.s32.totalorder %s111, %s112
    %p121 = scmp.eq.s32.totalorder %s33, 0
    %p122 = por %p120, %p121
    %p123 = scmp.ne.s32.totalorder %s111, %s112
    %p124 = scmp.eq.s32.totalorder %s34, 1
    %p125 = por %p123, %p124
    %p127 = scmp.ne.s32.totalorder %s112, %s126
    %p128 = scmp.eq.s32.totalorder %s34, 0
    %p129 = por %p127, %p128
    %s131 = sadd.s32 %s130, 1
    %p134 = scmp.eq.s32.totalorder %s28, 1
    %p135 = scmp.ne.s32.totalorder %s130, %s132
    %p136 = scmp.eq.s32.totalorder %s28, 0
    %p137 = por %p135, %p136
    %p138 = scmp.ne.s32.totalorder %s130, %s132
    %p139 = scmp.eq.s32.totalorder %s33, 1
    %p140 = por %p138, %p139
    %p141 = scmp.ne.s32.totalorder %s132, %s133
    %p142 = scmp.eq.s32.totalorder %s33, 0
    %p143 = por %p141, %p142
    %p144 = scmp.ne.s32.totalorder %s132, %s133
    %p145 = scmp.eq.s32.totalorder %s34, 1
    %p146 = por %p144, %p145
    %p148 = scmp.ne.s32.totalorder %s133, %s147
    %p149 = scmp.eq.s32.totalorder %s34, 0
    %p150 = por %p148, %p149
    %s152 = sadd.s32 %s151, 1
    %p155 = scmp.eq.s32.totalorder %s28, 1
    %p156 = scmp.ne.s32.totalorder %s151, %s153
    %p157 = scmp.eq.s32.totalorder %s28, 0
    %p158 = por %p156, %p157
    %p159 = scmp.ne.s32.totalorder %s151, %s153
    %p160 = scmp.eq.s32.totalorder %s33, 1
    %p161 = por %p159, %p160
    %p162 = scmp.ne.s32.totalorder %s153, %s154
    %p163 = scmp.eq.s32.totalorder %s33, 0
    %p164 = por %p162, %p163
    %p165 = scmp.ne.s32.totalorder %s153, %s154
    %p166 = scmp.eq.s32.totalorder %s34, 1
    %p167 = por %p165, %p166
    %p169 = scmp.ne.s32.totalorder %s154, %s168
    %p170 = scmp.eq.s32.totalorder %s34, 0
    %p171 = por %p169, %p170
    %s173 = sadd.s32 %s172, 1
    %p176 = scmp.eq.s32.totalorder %s28, 1
    %p177 = scmp.ne.s32.totalorder %s172, %s174
    %p178 = scmp.eq.s32.totalorder %s28, 0
    %p179 = por %p177, %p178
    %p180 = scmp.ne.s32.totalorder %s172, %s174
    %p181 = scmp.eq.s32.totalorder %s33, 1
    %p182 = por %p180, %p181
    %p183 = scmp.ne.s32.totalorder %s174, %s175
    %p184 = scmp.eq.s32.totalorder %s33, 0
    %p185 = por %p183, %p184
    %p186 = scmp.ne.s32.totalorder %s174, %s175
    %p187 = scmp.eq.s32.totalorder %s34, 1
    %p188 = por %p186, %p187
    %p190 = scmp.ne.s32.totalorder %s175, %s189
    %p191 = scmp.eq.s32.totalorder %s34, 0
    %p192 = por %p190, %p191
    %s194 = sadd.s32 %s193, 1
    %p197 = scmp.eq.s32.totalorder %s28, 1
    %p198 = scmp.ne.s32.totalorder %s193, %s195
    %p199 = scmp.eq.s32.totalorder %s28, 0
    %p200 = por %p198, %p199
    %p201 = scmp.ne.s32.totalorder %s193, %s195
    %p202 = scmp.eq.s32.totalorder %s33, 1
    %p203 = por %p201, %p202
    %p204 = scmp.ne.s32.totalorder %s195, %s196
    %p205 = scmp.eq.s32.totalorder %s33, 0
    %p206 = por %p204, %p205
    %p207 = scmp.ne.s32.totalorder %s195, %s196
    %p208 = scmp.eq.s32.totalorder %s34, 1
    %p209 = por %p207, %p208
    %p211 = scmp.ne.s32.totalorder %s196, %s210
    %p212 = scmp.eq.s32.totalorder %s34, 0
    %p213 = por %p211, %p212
    %s215 = sadd.s32 %s214, 1
    %p218 = scmp.eq.s32.totalorder %s28, 1
    %p219 = scmp.ne.s32.totalorder %s214, %s216
    %p220 = scmp.eq.s32.totalorder %s28, 0
    %p221 = por %p219, %p220
    %p222 = scmp.ne.s32.totalorder %s214, %s216
    %p223 = scmp.eq.s32.totalorder %s33, 1
    %p224 = por %p222, %p223
    %p225 = scmp.ne.s32.totalorder %s216, %s217
    %p226 = scmp.eq.s32.totalorder %s33, 0
    %p227 = por %p225, %p226
    %p228 = scmp.ne.s32.totalorder %s216, %s217
    %p229 = scmp.eq.s32.totalorder %s34, 1
    %p230 = por %p228, %p229
    %p232 = scmp.ne.s32.totalorder %s217, %s231
    %p233 = scmp.eq.s32.totalorder %s34, 0
    %p234 = por %p232, %p233
    %s236 = sadd.s32 %s235, 1
    %p239 = scmp.eq.s32.totalorder %s28, 1
    %p240 = scmp.ne.s32.totalorder %s235, %s237
    %p241 = scmp.eq.s32.totalorder %s28, 0
    %p242 = por %p240, %p241
    %p243 = scmp.ne.s32.totalorder %s235, %s237
    %p244 = scmp.eq.s32.totalorder %s33, 1
    %p245 = por %p243, %p244
    %p246 = scmp.ne.s32.totalorder %s237, %s238
    %p247 = scmp.eq.s32.totalorder %s33, 0
    %p248 = por %p246, %p247
    %p249 = scmp.ne.s32.totalorder %s237, %s238
    %p250 = scmp.eq.s32.totalorder %s34, 1
    %p251 = por %p249, %p250
    %p253 = scmp.ne.s32.totalorder %s238, %s252
    %p254 = scmp.eq.s32.totalorder %s34, 0
    %p255 = por %p253, %p254
    %s257 = sadd.s32 %s256, 1
    %p260 = scmp.eq.s32.totalorder %s28, 1
    %p261 = scmp.ne.s32.totalorder %s256, %s258
    %p262 = scmp.eq.s32.totalorder %s28, 0
    %p263 = por %p261, %p262
    %p264 = scmp.ne.s32.totalorder %s256, %s258
    %p265 = scmp.eq.s32.totalorder %s33, 1
    %p266 = por %p264, %p265
    %p267 = scmp.ne.s32.totalorder %s258, %s259
    %p268 = scmp.eq.s32.totalorder %s33, 0
    %p269 = por %p267, %p268
    %p270 = scmp.ne.s32.totalorder %s258, %s259
    %p271 = scmp.eq.s32.totalorder %s34, 1
    %p272 = por %p270, %p271
    %p274 = scmp.ne.s32.totalorder %s259, %s273
    %p275 = scmp.eq.s32.totalorder %s34, 0
    %p276 = por %p274, %p275
    %s278 = sadd.s32 %s277, 1
    %p281 = scmp.eq.s32.totalorder %s28, 1
    %p282 = scmp.ne.s32.totalorder %s277, %s279
    %p283 = scmp.eq.s32.totalorder %s28, 0
    %p284 = por %p282, %p283
    %p285 = scmp.ne.s32.totalorder %s277, %s279
    %p286 = scmp.eq.s32.totalorder %s33, 1
    %p287 = por %p285, %p286
    %p288 = scmp.ne.s32.totalorder %s279, %s280
    %p289 = scmp.eq.s32.totalorder %s33, 0
    %p290 = por %p288, %p289
    %p291 = scmp.ne.s32.totalorder %s279, %s280
    %p292 = scmp.eq.s32.totalorder %s34, 1
    %p293 = por %p291, %p292
    %p295 = scmp.ne.s32.totalorder %s280, %s294
    %p296 = scmp.eq.s32.totalorder %s34, 0
    %p297 = por %p295, %p296
    %s299 = sadd.s32 %s298, 1
    %p302 = scmp.eq.s32.totalorder %s28, 1
    %p303 = scmp.ne.s32.totalorder %s298, %s300
    %p304 = scmp.eq.s32.totalorder %s28, 0
    %p305 = por %p303, %p304
    %p306 = scmp.ne.s32.totalorder %s298, %s300
    %p307 = scmp.eq.s32.totalorder %s33, 1
    %p308 = por %p306, %p307
    %p309 = scmp.ne.s32.totalorder %s300, %s301
    %p310 = scmp.eq.s32.totalorder %s33, 0
    %p311 = por %p309, %p310
    %p312 = scmp.ne.s32.totalorder %s300, %s301
    %p313 = scmp.eq.s32.totalorder %s34, 1
    %p314 = por %p312, %p313
    %p316 = scmp.ne.s32.totalorder %s301, %s315
    %p317 = scmp.eq.s32.totalorder %s34, 0
    %p318 = por %p316, %p317
    %s320 = sadd.s32 %s319, 1
    %p323 = scmp.eq.s32.totalorder %s28, 1
    %p324 = scmp.ne.s32.totalorder %s319, %s321
    %p325 = scmp.eq.s32.totalorder %s28, 0
    %p326 = por %p324, %p325
    %p327 = scmp.ne.s32.totalorder %s319, %s321
    %p328 = scmp.eq.s32.totalorder %s33, 1
    %p329 = por %p327, %p328
    %p330 = scmp.ne.s32.totalorder %s321, %s322
    %p331 = scmp.eq.s32.totalorder %s33, 0
    %p332 = por %p330, %p331
    %p333 = scmp.ne.s32.totalorder %s321, %s322
    %p334 = scmp.eq.s32.totalorder %s34, 1
    %p335 = por %p333, %p334
    %p337 = scmp.ne.s32.totalorder %s322, %s336
    %p338 = scmp.eq.s32.totalorder %s34, 0
    %p339 = por %p337, %p338
    %s341 = sadd.s32 %s340, 1
    %p344 = scmp.eq.s32.totalorder %s28, 1
    %p345 = scmp.ne.s32.totalorder %s340, %s342
    %p346 = scmp.eq.s32.totalorder %s28, 0
    %p347 = por %p345, %p346
    %p348 = scmp.ne.s32.totalorder %s340, %s342
    %p349 = scmp.eq.s32.totalorder %s33, 1
    %p350 = por %p348, %p349
    %p351 = scmp.ne.s32.totalorder %s342, %s343
    %p352 = scmp.eq.s32.totalorder %s33, 0
    %p353 = por %p351, %p352
    %p354 = scmp.ne.s32.totalorder %s342, %s343
    %p355 = scmp.eq.s32.totalorder %s34, 1
    %p356 = por %p354, %p355
    %p358 = scmp.ne.s32.totalorder %s343, %s357
    %p359 = scmp.eq.s32.totalorder %s34, 0
    %p360 = por %p358, %p359
    %s362 = sadd.s32 %s361, 1
    %p365 = scmp.eq.s32.totalorder %s28, 1
    %p366 = scmp.ne.s32.totalorder %s361, %s363
    %p367 = scmp.eq.s32.totalorder %s28, 0
    %p368 = por %p366, %p367
    %p369 = scmp.ne.s32.totalorder %s361, %s363
    %p370 = scmp.eq.s32.totalorder %s33, 1
    %p371 = por %p369, %p370
    %p372 = scmp.ne.s32.totalorder %s363, %s364
    %p373 = scmp.eq.s32.totalorder %s33, 0
    %p374 = por %p372, %p373
    %p375 = scmp.ne.s32.totalorder %s363, %s364
    %p376 = scmp.eq.s32.totalorder %s34, 1
    %p377 = por %p375, %p376
    %p379 = scmp.ne.s32.totalorder %s364, %s378
    %p380 = scmp.eq.s32.totalorder %s34, 0
    %p381 = por %p379, %p380
    %s383 = sadd.s32 %s382, 1
    %p386 = scmp.eq.s32.totalorder %s28, 1
    %p387 = scmp.ne.s32.totalorder %s382, %s384
    %p388 = scmp.eq.s32.totalorder %s28, 0
    %p389 = por %p387, %p388
    %p390 = scmp.ne.s32.totalorder %s382, %s384
    %p391 = scmp.eq.s32.totalorder %s33, 1
    %p392 = por %p390, %p391
    %p393 = scmp.ne.s32.totalorder %s384, %s385
    %p394 = scmp.eq.s32.totalorder %s33, 0
    %p395 = por %p393, %p394
    %p396 = scmp.ne.s32.totalorder %s384, %s385
    %p397 = scmp.eq.s32.totalorder %s34, 1
    %p398 = por %p396, %p397
    %p400 = scmp.ne.s32.totalorder %s385, %s399
    %p401 = scmp.eq.s32.totalorder %s34, 0
    %p402 = por %p400, %p401
    %s404 = sadd.s32 %s403, 1
    %p407 = scmp.eq.s32.totalorder %s28, 1
    %p408 = scmp.ne.s32.totalorder %s403, %s405
    %p409 = scmp.eq.s32.totalorder %s28, 0
    %p410 = por %p408, %p409
    %p411 = scmp.ne.s32.totalorder %s403, %s405
    %p412 = scmp.eq.s32.totalorder %s33, 1
    %p413 = por %p411, %p412
    %p414 = scmp.ne.s32.totalorder %s405, %s406
    %p415 = scmp.eq.s32.totalorder %s33, 0
    %p416 = por %p414, %p415
    %p417 = scmp.ne.s32.totalorder %s405, %s406
    %p418 = scmp.eq.s32.totalorder %s34, 1
    %p419 = por %p417, %p418
    %p421 = scmp.ne.s32.totalorder %s406, %s420
    %p422 = scmp.eq.s32.totalorder %s34, 0
    %p423 = por %p421, %p422
    %s425 = sadd.s32 %s424, 1
    %p428 = scmp.eq.s32.totalorder %s28, 1
    %p429 = scmp.ne.s32.totalorder %s424, %s426
    %p430 = scmp.eq.s32.totalorder %s28, 0
    %p431 = por %p429, %p430
    %p432 = scmp.ne.s32.totalorder %s424, %s426
    %p433 = scmp.eq.s32.totalorder %s33, 1
    %p434 = por %p432, %p433
    %p435 = scmp.ne.s32.totalorder %s426, %s427
    %p436 = scmp.eq.s32.totalorder %s33, 0
    %p437 = por %p435, %p436
    %p438 = scmp.ne.s32.totalorder %s426, %s427
    %p439 = scmp.eq.s32.totalorder %s34, 1
    %p440 = por %p438, %p439
    %p442 = scmp.ne.s32.totalorder %s427, %s441
    %p443 = scmp.eq.s32.totalorder %s34, 0
    %p444 = por %p442, %p443
    %s446 = sadd.s32 %s445, 1
    %p449 = scmp.eq.s32.totalorder %s28, 1
    %p450 = scmp.ne.s32.totalorder %s445, %s447
    %p451 = scmp.eq.s32.totalorder %s28, 0
    %p452 = por %p450, %p451
    %p453 = scmp.ne.s32.totalorder %s445, %s447
    %p454 = scmp.eq.s32.totalorder %s33, 1
    %p455 = por %p453, %p454
    %p456 = scmp.ne.s32.totalorder %s447, %s448
    %p457 = scmp.eq.s32.totalorder %s33, 0
    %p458 = por %p456, %p457
    %p459 = scmp.ne.s32.totalorder %s447, %s448
    %p460 = scmp.eq.s32.totalorder %s34, 1
    %p461 = por %p459, %p460
    %p463 = scmp.ne.s32.totalorder %s448, %s462
    %p464 = scmp.eq.s32.totalorder %s34, 0
    %p465 = por %p463, %p464
    %s467 = sadd.s32 %s466, 1
    %p470 = scmp.eq.s32.totalorder %s28, 1
    %p471 = scmp.ne.s32.totalorder %s466, %s468
    %p472 = scmp.eq.s32.totalorder %s28, 0
    %p473 = por %p471, %p472
    %p474 = scmp.ne.s32.totalorder %s466, %s468
    %p475 = scmp.eq.s32.totalorder %s33, 1
    %p476 = por %p474, %p475
    %p477 = scmp.ne.s32.totalorder %s468, %s469
    %p478 = scmp.eq.s32.totalorder %s33, 0
    %p479 = por %p477, %p478
    %p480 = scmp.ne.s32.totalorder %s468, %s469
    %p481 = scmp.eq.s32.totalorder %s34, 1
    %p482 = por %p480, %p481
    %p484 = scmp.ne.s32.totalorder %s469, %s483
    %p485 = scmp.eq.s32.totalorder %s34, 0
    %p486 = por %p484, %p485
    %s488 = sadd.s32 %s487, 1
    %p491 = scmp.eq.s32.totalorder %s28, 1
    %p492 = scmp.ne.s32.totalorder %s487, %s489
    %p493 = scmp.eq.s32.totalorder %s28, 0
    %p494 = por %p492, %p493
    %p495 = scmp.ne.s32.totalorder %s487, %s489
    %p496 = scmp.eq.s32.totalorder %s33, 1
    %p497 = por %p495, %p496
    %p498 = scmp.ne.s32.totalorder %s489, %s490
    %p499 = scmp.eq.s32.totalorder %s33, 0
    %p500 = por %p498, %p499
    %p501 = scmp.ne.s32.totalorder %s489, %s490
    %p502 = scmp.eq.s32.totalorder %s34, 1
    %p503 = por %p501, %p502
    %p505 = scmp.ne.s32.totalorder %s490, %s504
    %p506 = scmp.eq.s32.totalorder %s34, 0
    %p507 = por %p505, %p506
    %s508 = ssub.s32 %s28, %s35
    %p509 = scmp.eq.s32.totalorder %s508, 0
    %s511 = sadd.s32 %s510, 1
    %s512 = scalar_select %p509, %s510, %s511
    %p515 = pneg %p509
    %p516 = scmp.eq.s32.totalorder %s28, 1
    %p517 = por %p515, %p516
    %p518 = scmp.ne.s32.totalorder %s510, %s513
    %p519 = scmp.eq.s32.totalorder %s28, 0
    %p520 = por %p518, %p519
    %p521 = scmp.ne.s32.totalorder %s510, %s513
    %p522 = scmp.eq.s32.totalorder %s33, 1
    %p523 = por %p521, %p522
    %p524 = scmp.ne.s32.totalorder %s513, %s514
    %p525 = scmp.eq.s32.totalorder %s33, 0
    %p526 = por %p524, %p525
    %p527 = scmp.ne.s32.totalorder %s513, %s514
    %p528 = scmp.eq.s32.totalorder %s34, 1
    %p529 = por %p527, %p528
    %p531 = scmp.ne.s32.totalorder %s514, %s530
    %p532 = scmp.eq.s32.totalorder %s34, 0
    %p533 = por %p531, %p532
    %p534 = scmp.le.s32.totalorder 1, %s28
    %p535 = scmp.lt.s32.totalorder %s28, 3
    %p536 = pnand %p534, %p535
    %p537 = pneg %p536
    // Predicated region
    $region9: #{camembert_pos_forward.1} parent=5 // pred_check
      _
    $region10: #{camembert_pos_forward.1} parent=5 // pred_check_branch
      %539 = sbr.rel (%p536) target = $region12
    $region11: #{camembert_pos_forward.1} parent=5 // pred_region
      %s540 = ssub.s32 %s28, 1
      // Predicated region
      $region13: #{camembert_pos_forward.1} parent=11 // pred_check
        %p541 = pneg %p101
      $region14: #{camembert_pos_forward.1} parent=11 // pred_check_branch
        %543 = sbr.rel (%p541) target = $region16
      $region15: #{camembert_pos_forward.1} parent=11 // pred_region
        _
      $region16: #{camembert_pos_forward.1} parent=11 // pred_fallthru
        _
      // Predicated region
      $region17: #{camembert_pos_forward.1} parent=11 // pred_check
        %p544 = pneg %p122
      $region18: #{camembert_pos_forward.1} parent=11 // pred_check_branch
        %546 = sbr.rel (%p544) target = $region20
      $region19: #{camembert_pos_forward.1} parent=11 // pred_region
        _
      $region20: #{camembert_pos_forward.1} parent=11 // pred_fallthru
        _
      // Predicated region
      $region21: #{camembert_pos_forward.1} parent=11 // pred_check
        %p547 = pneg %p143
      $region22: #{camembert_pos_forward.1} parent=11 // pred_check_branch
        %549 = sbr.rel (%p547) target = $region24
      $region23: #{camembert_pos_forward.1} parent=11 // pred_region
        _
      $region24: #{camembert_pos_forward.1} parent=11 // pred_fallthru
        _
      // Predicated region
      $region25: #{camembert_pos_forward.1} parent=11 // pred_check
        %p550 = pneg %p164
      $region26: #{camembert_pos_forward.1} parent=11 // pred_check_branch
        %552 = sbr.rel (%p550) target = $region28
      $region27: #{camembert_pos_forward.1} parent=11 // pred_region
        _
      $region28: #{camembert_pos_forward.1} parent=11 // pred_fallthru
        _
      // Predicated region
      $region29: #{camembert_pos_forward.1} parent=11 // pred_check
        %p553 = pneg %p185
      $region30: #{camembert_pos_forward.1} parent=11 // pred_check_branch
        %555 = sbr.rel (%p553) target = $region32
      $region31: #{camembert_pos_forward.1} parent=11 // pred_region
        _
      $region32: #{camembert_pos_forward.1} parent=11 // pred_fallthru
        _
      // Predicated region
      $region33: #{camembert_pos_forward.1} parent=11 // pred_check
        %p556 = pneg %p206
      $region34: #{camembert_pos_forward.1} parent=11 // pred_check_branch
        %558 = sbr.rel (%p556) target = $region36
      $region35: #{camembert_pos_forward.1} parent=11 // pred_region
        _
      $region36: #{camembert_pos_forward.1} parent=11 // pred_fallthru
        _
      // Predicated region
      $region37: #{camembert_pos_forward.1} parent=11 // pred_check
        %p559 = pneg %p227
      $region38: #{camembert_pos_forward.1} parent=11 // pred_check_branch
        %561 = sbr.rel (%p559) target = $region40
      $region39: #{camembert_pos_forward.1} parent=11 // pred_region
        _
      $region40: #{camembert_pos_forward.1} parent=11 // pred_fallthru
        _
      // Predicated region
      $region41: #{camembert_pos_forward.1} parent=11 // pred_check
        %p562 = pneg %p248
      $region42: #{camembert_pos_forward.1} parent=11 // pred_check_branch
        %564 = sbr.rel (%p562) target = $region44
      $region43: #{camembert_pos_forward.1} parent=11 // pred_region
        _
      $region44: #{camembert_pos_forward.1} parent=11 // pred_fallthru
        _
      // Predicated region
      $region45: #{camembert_pos_forward.1} parent=11 // pred_check
        %p565 = pneg %p269
      $region46: #{camembert_pos_forward.1} parent=11 // pred_check_branch
        %567 = sbr.rel (%p565) target = $region48
      $region47: #{camembert_pos_forward.1} parent=11 // pred_region
        _
      $region48: #{camembert_pos_forward.1} parent=11 // pred_fallthru
        _
      // Predicated region
      $region49: #{camembert_pos_forward.1} parent=11 // pred_check
        %p568 = pneg %p290
      $region50: #{camembert_pos_forward.1} parent=11 // pred_check_branch
        %570 = sbr.rel (%p568) target = $region52
      $region51: #{camembert_pos_forward.1} parent=11 // pred_region
        _
      $region52: #{camembert_pos_forward.1} parent=11 // pred_fallthru
        _
      // Predicated region
      $region53: #{camembert_pos_forward.1} parent=11 // pred_check
        %p571 = pneg %p311
      $region54: #{camembert_pos_forward.1} parent=11 // pred_check_branch
        %573 = sbr.rel (%p571) target = $region56
      $region55: #{camembert_pos_forward.1} parent=11 // pred_region
        _
      $region56: #{camembert_pos_forward.1} parent=11 // pred_fallthru
        _
      // Predicated region
      $region57: #{camembert_pos_forward.1} parent=11 // pred_check
        %p574 = pneg %p332
      $region58: #{camembert_pos_forward.1} parent=11 // pred_check_branch
        %576 = sbr.rel (%p574) target = $region60
      $region59: #{camembert_pos_forward.1} parent=11 // pred_region
        _
      $region60: #{camembert_pos_forward.1} parent=11 // pred_fallthru
        _
      // Predicated region
      $region61: #{camembert_pos_forward.1} parent=11 // pred_check
        %p577 = pneg %p353
      $region62: #{camembert_pos_forward.1} parent=11 // pred_check_branch
        %579 = sbr.rel (%p577) target = $region64
      $region63: #{camembert_pos_forward.1} parent=11 // pred_region
        _
      $region64: #{camembert_pos_forward.1} parent=11 // pred_fallthru
        _
      // Predicated region
      $region65: #{camembert_pos_forward.1} parent=11 // pred_check
        %p580 = pneg %p374
      $region66: #{camembert_pos_forward.1} parent=11 // pred_check_branch
        %582 = sbr.rel (%p580) target = $region68
      $region67: #{camembert_pos_forward.1} parent=11 // pred_region
        _
      $region68: #{camembert_pos_forward.1} parent=11 // pred_fallthru
        _
      // Predicated region
      $region69: #{camembert_pos_forward.1} parent=11 // pred_check
        %p583 = pneg %p395
      $region70: #{camembert_pos_forward.1} parent=11 // pred_check_branch
        %585 = sbr.rel (%p583) target = $region72
      $region71: #{camembert_pos_forward.1} parent=11 // pred_region
        _
      $region72: #{camembert_pos_forward.1} parent=11 // pred_fallthru
        _
      // Predicated region
      $region73: #{camembert_pos_forward.1} parent=11 // pred_check
        %p586 = pneg %p416
      $region74: #{camembert_pos_forward.1} parent=11 // pred_check_branch
        %588 = sbr.rel (%p586) target = $region76
      $region75: #{camembert_pos_forward.1} parent=11 // pred_region
        _
      $region76: #{camembert_pos_forward.1} parent=11 // pred_fallthru
        _
      // Predicated region
      $region77: #{camembert_pos_forward.1} parent=11 // pred_check
        %p589 = pneg %p437
      $region78: #{camembert_pos_forward.1} parent=11 // pred_check_branch
        %591 = sbr.rel (%p589) target = $region80
      $region79: #{camembert_pos_forward.1} parent=11 // pred_region
        _
      $region80: #{camembert_pos_forward.1} parent=11 // pred_fallthru
        _
      // Predicated region
      $region81: #{camembert_pos_forward.1} parent=11 // pred_check
        %p592 = pneg %p458
      $region82: #{camembert_pos_forward.1} parent=11 // pred_check_branch
        %594 = sbr.rel (%p592) target = $region84
      $region83: #{camembert_pos_forward.1} parent=11 // pred_region
        _
      $region84: #{camembert_pos_forward.1} parent=11 // pred_fallthru
        _
      // Predicated region
      $region85: #{camembert_pos_forward.1} parent=11 // pred_check
        %p595 = pneg %p479
      $region86: #{camembert_pos_forward.1} parent=11 // pred_check_branch
        %597 = sbr.rel (%p595) target = $region88
      $region87: #{camembert_pos_forward.1} parent=11 // pred_region
        _
      $region88: #{camembert_pos_forward.1} parent=11 // pred_fallthru
        _
      // Predicated region
      $region89: #{camembert_pos_forward.1} parent=11 // pred_check
        %p598 = pneg %p500
      $region90: #{camembert_pos_forward.1} parent=11 // pred_check_branch
        %600 = sbr.rel (%p598) target = $region92
      $region91: #{camembert_pos_forward.1} parent=11 // pred_region
        _
      $region92: #{camembert_pos_forward.1} parent=11 // pred_fallthru
        _
    $region12: #{camembert_pos_forward.1} parent=5 // pred_fallthru
      _
    %p601 = scmp.lt.s32.totalorder %s28, 2
    // Predicated region
    $region93: #{camembert_pos_forward.1} parent=5 // pred_check
      %p602 = pneg %p601
    $region94: #{camembert_pos_forward.1} parent=5 // pred_check_branch
      %604 = sbr.rel (%p602) target = $region96
    $region95: #{camembert_pos_forward.1} parent=5 // pred_region
      // Predicated region
      $region97: #{camembert_pos_forward.1} parent=95 // pred_check
        %p605 = pneg %p48
      $region98: #{camembert_pos_forward.1} parent=95 // pred_check_branch
        %607 = sbr.rel (%p605) target = $region100
      $region99: #{camembert_pos_forward.1} parent=95 // pred_region
        %p608 = scmp.lt.s32.totalorder %s28, 1
        %s609 = scalar_select %p608, %s28, 1
        %s610 = smul.addr %s609, 8
        %s611 = scalar_lea.vmem %s0, %s610
      $region100: #{camembert_pos_forward.1} parent=95 // pred_fallthru
        _
      // Predicated region
      $region101: #{camembert_pos_forward.1} parent=95 // pred_check
        %p612 = pneg %p74
      $region102: #{camembert_pos_forward.1} parent=95 // pred_check_branch
        %614 = sbr.rel (%p612) target = $region104
      $region103: #{camembert_pos_forward.1} parent=95 // pred_region
        %p615 = scmp.lt.s32.totalorder %s28, 1
        %s616 = scalar_select %p615, %s28, 1
        %s617 = scalar_lea.vmem %s1, %s616
      $region104: #{camembert_pos_forward.1} parent=95 // pred_fallthru
        _
    $region96: #{camembert_pos_forward.1} parent=5 // pred_fallthru
      _
    %p618 = scmp.le.s32.totalorder 1, %s28
    %p619 = scmp.lt.s32.totalorder %s28, 3
    %p620 = pnand %p618, %p619
    %p621 = pneg %p620
    // Predicated region
    $region105: #{camembert_pos_forward.1} parent=5 // pred_check
      _
    $region106: #{camembert_pos_forward.1} parent=5 // pred_check_branch
      %623 = sbr.rel (%p620) target = $region108
    $region107: #{camembert_pos_forward.1} parent=5 // pred_region
      %s624 = ssub.s32 %s28, 1
      %p625 = scmp.lt.s32.totalorder %s33, 1
      %s626 = scalar_select %p625, %s33, 1
      %s627 = smul.addr %s626, 8
      %s628 = scalar_lea.vmem %s0, %s627
      %p629 = pneg %p54
      %p630 = pneg %p51
      %p631 = scmp.lt.s32.totalorder %s33, 1
      %s632 = scalar_select %p631, %s33, 1
      %s633 = scalar_lea.vmem %s1, %s632
      %p634 = pneg %p80
      %p635 = pneg %p77
      %p636 = pneg %p101
      %p637 = pneg %p98
      %p638 = pneg %p122
      %p639 = pneg %p119
      %p640 = pneg %p143
      %p641 = pneg %p140
      %p642 = pneg %p164
      %p643 = pneg %p161
      %p644 = pneg %p185
      %p645 = pneg %p182
      %p646 = pneg %p206
      %p647 = pneg %p203
      %p648 = pneg %p227
      %p649 = pneg %p224
      %p650 = pneg %p248
      %p651 = pneg %p245
      %p652 = pneg %p269
      %p653 = pneg %p266
      %p654 = pneg %p290
      %p655 = pneg %p287
      %p656 = pneg %p311
      %p657 = pneg %p308
      %p658 = pneg %p332
      %p659 = pneg %p329
      %p660 = pneg %p353
      %p661 = pneg %p350
      %p662 = pneg %p374
      %p663 = pneg %p371
      %p664 = pneg %p395
      %p665 = pneg %p392
      %p666 = pneg %p416
      %p667 = pneg %p413
      %p668 = pneg %p437
      %p669 = pneg %p434
      %p670 = pneg %p458
      %p671 = pneg %p455
      %p672 = pneg %p479
      %p673 = pneg %p476
      %p674 = pneg %p500
      %p675 = pneg %p497
      %p676 = pneg %p526
      %p677 = pneg %p523
      %p678 = scmp.lt.s32.totalorder %s33, 1
      %s679 = scalar_select %p678, %s33, 1
      %s680 = smul.addr %s679, 8
      %s681 = scalar_lea.vmem %s22, %s680
      %p682 = scmp.lt.s32.totalorder %s33, 1
      %s683 = scalar_select %p682, %s33, 1
      %s684 = smul.addr %s683, 8
      %s685 = scalar_lea.vmem %s0, %s684
      %p686 = scmp.lt.s32.totalorder %s33, 1
      %s687 = scalar_select %p686, %s33, 1
      %s688 = scalar_lea.vmem %s1, %s687
      %p689 = scmp.lt.s32.totalorder %s33, 1
      %s690 = scalar_select %p689, %s33, 1
      %s691 = smul.addr %s690, 8
      %s692 = scalar_lea.vmem %s22, %s691
      %v693 = vld [vmem:[%s685] sm:$0xff]
      %v694 = vld [vmem:[%s2] sm:$0x1]
      %v695 = vld [vmem:[%s3] sm:$0x1]
      %vm696 = vcmask 261120
      %v697 = vsel %vm696, %v693, 0.0
      %698 = vadd.xlane.f32.xlu0 %v697
      %v699 = vpop.xlane.xlu0 %698
      %v700 = vrcp.pop 32.0
      %v701 = vmul.f32 %v699, %v700
      %v702 = vsub.f32 %v693, %v701
      %v703 = vmul.f32 %v702, %v702
      %v704 = vsel %vm696, %v703, 0.0
      %705 = vadd.xlane.f32.xlu0 %v704
      %v706 = vpop.xlane.xlu0 %705
      %v707 = vmul.f32 %v706, %v700
      %v708 = vadd.f32 %v707, 1e-05
      %v709 = vrsqrt.pop %v708
      %v710 = vmul.f32 %v702, %v709
      %v712 = vlaneseq
      %v713 = vshrl.u32 %v712, 7
      %v714 = vsub.s32 0, %v713
      %v715 = vrot.slane %v694, %v714
      %v717 = vmul.f32 %v710, %v715
      %v719 = vlaneseq
      %v720 = vshrl.u32 %v719, 7
      %v721 = vsub.s32 0, %v720
      %v722 = vrot.slane %v695, %v721
      %v724 = vadd.f32 %v717, %v722
      %v725 = vld [vmem:[%s688] sm:$0x1]
      %v726 = vld [vmem:[%s4] sm:$0xff]
      %v727 = vld [vmem:[%s4 + $0x8] sm:$0xff]
      %v728 = vld [vmem:[%s4 + $0x10] sm:$0xff]
      %v729 = vld [vmem:[%s4 + $0x18] sm:$0xff]
      %v730 = vld [vmem:[%s4 + $0x20] sm:$0xff]
      %v731 = vld [vmem:[%s4 + $0x28] sm:$0xff]
      %v732 = vld [vmem:[%s4 + $0x30] sm:$0xff]
      %v733 = vld [vmem:[%s4 + $0x38] sm:$0xff]
      %v734 = vld [vmem:[%s5] sm:$0x1]
      %v735 = vld [vmem:[%s5 + $0x1] sm:$0x1]
      %v738 = vlaneseq
      %v739 = vshrl.u32 %v738, 7
      %v740 = vsub.s32 0, %v739
      %v741 = vrot.slane %v734, %v740
      %v742 = vlaneseq
      %v743 = vshrl.u32 %v742, 7
      %v744 = vsub.s32 0, %v743
      %v745 = vrot.slane %v735, %v744
      %v749 = vsel %vm696, %v724, 0
      %751 = vmatprep.subr.mxu0 0.0
      %752 = vmatpush1.msra.mxu0 %v726
      %753 = vmatprep.subr.mxu0 0.0
      %754 = vmatpush1.msra.mxu0 %v727
      %755 = vmatprep.subr.mxu0 0.0
      %756 = vmatpush1.msra.mxu0 %v728
      %757 = vmatprep.subr.mxu0 0.0
      %758 = vmatpush1.msra.mxu0 %v729
      %759 = vmatprep.subr.mxu0 0.0
      %760 = vmatpush1.msra.mxu0 0.0
      %761 = vmatprep.subr.mxu0 0.0
      %762 = vmatpush1.msra.mxu0 0.0
      %763 = vmatprep.subr.mxu0 0.0
      %764 = vmatpush1.msra.mxu0 0.0
      %765 = vmatprep.subr.mxu0 0.0
      %766 = vmatpush1.msra.mxu0 0.0
      %767 = vmatprep.subr.mxu0 0.0
      %768 = vmatpush1.msra.mxu0 0.0
      %769 = vmatprep.subr.mxu0 0.0
      %770 = vmatpush1.msra.mxu0 0.0
      %771 = vmatprep.subr.mxu0 0.0
      %772 = vmatpush1.msra.mxu0 0.0
      %773 = vmatprep.subr.mxu0 0.0
      %774 = vmatpush1.msra.mxu0 0.0
      %775 = vmatprep.subr.mxu0 0.0
      %776 = vmatpush1.msra.mxu0 0.0
      %777 = vmatprep.subr.mxu0 0.0
      %778 = vmatpush1.msra.mxu0 0.0
      %779 = vmatprep.subr.mxu0 0.0
      %780 = vmatpush1.msra.mxu0 0.0
      %781 = vmatprep.subr.mxu0 0.0
      %782 = vmatpush1.msra.mxu0 0.0
      %783 = vmatprep.subr.mxu0 0.0
      %784 = vmatpush1.msra.mxu0 0.0
      %785 = vmatprep.subr.mxu0 0.0
      %786 = vmatpush1.msra.mxu0 0.0
      %787 = vmatprep.subr.mxu0 0.0
      %788 = vmatpush1.msra.mxu0 0.0
      %789 = vmatprep.subr.mxu0 0.0
      %790 = vmatpush1.msra.mxu0 0.0
      %791 = vmatprep.subr.mxu0 0.0
      %792 = vmatpush1.msra.mxu0 0.0
      %793 = vmatprep.subr.mxu0 0.0
      %794 = vmatpush1.msra.mxu0 0.0
      %795 = vmatprep.subr.mxu0 0.0
      %796 = vmatpush1.msra.mxu0 0.0
      %797 = vmatprep.subr.mxu0 0.0
      %798 = vmatpush1.msra.mxu0 0.0
      %799 = vmatprep.subr.mxu0 0.0
      %800 = vmatpush1.msra.mxu0 0.0
      %801 = vmatprep.subr.mxu0 0.0
      %802 = vmatpush1.msra.mxu0 0.0
      %803 = vmatprep.subr.mxu0 0.0
      %804 = vmatpush1.msra.mxu0 0.0
      %805 = vmatprep.subr.mxu0 0.0
      %806 = vmatpush1.msra.mxu0 0.0
      %807 = vmatprep.subr.mxu0 0.0
      %808 = vmatpush1.msra.mxu0 0.0
      %809 = vmatprep.subr.mxu0 0.0
      %810 = vmatpush1.msra.mxu0 0.0
      %811 = vmatprep.subr.mxu0 0.0
      %812 = vmatpush1.msra.mxu0 0.0
      %813 = vmatprep.subr.mxu0 0.0
      %814 = vmatpush1.msra.mxu0 0.0
      %815 = vmatprep.mubr.f32.mxu0 0.0
      %816 = vmatmul.mubr.f32.gmra.mrb[0].mxu0 %v749
      %v817 = vpop.f32.mrb[0].mxu0
      %v818 = vadd.f32 %v741, %v817
      %v819 = vpop.f32.mrb[0].mxu0
      %820 = vdwg.mxu0
      %821 = vmatprep.subr.mxu0 0.0
      %822 = vmatpush1.msra.mxu0 %v730
      %823 = vmatprep.subr.mxu0 0.0
      %824 = vmatpush1.msra.mxu0 %v731
      %825 = vmatprep.subr.mxu0 0.0
      %826 = vmatpush1.msra.mxu0 %v732
      %827 = vmatprep.subr.mxu0 0.0
      %828 = vmatpush1.msra.mxu0 %v733
      %829 = vmatprep.subr.mxu0 0.0
      %830 = vmatpush1.msra.mxu0 0.0
      %831 = vmatprep.subr.mxu0 0.0
      %832 = vmatpush1.msra.mxu0 0.0
      %833 = vmatprep.subr.mxu0 0.0
      %834 = vmatpush1.msra.mxu0 0.0
      %835 = vmatprep.subr.mxu0 0.0
      %836 = vmatpush1.msra.mxu0 0.0
      %837 = vmatprep.subr.mxu0 0.0
      %838 = vmatpush1.msra.mxu0 0.0
      %839 = vmatprep.subr.mxu0 0.0
      %840 = vmatpush1.msra.mxu0 0.0
      %841 = vmatprep.subr.mxu0 0.0
      %842 = vmatpush1.msra.mxu0 0.0
      %843 = vmatprep.subr.mxu0 0.0
      %844 = vmatpush1.msra.mxu0 0.0
      %845 = vmatprep.subr.mxu0 0.0
      %846 = vmatpush1.msra.mxu0 0.0
      %847 = vmatprep.subr.mxu0 0.0
      %848 = vmatpush1.msra.mxu0 0.0
      %849 = vmatprep.subr.mxu0 0.0
      %850 = vmatpush1.msra.mxu0 0.0
      %851 = vmatprep.subr.mxu0 0.0
      %852 = vmatpush1.msra.mxu0 0.0
      %853 = vmatprep.subr.mxu0 0.0
      %854 = vmatpush1.msra.mxu0 0.0
      %855 = vmatprep.subr.mxu0 0.0
      %856 = vmatpush1.msra.mxu0 0.0
      %857 = vmatprep.subr.mxu0 0.0
      %858 = vmatpush1.msra.mxu0 0.0
      %859 = vmatprep.subr.mxu0 0.0
      %860 = vmatpush1.msra.mxu0 0.0
      %861 = vmatprep.subr.mxu0 0.0
      %862 = vmatpush1.msra.mxu0 0.0
      %863 = vmatprep.subr.mxu0 0.0
      %864 = vmatpush1.msra.mxu0 0.0
      %865 = vmatprep.subr.mxu0 0.0
      %866 = vmatpush1.msra.mxu0 0.0
      %867 = vmatprep.subr.mxu0 0.0
      %868 = vmatpush1.msra.mxu0 0.0
      %869 = vmatprep.subr.mxu0 0.0
      %870 = vmatpush1.msra.mxu0 0.0
      %871 = vmatprep.subr.mxu0 0.0
      %872 = vmatpush1.msra.mxu0 0.0
      %873 = vmatprep.subr.mxu0 0.0
      %874 = vmatpush1.msra.mxu0 0.0
      %875 = vmatprep.subr.mxu0 0.0
      %876 = vmatpush1.msra.mxu0 0.0
      %877 = vmatprep.subr.mxu0 0.0
      %878 = vmatpush1.msra.mxu0 0.0
      %879 = vmatprep.subr.mxu0 0.0
      %880 = vmatpush1.msra.mxu0 0.0
      %881 = vmatprep.subr.mxu0 0.0
      %882 = vmatpush1.msra.mxu0 0.0
      %883 = vmatprep.subr.mxu0 0.0
      %884 = vmatpush1.msra.mxu0 0.0
      %885 = vmatprep.mubr.f32.mxu0 0.0
      %886 = vmatmul.mubr.f32.gmra.mrb[0].mxu0 %v749
      %v887 = vpop.f32.mrb[0].mxu0
      %v888 = vadd.f32 %v745, %v887
      %v889 = vpop.f32.mrb[0].mxu0
      %890 = vdwg.mxu0
      %v891 = vld [vmem:[%s6] sm:$0xff]
      %v892 = vld [vmem:[%s6 + $0x8] sm:$0xff]
      %v893 = vld [vmem:[%s6 + $0x10] sm:$0xff]
      %v894 = vld [vmem:[%s6 + $0x18] sm:$0xff]
      %v895 = vld [vmem:[%s6 + $0x20] sm:$0xff]
      %v896 = vld [vmem:[%s6 + $0x28] sm:$0xff]
      %v897 = vld [vmem:[%s6 + $0x30] sm:$0xff]
      %v898 = vld [vmem:[%s6 + $0x38] sm:$0xff]
      %v899 = vld [vmem:[%s7] sm:$0x1]
      %v900 = vld [vmem:[%s7 + $0x1] sm:$0x1]
      %v903 = vlaneseq
      %v904 = vshrl.u32 %v903, 7
      %v905 = vsub.s32 0, %v904
      %v906 = vrot.slane %v899, %v905
      %v907 = vlaneseq
      %v908 = vshrl.u32 %v907, 7
      %v909 = vsub.s32 0, %v908
      %v910 = vrot.slane %v900, %v909
      %913 = vmatprep.subr.mxu0 0.0
      %914 = vmatpush1.msra.mxu0 %v891
      %915 = vmatprep.subr.mxu0 0.0
      %916 = vmatpush1.msra.mxu0 %v892
      %917 = vmatprep.subr.mxu0 0.0
      %918 = vmatpush1.msra.mxu0 %v893
      %919 = vmatprep.subr.mxu0 0.0
      %920 = vmatpush1.msra.mxu0 %v894
      %921 = vmatprep.subr.mxu0 0.0
      %922 = vmatpush1.msra.mxu0 0.0
      %923 = vmatprep.subr.mxu0 0.0
      %924 = vmatpush1.msra.mxu0 0.0
      %925 = vmatprep.subr.mxu0 0.0
      %926 = vmatpush1.msra.mxu0 0.0
      %927 = vmatprep.subr.mxu0 0.0
      %928 = vmatpush1.msra.mxu0 0.0
      %929 = vmatprep.subr.mxu0 0.0
      %930 = vmatpush1.msra.mxu0 0.0
      %931 = vmatprep.subr.mxu0 0.0
      %932 = vmatpush1.msra.mxu0 0.0
      %933 = vmatprep.subr.mxu0 0.0
      %934 = vmatpush1.msra.mxu0 0.0
      %935 = vmatprep.subr.mxu0 0.0
      %936 = vmatpush1.msra.mxu0 0.0
      %937 = vmatprep.subr.mxu0 0.0
      %938 = vmatpush1.msra.mxu0 0.0
      %939 = vmatprep.subr.mxu0 0.0
      %940 = vmatpush1.msra.mxu0 0.0
      %941 = vmatprep.subr.mxu0 0.0
      %942 = vmatpush1.msra.mxu0 0.0
      %943 = vmatprep.subr.mxu0 0.0
      %944 = vmatpush1.msra.mxu0 0.0
      %945 = vmatprep.subr.mxu0 0.0
      %946 = vmatpush1.msra.mxu0 0.0
      %947 = vmatprep.subr.mxu0 0.0
      %948 = vmatpush1.msra.mxu0 0.0
      %949 = vmatprep.subr.mxu0 0.0
      %950 = vmatpush1.msra.mxu0 0.0
      %951 = vmatprep.subr.mxu0 0.0
      %952 = vmatpush1.msra.mxu0 0.0
      %953 = vmatprep.subr.mxu0 0.0
      %954 = vmatpush1.msra.mxu0 0.0
      %955 = vmatprep.subr.mxu0 0.0
      %956 = vmatpush1.msra.mxu0 0.0
      %957 = vmatprep.subr.mxu0 0.0
      %958 = vmatpush1.msra.mxu0 0.0
      %959 = vmatprep.subr.mxu0 0.0
      %960 = vmatpush1.msra.mxu0 0.0
      %961 = vmatprep.subr.mxu0 0.0
      %962 = vmatpush1.msra.mxu0 0.0
      %963 = vmatprep.subr.mxu0 0.0
      %964 = vmatpush1.msra.mxu0 0.0
      %965 = vmatprep.subr.mxu0 0.0
      %966 = vmatpush1.msra.mxu0 0.0
      %967 = vmatprep.subr.mxu0 0.0
      %968 = vmatpush1.msra.mxu0 0.0
      %969 = vmatprep.subr.mxu0 0.0
      %970 = vmatpush1.msra.mxu0 0.0
      %971 = vmatprep.subr.mxu0 0.0
      %972 = vmatpush1.msra.mxu0 0.0
      %973 = vmatprep.subr.mxu0 0.0
      %974 = vmatpush1.msra.mxu0 0.0
      %975 = vmatprep.subr.mxu0 0.0
      %976 = vmatpush1.msra.mxu0 0.0
      %977 = vmatprep.mubr.f32.mxu0 0.0
      %978 = vmatmul.mubr.f32.gmra.mrb[0].mxu0 %v749
      %v979 = vpop.f32.mrb[0].mxu0
      %v980 = vadd.f32 %v906, %v979
      %v981 = vpop.f32.mrb[0].mxu0
      %982 = vdwg.mxu0
      %983 = vmatprep.subr.mxu0 0.0
      %984 = vmatpush1.msra.mxu0 %v895
      %985 = vmatprep.subr.mxu0 0.0
      %986 = vmatpush1.msra.mxu0 %v896
      %987 = vmatprep.subr.mxu0 0.0
      %988 = vmatpush1.msra.mxu0 %v897
      %989 = vmatprep.subr.mxu0 0.0
      %990 = vmatpush1.msra.mxu0 %v898
      %991 = vmatprep.subr.mxu0 0.0
      %992 = vmatpush1.msra.mxu0 0.0
      %993 = vmatprep.subr.mxu0 0.0
      %994 = vmatpush1.msra.mxu0 0.0
      %995 = vmatprep.subr.mxu0 0.0
      %996 = vmatpush1.msra.mxu0 0.0
      %997 = vmatprep.subr.mxu0 0.0
      %998 = vmatpush1.msra.mxu0 0.0
      %999 = vmatprep.subr.mxu0 0.0
      %1000 = vmatpush1.msra.mxu0 0.0
      %1001 = vmatprep.subr.mxu0 0.0
      %1002 = vmatpush1.msra.mxu0 0.0
      %1003 = vmatprep.subr.mxu0 0.0
      %1004 = vmatpush1.msra.mxu0 0.0
      %1005 = vmatprep.subr.mxu0 0.0
      %1006 = vmatpush1.msra.mxu0 0.0
      %1007 = vmatprep.subr.mxu0 0.0
      %1008 = vmatpush1.msra.mxu0 0.0
      %1009 = vmatprep.subr.mxu0 0.0
      %1010 = vmatpush1.msra.mxu0 0.0
      %1011 = vmatprep.subr.mxu0 0.0
      %1012 = vmatpush1.msra.mxu0 0.0
      %1013 = vmatprep.subr.mxu0 0.0
      %1014 = vmatpush1.msra.mxu0 0.0
      %1015 = vmatprep.subr.mxu0 0.0
      %1016 = vmatpush1.msra.mxu0 0.0
      %1017 = vmatprep.subr.mxu0 0.0
      %1018 = vmatpush1.msra.mxu0 0.0
      %1019 = vmatprep.subr.mxu0 0.0
      %1020 = vmatpush1.msra.mxu0 0.0
      %1021 = vmatprep.subr.mxu0 0.0
      %1022 = vmatpush1.msra.mxu0 0.0
      %1023 = vmatprep.subr.mxu0 0.0
      %1024 = vmatpush1.msra.mxu0 0.0
      %1025 = vmatprep.subr.mxu0 0.0
      %1026 = vmatpush1.msra.mxu0 0.0
      %1027 = vmatprep.subr.mxu0 0.0
      %1028 = vmatpush1.msra.mxu0 0.0
      %1029 = vmatprep.subr.mxu0 0.0
      %1030 = vmatpush1.msra.mxu0 0.0
      %1031 = vmatprep.subr.mxu0 0.0
      %1032 = vmatpush1.msra.mxu0 0.0
      %1033 = vmatprep.subr.mxu0 0.0
      %1034 = vmatpush1.msra.mxu0 0.0
      %1035 = vmatprep.subr.mxu0 0.0
      %1036 = vmatpush1.msra.mxu0 0.0
      %1037 = vmatprep.subr.mxu0 0.0
      %1038 = vmatpush1.msra.mxu0 0.0
      %1039 = vmatprep.subr.mxu0 0.0
      %1040 = vmatpush1.msra.mxu0 0.0
      %1041 = vmatprep.subr.mxu0 0.0
      %1042 = vmatpush1.msra.mxu0 0.0
      %1043 = vmatprep.subr.mxu0 0.0
      %1044 = vmatpush1.msra.mxu0 0.0
      %1045 = vmatprep.subr.mxu0 0.0
      %1046 = vmatpush1.msra.mxu0 0.0
      %1047 = vmatprep.mubr.f32.mxu0 0.0
      %1048 = vmatmul.mubr.f32.gmra.mrb[0].mxu0 %v749
      %v1049 = vpop.f32.mrb[0].mxu0
      %v1050 = vadd.f32 %v910, %v1049
      %v1051 = vpop.f32.mrb[0].mxu0
      %1052 = vdwg.mxu0
      %v1053 = vld [vmem:[%s8] sm:$0xff]
      %v1054 = vld [vmem:[%s8 + $0x8] sm:$0xff]
      %v1055 = vld [vmem:[%s8 + $0x10] sm:$0xff]
      %v1056 = vld [vmem:[%s8 + $0x18] sm:$0xff]
      %v1057 = vld [vmem:[%s8 + $0x20] sm:$0xff]
      %v1058 = vld [vmem:[%s8 + $0x28] sm:$0xff]
      %v1059 = vld [vmem:[%s8 + $0x30] sm:$0xff]
      %v1060 = vld [vmem:[%s8 + $0x38] sm:$0xff]
      %v1061 = vld [vmem:[%s9] sm:$0x1]
      %v1062 = vld [vmem:[%s9 + $0x1] sm:$0x1]
      %v1065 = vlaneseq
      %v1066 = vshrl.u32 %v1065, 7
      %v1067 = vsub.s32 0, %v1066
      %v1068 = vrot.slane %v1061, %v1067
      %v1069 = vlaneseq
      %v1070 = vshrl.u32 %v1069, 7
      %v1071 = vsub.s32 0, %v1070
      %v1072 = vrot.slane %v1062, %v1071
      %1075 = vmatprep.subr.mxu0 0.0
      %1076 = vmatpush1.msra.mxu0 %v1053
      %1077 = vmatprep.subr.mxu0 0.0
      %1078 = vmatpush1.msra.mxu0 %v1054
      %1079 = vmatprep.subr.mxu0 0.0
      %1080 = vmatpush1.msra.mxu0 %v1055
      %1081 = vmatprep.subr.mxu0 0.0
      %1082 = vmatpush1.msra.mxu0 %v1056
      %1083 = vmatprep.subr.mxu0 0.0
      %1084 = vmatpush1.msra.mxu0 0.0
      %1085 = vmatprep.subr.mxu0 0.0
      %1086 = vmatpush1.msra.mxu0 0.0
      %1087 = vmatprep.subr.mxu0 0.0
      %1088 = vmatpush1.msra.mxu0 0.0
      %1089 = vmatprep.subr.mxu0 0.0
      %1090 = vmatpush1.msra.mxu0 0.0
      %1091 = vmatprep.subr.mxu0 0.0
      %1092 = vmatpush1.msra.mxu0 0.0
      %1093 = vmatprep.subr.mxu0 0.0
      %1094 = vmatpush1.msra.mxu0 0.0
      %1095 = vmatprep.subr.mxu0 0.0
      %1096 = vmatpush1.msra.mxu0 0.0
      %1097 = vmatprep.subr.mxu0 0.0
      %1098 = vmatpush1.msra.mxu0 0.0
      %1099 = vmatprep.subr.mxu0 0.0
      %1100 = vmatpush1.msra.mxu0 0.0
      %1101 = vmatprep.subr.mxu0 0.0
      %1102 = vmatpush1.msra.mxu0 0.0
      %1103 = vmatprep.subr.mxu0 0.0
      %1104 = vmatpush1.msra.mxu0 0.0
      %1105 = vmatprep.subr.mxu0 0.0
      %1106 = vmatpush1.msra.mxu0 0.0
      %1107 = vmatprep.subr.mxu0 0.0
      %1108 = vmatpush1.msra.mxu0 0.0
      %1109 = vmatprep.subr.mxu0 0.0
      %1110 = vmatpush1.msra.mxu0 0.0
      %1111 = vmatprep.subr.mxu0 0.0
      %1112 = vmatpush1.msra.mxu0 0.0
      %1113 = vmatprep.subr.mxu0 0.0
      %1114 = vmatpush1.msra.mxu0 0.0
      %1115 = vmatprep.subr.mxu0 0.0
      %1116 = vmatpush1.msra.mxu0 0.0
      %1117 = vmatprep.subr.mxu0 0.0
      %1118 = vmatpush1.msra.mxu0 0.0
      %1119 = vmatprep.subr.mxu0 0.0
      %1120 = vmatpush1.msra.mxu0 0.0
      %1121 = vmatprep.subr.mxu0 0.0
      %1122 = vmatpush1.msra.mxu0 0.0
      %1123 = vmatprep.subr.mxu0 0.0
      %1124 = vmatpush1.msra.mxu0 0.0
      %1125 = vmatprep.subr.mxu0 0.0
      %1126 = vmatpush1.msra.mxu0 0.0
      %1127 = vmatprep.subr.mxu0 0.0
      %1128 = vmatpush1.msra.mxu0 0.0
      %1129 = vmatprep.subr.mxu0 0.0
      %1130 = vmatpush1.msra.mxu0 0.0
      %1131 = vmatprep.subr.mxu0 0.0
      %1132 = vmatpush1.msra.mxu0 0.0
      %1133 = vmatprep.subr.mxu0 0.0
      %1134 = vmatpush1.msra.mxu0 0.0
      %1135 = vmatprep.subr.mxu0 0.0
      %1136 = vmatpush1.msra.mxu0 0.0
      %1137 = vmatprep.subr.mxu0 0.0
      %1138 = vmatpush1.msra.mxu0 0.0
      %1139 = vmatprep.mubr.f32.mxu0 0.0
      %1140 = vmatmul.mubr.f32.gmra.mrb[0].mxu0 %v749
      %v1141 = vpop.f32.mrb[0].mxu0
      %v1142 = vadd.f32 %v1068, %v1141
      %v1143 = vpop.f32.mrb[0].mxu0
      %1144 = vdwg.mxu0
      %1145 = vmatprep.subr.mxu0 0.0
      %1146 = vmatpush1.msra.mxu0 %v1057
      %1147 = vmatprep.subr.mxu0 0.0
      %1148 = vmatpush1.msra.mxu0 %v1058
      %1149 = vmatprep.subr.mxu0 0.0
      %1150 = vmatpush1.msra.mxu0 %v1059
      %1151 = vmatprep.subr.mxu0 0.0
      %1152 = vmatpush1.msra.mxu0 %v1060
      %1153 = vmatprep.subr.mxu0 0.0
      %1154 = vmatpush1.msra.mxu0 0.0
      %1155 = vmatprep.subr.mxu0 0.0
      %1156 = vmatpush1.msra.mxu0 0.0
      %1157 = vmatprep.subr.mxu0 0.0
      %1158 = vmatpush1.msra.mxu0 0.0
      %1159 = vmatprep.subr.mxu0 0.0
      %1160 = vmatpush1.msra.mxu0 0.0
      %1161 = vmatprep.subr.mxu0 0.0
      %1162 = vmatpush1.msra.mxu0 0.0
      %1163 = vmatprep.subr.mxu0 0.0
      %1164 = vmatpush1.msra.mxu0 0.0
      %1165 = vmatprep.subr.mxu0 0.0
      %1166 = vmatpush1.msra.mxu0 0.0
      %1167 = vmatprep.subr.mxu0 0.0
      %1168 = vmatpush1.msra.mxu0 0.0
      %1169 = vmatprep.subr.mxu0 0.0
      %1170 = vmatpush1.msra.mxu0 0.0
      %1171 = vmatprep.subr.mxu0 0.0
      %1172 = vmatpush1.msra.mxu0 0.0
      %1173 = vmatprep.subr.mxu0 0.0
      %1174 = vmatpush1.msra.mxu0 0.0
      %1175 = vmatprep.subr.mxu0 0.0
      %1176 = vmatpush1.msra.mxu0 0.0
      %1177 = vmatprep.subr.mxu0 0.0
      %1178 = vmatpush1.msra.mxu0 0.0
      %1179 = vmatprep.subr.mxu0 0.0
      %1180 = vmatpush1.msra.mxu0 0.0
      %1181 = vmatprep.subr.mxu0 0.0
      %1182 = vmatpush1.msra.mxu0 0.0
      %1183 = vmatprep.subr.mxu0 0.0
      %1184 = vmatpush1.msra.mxu0 0.0
      %1185 = vmatprep.subr.mxu0 0.0
      %1186 = vmatpush1.msra.mxu0 0.0
      %1187 = vmatprep.subr.mxu0 0.0
      %1188 = vmatpush1.msra.mxu0 0.0
      %1189 = vmatprep.subr.mxu0 0.0
      %1190 = vmatpush1.msra.mxu0 0.0
      %1191 = vmatprep.subr.mxu0 0.0
      %1192 = vmatpush1.msra.mxu0 0.0
      %1193 = vmatprep.subr.mxu0 0.0
      %1194 = vmatpush1.msra.mxu0 0.0
      %1195 = vmatprep.subr.mxu0 0.0
      %1196 = vmatpush1.msra.mxu0 0.0
      %1197 = vmatprep.subr.mxu0 0.0
      %1198 = vmatpush1.msra.mxu0 0.0
      %1199 = vmatprep.subr.mxu0 0.0
      %1200 = vmatpush1.msra.mxu0 0.0
      %1201 = vmatprep.subr.mxu0 0.0
      %1202 = vmatpush1.msra.mxu0 0.0
      %1203 = vmatprep.subr.mxu0 0.0
      %1204 = vmatpush1.msra.mxu0 0.0
      %1205 = vmatprep.subr.mxu0 0.0
      %1206 = vmatpush1.msra.mxu0 0.0
      %1207 = vmatprep.subr.mxu0 0.0
      %1208 = vmatpush1.msra.mxu0 0.0
      %1209 = vmatprep.mubr.f32.mxu0 0.0
      %1210 = vmatmul.mubr.f32.gmra.mrb[0].mxu0 %v749
      %v1211 = vpop.f32.mrb[0].mxu0
      %v1212 = vadd.f32 %v1072, %v1211
      %v1213 = vpop.f32.mrb[0].mxu0
      %1214 = vdwg.mxu0
      %vm1215 = vcmask 130048
      %v1217 = vsel %vm1215, %v818, 0
      %v1220 = vsel %vm1215, %v980, 0
      %1222 = vmatprep.subr.mxu0 0.0
      %1223 = vmatpush1.xpose.msra.mxu0 %v1220
      %1224 = vmatprep.subr.mxu0 0.0
      %1225 = vmatpush1.xpose.msra.mxu0 0.0
      %1226 = vmatprep.subr.mxu0 0.0
      %1227 = vmatpush1.xpose.msra.mxu0 0.0
      %1228 = vmatprep.subr.mxu0 0.0
      %1229 = vmatpush1.xpose.msra.mxu0 0.0
      %1230 = vmatprep.subr.mxu0 0.0
      %1231 = vmatpush1.xpose.msra.mxu0 0.0
      %1232 = vmatprep.subr.mxu0 0.0
      %1233 = vmatpush1.xpose.msra.mxu0 0.0
      %1234 = vmatprep.subr.mxu0 0.0
      %1235 = vmatpush1.xpose.msra.mxu0 0.0
      %1236 = vmatprep.subr.mxu0 0.0
      %1237 = vmatpush1.xpose.msra.mxu0 0.0
      %1238 = vmatprep.subr.mxu0 0.0
      %1239 = vmatpush1.xpose.msra.mxu0 0.0
      %1240 = vmatprep.subr.mxu0 0.0
      %1241 = vmatpush1.xpose.msra.mxu0 0.0
      %1242 = vmatprep.subr.mxu0 0.0
      %1243 = vmatpush1.xpose.msra.mxu0 0.0
      %1244 = vmatprep.subr.mxu0 0.0
      %1245 = vmatpush1.xpose.msra.mxu0 0.0
      %1246 = vmatprep.subr.mxu0 0.0
      %1247 = vmatpush1.xpose.msra.mxu0 0.0
      %1248 = vmatprep.subr.mxu0 0.0
      %1249 = vmatpush1.xpose.msra.mxu0 0.0
      %1250 = vmatprep.subr.mxu0 0.0
      %1251 = vmatpush1.xpose.msra.mxu0 0.0
      %1252 = vmatprep.subr.mxu0 0.0
      %1253 = vmatpush1.xpose.msra.mxu0 0.0
      %1254 = vmatprep.subr.mxu0 0.0
      %1255 = vmatpush1.xpose.msra.mxu0 0.0
      %1256 = vmatprep.subr.mxu0 0.0
      %1257 = vmatpush1.xpose.msra.mxu0 0.0
      %1258 = vmatprep.subr.mxu0 0.0
      %1259 = vmatpush1.xpose.msra.mxu0 0.0
      %1260 = vmatprep.subr.mxu0 0.0
      %1261 = vmatpush1.xpose.msra.mxu0 0.0
      %1262 = vmatprep.subr.mxu0 0.0
      %1263 = vmatpush1.xpose.msra.mxu0 0.0
      %1264 = vmatprep.subr.mxu0 0.0
      %1265 = vmatpush1.xpose.msra.mxu0 0.0
      %1266 = vmatprep.subr.mxu0 0.0
      %1267 = vmatpush1.xpose.msra.mxu0 0.0
      %1268 = vmatprep.subr.mxu0 0.0
      %1269 = vmatpush1.xpose.msra.mxu0 0.0
      %1270 = vmatprep.subr.mxu0 0.0
      %1271 = vmatpush1.xpose.msra.mxu0 0.0
      %1272 = vmatprep.subr.mxu0 0.0
      %1273 = vmatpush1.xpose.msra.mxu0 0.0
      %1274 = vmatprep.subr.mxu0 0.0
      %1275 = vmatpush1.xpose.msra.mxu0 0.0
      %1276 = vmatprep.subr.mxu0 0.0
      %1277 = vmatpush1.xpose.msra.mxu0 0.0
      %1278 = vmatprep.subr.mxu0 0.0
      %1279 = vmatpush1.xpose.msra.mxu0 0.0
      %1280 = vmatprep.subr.mxu0 0.0
      %1281 = vmatpush1.xpose.msra.mxu0 0.0
      %1282 = vmatprep.subr.mxu0 0.0
      %1283 = vmatpush1.xpose.msra.mxu0 0.0
      %1284 = vmatprep.subr.mxu0 0.0
      %1285 = vmatpush1.xpose.msra.mxu0 0.0
      %1286 = vmatprep.mubr.f32.mxu0 0.0
      %1287 = vmatmul.mubr.f32.gmra.mrb[0].mxu0 %v1217
      %v1288 = vpop.f32.mrb[0].mxu0
      %v1289 = vadd.f32 0.0, %v1288
      %v1290 = vpop.f32.mrb[0].mxu0
      %1291 = vdwg.mxu0
      %v1293 = vsel %vm1215, %v888, 0
      %v1296 = vsel %vm1215, %v1050, 0
      %1298 = vmatprep.subr.mxu0 0.0
      %1299 = vmatpush1.xpose.msra.mxu0 %v1296
      %1300 = vmatprep.subr.mxu0 0.0
      %1301 = vmatpush1.xpose.msra.mxu0 0.0
      %1302 = vmatprep.subr.mxu0 0.0
      %1303 = vmatpush1.xpose.msra.mxu0 0.0
      %1304 = vmatprep.subr.mxu0 0.0
      %1305 = vmatpush1.xpose.msra.mxu0 0.0
      %1306 = vmatprep.subr.mxu0 0.0
      %1307 = vmatpush1.xpose.msra.mxu0 0.0
      %1308 = vmatprep.subr.mxu0 0.0
      %1309 = vmatpush1.xpose.msra.mxu0 0.0
      %1310 = vmatprep.subr.mxu0 0.0
      %1311 = vmatpush1.xpose.msra.mxu0 0.0
      %1312 = vmatprep.subr.mxu0 0.0
      %1313 = vmatpush1.xpose.msra.mxu0 0.0
      %1314 = vmatprep.subr.mxu0 0.0
      %1315 = vmatpush1.xpose.msra.mxu0 0.0
      %1316 = vmatprep.subr.mxu0 0.0
      %1317 = vmatpush1.xpose.msra.mxu0 0.0
      %1318 = vmatprep.subr.mxu0 0.0
      %1319 = vmatpush1.xpose.msra.mxu0 0.0
      %1320 = vmatprep.subr.mxu0 0.0
      %1321 = vmatpush1.xpose.msra.mxu0 0.0
      %1322 = vmatprep.subr.mxu0 0.0
      %1323 = vmatpush1.xpose.msra.mxu0 0.0
      %1324 = vmatprep.subr.mxu0 0.0
      %1325 = vmatpush1.xpose.msra.mxu0 0.0
      %1326 = vmatprep.subr.mxu0 0.0
      %1327 = vmatpush1.xpose.msra.mxu0 0.0
      %1328 = vmatprep.subr.mxu0 0.0
      %1329 = vmatpush1.xpose.msra.mxu0 0.0
      %1330 = vmatprep.subr.mxu0 0.0
      %1331 = vmatpush1.xpose.msra.mxu0 0.0
      %1332 = vmatprep.subr.mxu0 0.0
      %1333 = vmatpush1.xpose.msra.mxu0 0.0
      %1334 = vmatprep.subr.mxu0 0.0
      %1335 = vmatpush1.xpose.msra.mxu0 0.0
      %1336 = vmatprep.subr.mxu0 0.0
      %1337 = vmatpush1.xpose.msra.mxu0 0.0
      %1338 = vmatprep.subr.mxu0 0.0
      %1339 = vmatpush1.xpose.msra.mxu0 0.0
      %1340 = vmatprep.subr.mxu0 0.0
      %1341 = vmatpush1.xpose.msra.mxu0 0.0
      %1342 = vmatprep.subr.mxu0 0.0
      %1343 = vmatpush1.xpose.msra.mxu0 0.0
      %1344 = vmatprep.subr.mxu0 0.0
      %1345 = vmatpush1.xpose.msra.mxu0 0.0
      %1346 = vmatprep.subr.mxu0 0.0
      %1347 = vmatpush1.xpose.msra.mxu0 0.0
      %1348 = vmatprep.subr.mxu0 0.0
      %1349 = vmatpush1.xpose.msra.mxu0 0.0
      %1350 = vmatprep.subr.mxu0 0.0
      %1351 = vmatpush1.xpose.msra.mxu0 0.0
      %1352 = vmatprep.subr.mxu0 0.0
      %1353 = vmatpush1.xpose.msra.mxu0 0.0
      %1354 = vmatprep.subr.mxu0 0.0
      %1355 = vmatpush1.xpose.msra.mxu0 0.0
      %1356 = vmatprep.subr.mxu0 0.0
      %1357 = vmatpush1.xpose.msra.mxu0 0.0
      %1358 = vmatprep.subr.mxu0 0.0
      %1359 = vmatpush1.xpose.msra.mxu0 0.0
      %1360 = vmatprep.subr.mxu0 0.0
      %1361 = vmatpush1.xpose.msra.mxu0 0.0
      %1362 = vmatprep.mubr.f32.mxu0 0.0
      %1363 = vmatmul.mubr.f32.gmra.mrb[0].mxu0 %v1293
      %v1364 = vpop.f32.mrb[0].mxu0
      %v1365 = vadd.f32 0.0, %v1364
      %v1366 = vpop.f32.mrb[0].mxu0
      %1367 = vdwg.mxu0
      %v1368 = vmul.f32 %v1289, 0.25
      %v1369 = vmul.f32 %v1365, 0.25
      %v1371 = vlaneseq
      %v1372 = vshrl.u32 %v1371, 7
      %v1373 = vsub.s32 0, %v1372
      %v1374 = vrot.slane %v725, %v1373
      %v1376 = vadd.f32 %v1368, %v1374
      %v1377 = vadd.f32 %v1369, %v1374
      %vm1378 = vcmask 64512
      %v1379 = vsel %vm1378, %v1376, -inf
      %1380 = vmax.xlane.f32.xlu0 %v1379
      %v1381 = vpop.xlane.xlu0 %1380
      %v1382 = vsel %vm1378, %v1377, -inf
      %1383 = vmax.xlane.f32.xlu0 %v1382
      %v1384 = vpop.xlane.xlu0 %1383
      %v1385 = vsub.f32 %v1376, %v1381
      %v1386 = vsub.f32 %v1377, %v1384
      %v1387 = vmul.f32 %v1385, 1.442695
      %v1388 = vpow.pop %v1387
      %v1389 = vmul.f32 %v1386, 1.442695
      %v1390 = vpow.pop %v1389
      %v1391 = vsel %vm1378, %v1388, 0.0
      %1392 = vadd.xlane.f32.xlu0 %v1391
      %v1393 = vpop.xlane.xlu0 %1392
      %v1394 = vsel %vm1378, %v1390, 0.0
      %1395 = vadd.xlane.f32.xlu0 %v1394
      %v1396 = vpop.xlane.xlu0 %1395
      %v1397 = vrcp.pop %v1393
      %v1398 = vrcp.pop %v1396
      %v1399 = vmul.f32 %v1388, %v1397
      %v1400 = vmul.f32 %v1390, %v1398
      %v1402 = vsel %vm1378, %v1399, 0
      %1404 = vmatprep.subr.mxu0 0.0
      %1405 = vmatpush1.msra.mxu0 %v1142
      %1406 = vmatprep.subr.mxu0 0.0
      %1407 = vmatpush1.msra.mxu0 0.0
      %1408 = vmatprep.subr.mxu0 0.0
      %1409 = vmatpush1.msra.mxu0 0.0
      %1410 = vmatprep.subr.mxu0 0.0
      %1411 = vmatpush1.msra.mxu0 0.0
      %1412 = vmatprep.subr.mxu0 0.0
      %1413 = vmatpush1.msra.mxu0 0.0
      %1414 = vmatprep.subr.mxu0 0.0
      %1415 = vmatpush1.msra.mxu0 0.0
      %1416 = vmatprep.subr.mxu0 0.0
      %1417 = vmatpush1.msra.mxu0 0.0
      %1418 = vmatprep.subr.mxu0 0.0
      %1419 = vmatpush1.msra.mxu0 0.0
      %1420 = vmatprep.subr.mxu0 0.0
      %1421 = vmatpush1.msra.mxu0 0.0
      %1422 = vmatprep.subr.mxu0 0.0
      %1423 = vmatpush1.msra.mxu0 0.0
      %1424 = vmatprep.subr.mxu0 0.0
      %1425 = vmatpush1.msra.mxu0 0.0
      %1426 = vmatprep.subr.mxu0 0.0
      %1427 = vmatpush1.msra.mxu0 0.0
      %1428 = vmatprep.subr.mxu0 0.0
      %1429 = vmatpush1.msra.mxu0 0.0
      %1430 = vmatprep.subr.mxu0 0.0
      %1431 = vmatpush1.msra.mxu0 0.0
      %1432 = vmatprep.subr.mxu0 0.0
      %1433 = vmatpush1.msra.mxu0 0.0
      %1434 = vmatprep.subr.mxu0 0.0
      %1435 = vmatpush1.msra.mxu0 0.0
      %1436 = vmatprep.subr.mxu0 0.0
      %1437 = vmatpush1.msra.mxu0 0.0
      %1438 = vmatprep.subr.mxu0 0.0
      %1439 = vmatpush1.msra.mxu0 0.0
      %1440 = vmatprep.subr.mxu0 0.0
      %1441 = vmatpush1.msra.mxu0 0.0
      %1442 = vmatprep.subr.mxu0 0.0
      %1443 = vmatpush1.msra.mxu0 0.0
      %1444 = vmatprep.subr.mxu0 0.0
      %1445 = vmatpush1.msra.mxu0 0.0
      %1446 = vmatprep.subr.mxu0 0.0
      %1447 = vmatpush1.msra.mxu0 0.0
      %1448 = vmatprep.subr.mxu0 0.0
      %1449 = vmatpush1.msra.mxu0 0.0
      %1450 = vmatprep.subr.mxu0 0.0
      %1451 = vmatpush1.msra.mxu0 0.0
      %1452 = vmatprep.subr.mxu0 0.0
      %1453 = vmatpush1.msra.mxu0 0.0
      %1454 = vmatprep.subr.mxu0 0.0
      %1455 = vmatpush1.msra.mxu0 0.0
      %1456 = vmatprep.subr.mxu0 0.0
      %1457 = vmatpush1.msra.mxu0 0.0
      %1458 = vmatprep.subr.mxu0 0.0
      %1459 = vmatpush1.msra.mxu0 0.0
      %1460 = vmatprep.subr.mxu0 0.0
      %1461 = vmatpush1.msra.mxu0 0.0
      %1462 = vmatprep.subr.mxu0 0.0
      %1463 = vmatpush1.msra.mxu0 0.0
      %1464 = vmatprep.subr.mxu0 0.0
      %1465 = vmatpush1.msra.mxu0 0.0
      %1466 = vmatprep.subr.mxu0 0.0
      %1467 = vmatpush1.msra.mxu0 0.0
      %1468 = vmatprep.mubr.f32.mxu0 0.0
      %1469 = vmatmul.mubr.f32.gmra.mrb[0].mxu0 %v1402
      %v1470 = vpop.f32.mrb[0].mxu0
      %v1471 = vadd.f32 0.0, %v1470
      %v1472 = vpop.f32.mrb[0].mxu0
      %1473 = vdwg.mxu0
      %v1475 = vsel %vm1378, %v1400, 0
      %1477 = vmatprep.subr.mxu0 0.0
      %1478 = vmatpush1.msra.mxu0 %v1212
      %1479 = vmatprep.subr.mxu0 0.0
      %1480 = vmatpush1.msra.mxu0 0.0
      %1481 = vmatprep.subr.mxu0 0.0
      %1482 = vmatpush1.msra.mxu0 0.0
      %1483 = vmatprep.subr.mxu0 0.0
      %1484 = vmatpush1.msra.mxu0 0.0
      %1485 = vmatprep.subr.mxu0 0.0
      %1486 = vmatpush1.msra.mxu0 0.0
      %1487 = vmatprep.subr.mxu0 0.0
      %1488 = vmatpush1.msra.mxu0 0.0
      %1489 = vmatprep.subr.mxu0 0.0
      %1490 = vmatpush1.msra.mxu0 0.0
      %1491 = vmatprep.subr.mxu0 0.0
      %1492 = vmatpush1.msra.mxu0 0.0
      %1493 = vmatprep.subr.mxu0 0.0
      %1494 = vmatpush1.msra.mxu0 0.0
      %1495 = vmatprep.subr.mxu0 0.0
      %1496 = vmatpush1.msra.mxu0 0.0
      %1497 = vmatprep.subr.mxu0 0.0
      %1498 = vmatpush1.msra.mxu0 0.0
      %1499 = vmatprep.subr.mxu0 0.0
      %1500 = vmatpush1.msra.mxu0 0.0
      %1501 = vmatprep.subr.mxu0 0.0
      %1502 = vmatpush1.msra.mxu0 0.0
      %1503 = vmatprep.subr.mxu0 0.0
      %1504 = vmatpush1.msra.mxu0 0.0
      %1505 = vmatprep.subr.mxu0 0.0
      %1506 = vmatpush1.msra.mxu0 0.0
      %1507 = vmatprep.subr.mxu0 0.0
      %1508 = vmatpush1.msra.mxu0 0.0
      %1509 = vmatprep.subr.mxu0 0.0
      %1510 = vmatpush1.msra.mxu0 0.0
      %1511 = vmatprep.subr.mxu0 0.0
      %1512 = vmatpush1.msra.mxu0 0.0
      %1513 = vmatprep.subr.mxu0 0.0
      %1514 = vmatpush1.msra.mxu0 0.0
      %1515 = vmatprep.subr.mxu0 0.0
      %1516 = vmatpush1.msra.mxu0 0.0
      %1517 = vmatprep.subr.mxu0 0.0
      %1518 = vmatpush1.msra.mxu0 0.0
      %1519 = vmatprep.subr.mxu0 0.0
      %1520 = vmatpush1.msra.mxu0 0.0
      %1521 = vmatprep.subr.mxu0 0.0
      %1522 = vmatpush1.msra.mxu0 0.0
      %1523 = vmatprep.subr.mxu0 0.0
      %1524 = vmatpush1.msra.mxu0 0.0
      %1525 = vmatprep.subr.mxu0 0.0
      %1526 = vmatpush1.msra.mxu0 0.0
      %1527 = vmatprep.subr.mxu0 0.0
      %1528 = vmatpush1.msra.mxu0 0.0
      %1529 = vmatprep.subr.mxu0 0.0
      %1530 = vmatpush1.msra.mxu0 0.0
      %1531 = vmatprep.subr.mxu0 0.0
      %1532 = vmatpush1.msra.mxu0 0.0
      %1533 = vmatprep.subr.mxu0 0.0
      %1534 = vmatpush1.msra.mxu0 0.0
      %1535 = vmatprep.subr.mxu0 0.0
      %1536 = vmatpush1.msra.mxu0 0.0
      %1537 = vmatprep.subr.mxu0 0.0
      %1538 = vmatpush1.msra.mxu0 0.0
      %1539 = vmatprep.subr.mxu0 0.0
      %1540 = vmatpush1.msra.mxu0 0.0
      %1541 = vmatprep.mubr.f32.mxu0 0.0
      %1542 = vmatmul.mubr.f32.gmra.mrb[0].mxu0 %v1475
      %v1543 = vpop.f32.mrb[0].mxu0
      %v1544 = vadd.f32 0.0, %v1543
      %v1545 = vpop.f32.mrb[0].mxu0
      %1546 = vdwg.mxu0
      %v1547 = vld [vmem:[%s10] sm:$0xff]
      %v1548 = vld [vmem:[%s10 + $0x8] sm:$0xff]
      %v1549 = vld [vmem:[%s10 + $0x10] sm:$0xff]
      %v1550 = vld [vmem:[%s10 + $0x18] sm:$0xff]
      %v1552 = vsel %vm1215, %v1471, 0
      %1554 = vmatprep.subr.mxu0 0.0
      %1555 = vmatpush1.msra.mxu0 %v1547
      %1556 = vmatprep.subr.mxu0 0.0
      %1557 = vmatpush1.msra.mxu0 %v1548
      %1558 = vmatprep.subr.mxu0 0.0
      %1559 = vmatpush1.msra.mxu0 0.0
      %1560 = vmatprep.subr.mxu0 0.0
      %1561 = vmatpush1.msra.mxu0 0.0
      %1562 = vmatprep.subr.mxu0 0.0
      %1563 = vmatpush1.msra.mxu0 0.0
      %1564 = vmatprep.subr.mxu0 0.0
      %1565 = vmatpush1.msra.mxu0 0.0
      %1566 = vmatprep.subr.mxu0 0.0
      %1567 = vmatpush1.msra.mxu0 0.0
      %1568 = vmatprep.subr.mxu0 0.0
      %1569 = vmatpush1.msra.mxu0 0.0
      %1570 = vmatprep.subr.mxu0 0.0
      %1571 = vmatpush1.msra.mxu0 0.0
      %1572 = vmatprep.subr.mxu0 0.0
      %1573 = vmatpush1.msra.mxu0 0.0
      %1574 = vmatprep.subr.mxu0 0.0
      %1575 = vmatpush1.msra.mxu0 0.0
      %1576 = vmatprep.subr.mxu0 0.0
      %1577 = vmatpush1.msra.mxu0 0.0
      %1578 = vmatprep.subr.mxu0 0.0
      %1579 = vmatpush1.msra.mxu0 0.0
      %1580 = vmatprep.subr.mxu0 0.0
      %1581 = vmatpush1.msra.mxu0 0.0
      %1582 = vmatprep.subr.mxu0 0.0
      %1583 = vmatpush1.msra.mxu0 0.0
      %1584 = vmatprep.subr.mxu0 0.0
      %1585 = vmatpush1.msra.mxu0 0.0
      %1586 = vmatprep.subr.mxu0 0.0
      %1587 = vmatpush1.msra.mxu0 0.0
      %1588 = vmatprep.subr.mxu0 0.0
      %1589 = vmatpush1.msra.mxu0 0.0
      %1590 = vmatprep.subr.mxu0 0.0
      %1591 = vmatpush1.msra.mxu0 0.0
      %1592 = vmatprep.subr.mxu0 0.0
      %1593 = vmatpush1.msra.mxu0 0.0
      %1594 = vmatprep.subr.mxu0 0.0
      %1595 = vmatpush1.msra.mxu0 0.0
      %1596 = vmatprep.subr.mxu0 0.0
      %1597 = vmatpush1.msra.mxu0 0.0
      %1598 = vmatprep.subr.mxu0 0.0
      %1599 = vmatpush1.msra.mxu0 0.0
      %1600 = vmatprep.subr.mxu0 0.0
      %1601 = vmatpush1.msra.mxu0 0.0
      %1602 = vmatprep.subr.mxu0 0.0
      %1603 = vmatpush1.msra.mxu0 0.0
      %1604 = vmatprep.subr.mxu0 0.0
      %1605 = vmatpush1.msra.mxu0 0.0
      %1606 = vmatprep.subr.mxu0 0.0
      %1607 = vmatpush1.msra.mxu0 0.0
      %1608 = vmatprep.subr.mxu0 0.0
      %1609 = vmatpush1.msra.mxu0 0.0
      %1610 = vmatprep.subr.mxu0 0.0
      %1611 = vmatpush1.msra.mxu0 0.0
      %1612 = vmatprep.subr.mxu0 0.0
      %1613 = vmatpush1.msra.mxu0 0.0
      %1614 = vmatprep.subr.mxu0 0.0
      %1615 = vmatpush1.msra.mxu0 0.0
      %1616 = vmatprep.subr.mxu0 0.0
      %1617 = vmatpush1.msra.mxu0 0.0
      %1618 = vmatprep.mubr.f32.mxu0 0.0
      %1619 = vmatmul.mubr.f32.gmra.mrb[0].mxu0 %v1552
      %v1620 = vpop.f32.mrb[0].mxu0
      %v1621 = vadd.f32 0.0, %v1620
      %v1622 = vpop.f32.mrb[0].mxu0
      %1623 = vdwg.mxu0
      %v1625 = vsel %vm1215, %v1544, 0
      %1627 = vmatprep.subr.mxu0 0.0
      %1628 = vmatpush1.msra.mxu0 %v1549
      %1629 = vmatprep.subr.mxu0 0.0
      %1630 = vmatpush1.msra.mxu0 %v1550
      %1631 = vmatprep.subr.mxu0 0.0
      %1632 = vmatpush1.msra.mxu0 0.0
      %1633 = vmatprep.subr.mxu0 0.0
      %1634 = vmatpush1.msra.mxu0 0.0
      %1635 = vmatprep.subr.mxu0 0.0
      %1636 = vmatpush1.msra.mxu0 0.0
      %1637 = vmatprep.subr.mxu0 0.0
      %1638 = vmatpush1.msra.mxu0 0.0
      %1639 = vmatprep.subr.mxu0 0.0
      %1640 = vmatpush1.msra.mxu0 0.0
      %1641 = vmatprep.subr.mxu0 0.0
      %1642 = vmatpush1.msra.mxu0 0.0
      %1643 = vmatprep.subr.mxu0 0.0
      %1644 = vmatpush1.msra.mxu0 0.0
      %1645 = vmatprep.subr.mxu0 0.0
      %1646 = vmatpush1.msra.mxu0 0.0
      %1647 = vmatprep.subr.mxu0 0.0
      %1648 = vmatpush1.msra.mxu0 0.0
      %1649 = vmatprep.subr.mxu0 0.0
      %1650 = vmatpush1.msra.mxu0 0.0
      %1651 = vmatprep.subr.mxu0 0.0
      %1652 = vmatpush1.msra.mxu0 0.0
      %1653 = vmatprep.subr.mxu0 0.0
      %1654 = vmatpush1.msra.mxu0 0.0
      %1655 = vmatprep.subr.mxu0 0.0
      %1656 = vmatpush1.msra.mxu0 0.0
      %1657 = vmatprep.subr.mxu0 0.0
      %1658 = vmatpush1.msra.mxu0 0.0
      %1659 = vmatprep.subr.mxu0 0.0
      %1660 = vmatpush1.msra.mxu0 0.0
      %1661 = vmatprep.subr.mxu0 0.0
      %1662 = vmatpush1.msra.mxu0 0.0
      %1663 = vmatprep.subr.mxu0 0.0
      %1664 = vmatpush1.msra.mxu0 0.0
      %1665 = vmatprep.subr.mxu0 0.0
      %1666 = vmatpush1.msra.mxu0 0.0
      %1667 = vmatprep.subr.mxu0 0.0
      %1668 = vmatpush1.msra.mxu0 0.0
      %1669 = vmatprep.subr.mxu0 0.0
      %1670 = vmatpush1.msra.mxu0 0.0
      %1671 = vmatprep.subr.mxu0 0.0
      %1672 = vmatpush1.msra.mxu0 0.0
      %1673 = vmatprep.subr.mxu0 0.0
      %1674 = vmatpush1.msra.mxu0 0.0
      %1675 = vmatprep.subr.mxu0 0.0
      %1676 = vmatpush1.msra.mxu0 0.0
      %1677 = vmatprep.subr.mxu0 0.0
      %1678 = vmatpush1.msra.mxu0 0.0
      %1679 = vmatprep.subr.mxu0 0.0
      %1680 = vmatpush1.msra.mxu0 0.0
      %1681 = vmatprep.subr.mxu0 0.0
      %1682 = vmatpush1.msra.mxu0 0.0
      %1683 = vmatprep.subr.mxu0 0.0
      %1684 = vmatpush1.msra.mxu0 0.0
      %1685 = vmatprep.subr.mxu0 0.0
      %1686 = vmatpush1.msra.mxu0 0.0
      %1687 = vmatprep.subr.mxu0 0.0
      %1688 = vmatpush1.msra.mxu0 0.0
      %1689 = vmatprep.subr.mxu0 0.0
      %1690 = vmatpush1.msra.mxu0 0.0
      %1691 = vmatprep.mubr.f32.mxu0 0.0
      %1692 = vmatmul.mubr.f32.gmra.mrb[0].mxu0 %v1625
      %v1693 = vpop.f32.mrb[0].mxu0
      %v1694 = vadd.f32 0.0, %v1693
      %v1695 = vpop.f32.mrb[0].mxu0
      %1696 = vdwg.mxu0
      %v1697 = vadd.f32 %v1621, %v1694
      %v1698 = vld [vmem:[%s11] sm:$0x1]
      %v1700 = vlaneseq
      %v1701 = vshrl.u32 %v1700, 7
      %v1702 = vsub.s32 0, %v1701
      %v1703 = vrot.slane %v1698, %v1702
      %v1705 = vadd.f32 %v1697, %v1703
      %v1706 = vadd.f32 %v1705, %v724
      %v1707 = vld [vmem:[%s12] sm:$0x1]
      %v1708 = vld [vmem:[%s13] sm:$0x1]
      %v1709 = vsel %vm696, %v1706, 0.0
      %1710 = vadd.xlane.f32.xlu0 %v1709
      %v1711 = vpop.xlane.xlu0 %1710
      %v1712 = vmul.f32 %v1711, %v700
      %v1713 = vsub.f32 %v1706, %v1712
      %v1714 = vmul.f32 %v1713, %v1713
      %v1715 = vsel %vm696, %v1714, 0.0
      %1716 = vadd.xlane.f32.xlu0 %v1715
      %v1717 = vpop.xlane.xlu0 %1716
      %v1718 = vmul.f32 %v1717, %v700
      %v1719 = vadd.f32 %v1718, 1e-05
      %v1720 = vrsqrt.pop %v1719
      %v1721 = vmul.f32 %v1713, %v1720
      %v1723 = vlaneseq
      %v1724 = vshrl.u32 %v1723, 7
      %v1725 = vsub.s32 0, %v1724
      %v1726 = vrot.slane %v1707, %v1725
      %v1728 = vmul.f32 %v1721, %v1726
      %v1730 = vlaneseq
      %v1731 = vshrl.u32 %v1730, 7
      %v1732 = vsub.s32 0, %v1731
      %v1733 = vrot.slane %v1708, %v1732
      %v1735 = vadd.f32 %v1728, %v1733
      %v1736 = vld [vmem:[%s14] sm:$0xff]
      %v1737 = vld [vmem:[%s14 + $0x8] sm:$0xff]
      %v1738 = vld [vmem:[%s14 + $0x10] sm:$0xff]
      %v1739 = vld [vmem:[%s14 + $0x18] sm:$0xff]
      %v1740 = vld [vmem:[%s15] sm:$0x1]
      %v1742 = vlaneseq
      %v1743 = vshrl.u32 %v1742, 7
      %v1744 = vsub.s32 0, %v1743
      %v1745 = vrot.slane %v1740, %v1744
      %v1748 = vsel %vm696, %v1735, 0
      %1750 = vmatprep.subr.mxu0 0.0
      %1751 = vmatpush1.msra.mxu0 %v1736
      %1752 = vmatprep.subr.mxu0 0.0
      %1753 = vmatpush1.msra.mxu0 %v1737
      %1754 = vmatprep.subr.mxu0 0.0
      %1755 = vmatpush1.msra.mxu0 %v1738
      %1756 = vmatprep.subr.mxu0 0.0
      %1757 = vmatpush1.msra.mxu0 %v1739
      %1758 = vmatprep.subr.mxu0 0.0
      %1759 = vmatpush1.msra.mxu0 0.0
      %1760 = vmatprep.subr.mxu0 0.0
      %1761 = vmatpush1.msra.mxu0 0.0
      %1762 = vmatprep.subr.mxu0 0.0
      %1763 = vmatpush1.msra.mxu0 0.0
      %1764 = vmatprep.subr.mxu0 0.0
      %1765 = vmatpush1.msra.mxu0 0.0
      %1766 = vmatprep.subr.mxu0 0.0
      %1767 = vmatpush1.msra.mxu0 0.0
      %1768 = vmatprep.subr.mxu0 0.0
      %1769 = vmatpush1.msra.mxu0 0.0
      %1770 = vmatprep.subr.mxu0 0.0
      %1771 = vmatpush1.msra.mxu0 0.0
      %1772 = vmatprep.subr.mxu0 0.0
      %1773 = vmatpush1.msra.mxu0 0.0
      %1774 = vmatprep.subr.mxu0 0.0
      %1775 = vmatpush1.msra.mxu0 0.0
      %1776 = vmatprep.subr.mxu0 0.0
      %1777 = vmatpush1.msra.mxu0 0.0
      %1778 = vmatprep.subr.mxu0 0.0
      %1779 = vmatpush1.msra.mxu0 0.0
      %1780 = vmatprep.subr.mxu0 0.0
      %1781 = vmatpush1.msra.mxu0 0.0
      %1782 = vmatprep.subr.mxu0 0.0
      %1783 = vmatpush1.msra.mxu0 0.0
      %1784 = vmatprep.subr.mxu0 0.0
      %1785 = vmatpush1.msra.mxu0 0.0
      %1786 = vmatprep.subr.mxu0 0.0
      %1787 = vmatpush1.msra.mxu0 0.0
      %1788 = vmatprep.subr.mxu0 0.0
      %1789 = vmatpush1.msra.mxu0 0.0
      %1790 = vmatprep.subr.mxu0 0.0
      %1791 = vmatpush1.msra.mxu0 0.0
      %1792 = vmatprep.subr.mxu0 0.0
      %1793 = vmatpush1.msra.mxu0 0.0
      %1794 = vmatprep.subr.mxu0 0.0
      %1795 = vmatpush1.msra.mxu0 0.0
      %1796 = vmatprep.subr.mxu0 0.0
      %1797 = vmatpush1.msra.mxu0 0.0
      %1798 = vmatprep.subr.mxu0 0.0
      %1799 = vmatpush1.msra.mxu0 0.0
      %1800 = vmatprep.subr.mxu0 0.0
      %1801 = vmatpush1.msra.mxu0 0.0
      %1802 = vmatprep.subr.mxu0 0.0
      %1803 = vmatpush1.msra.mxu0 0.0
      %1804 = vmatprep.subr.mxu0 0.0
      %1805 = vmatpush1.msra.mxu0 0.0
      %1806 = vmatprep.subr.mxu0 0.0
      %1807 = vmatpush1.msra.mxu0 0.0
      %1808 = vmatprep.subr.mxu0 0.0
      %1809 = vmatpush1.msra.mxu0 0.0
      %1810 = vmatprep.subr.mxu0 0.0
      %1811 = vmatpush1.msra.mxu0 0.0
      %1812 = vmatprep.subr.mxu0 0.0
      %1813 = vmatpush1.msra.mxu0 0.0
      %1814 = vmatprep.mubr.f32.mxu0 0.0
      %1815 = vmatmul.mubr.f32.gmra.mrb[0].mxu0 %v1748
      %v1816 = vpop.f32.mrb[0].mxu0
      %v1817 = vadd.f32 %v1745, %v1816
      %v1818 = vpop.f32.mrb[0].mxu0
      %1819 = vdwg.mxu0
      %v1820 = vmul.f32 %v1817, 0.5
      %v1821 = vmul.f32 %v1817, 0.044715
      %v1822 = vmul.f32 %v1821, %v1817
      %v1823 = vmul.f32 %v1822, %v1817
      %v1824 = vadd.f32 %v1817, %v1823
      %v1825 = vmul.f32 %v1824, 0.7978846
      %v1826 = vtanh.pop %v1825
      %v1827 = vadd.f32 %v1826, 1.0
      %v1828 = vmul.f32 %v1820, %v1827
      %v1829 = vld [vmem:[%s16] sm:$0xff]
      %v1830 = vld [vmem:[%s16 + $0x8] sm:$0xff]
      %v1831 = vld [vmem:[%s16 + $0x10] sm:$0xff]
      %v1832 = vld [vmem:[%s16 + $0x18] sm:$0xff]
      %v1833 = vld [vmem:[%s16 + $0x20] sm:$0xff]
      %v1834 = vld [vmem:[%s16 + $0x28] sm:$0xff]
      %v1835 = vld [vmem:[%s16 + $0x30] sm:$0xff]
      %v1836 = vld [vmem:[%s16 + $0x38] sm:$0xff]
      %v1837 = vld [vmem:[%s17] sm:$0x1]
      %v1839 = vlaneseq
      %v1840 = vshrl.u32 %v1839, 7
      %v1841 = vsub.s32 0, %v1840
      %v1842 = vrot.slane %v1837, %v1841
      %vm1844 = vcmask 523264
      %v1846 = vsel %vm1844, %v1828, 0
      %1848 = vmatprep.subr.mxu0 0.0
      %1849 = vmatpush1.msra.mxu0 %v1829
      %1850 = vmatprep.subr.mxu0 0.0
      %1851 = vmatpush1.msra.mxu0 %v1830
      %1852 = vmatprep.subr.mxu0 0.0
      %1853 = vmatpush1.msra.mxu0 %v1831
      %1854 = vmatprep.subr.mxu0 0.0
      %1855 = vmatpush1.msra.mxu0 %v1832
      %1856 = vmatprep.subr.mxu0 0.0
      %1857 = vmatpush1.msra.mxu0 %v1833
      %1858 = vmatprep.subr.mxu0 0.0
      %1859 = vmatpush1.msra.mxu0 %v1834
      %1860 = vmatprep.subr.mxu0 0.0
      %1861 = vmatpush1.msra.mxu0 %v1835
      %1862 = vmatprep.subr.mxu0 0.0
      %1863 = vmatpush1.msra.mxu0 %v1836
      %1864 = vmatprep.subr.mxu0 0.0
      %1865 = vmatpush1.msra.mxu0 0.0
      %1866 = vmatprep.subr.mxu0 0.0
      %1867 = vmatpush1.msra.mxu0 0.0
      %1868 = vmatprep.subr.mxu0 0.0
      %1869 = vmatpush1.msra.mxu0 0.0
      %1870 = vmatprep.subr.mxu0 0.0
      %1871 = vmatpush1.msra.mxu0 0.0
      %1872 = vmatprep.subr.mxu0 0.0
      %1873 = vmatpush1.msra.mxu0 0.0
      %1874 = vmatprep.subr.mxu0 0.0
      %1875 = vmatpush1.msra.mxu0 0.0
      %1876 = vmatprep.subr.mxu0 0.0
      %1877 = vmatpush1.msra.mxu0 0.0
      %1878 = vmatprep.subr.mxu0 0.0
      %1879 = vmatpush1.msra.mxu0 0.0
      %1880 = vmatprep.subr.mxu0 0.0
      %1881 = vmatpush1.msra.mxu0 0.0
      %1882 = vmatprep.subr.mxu0 0.0
      %1883 = vmatpush1.msra.mxu0 0.0
      %1884 = vmatprep.subr.mxu0 0.0
      %1885 = vmatpush1.msra.mxu0 0.0
      %1886 = vmatprep.subr.mxu0 0.0
      %1887 = vmatpush1.msra.mxu0 0.0
      %1888 = vmatprep.subr.mxu0 0.0
      %1889 = vmatpush1.msra.mxu0 0.0
      %1890 = vmatprep.subr.mxu0 0.0
      %1891 = vmatpush1.msra.mxu0 0.0
      %1892 = vmatprep.subr.mxu0 0.0
      %1893 = vmatpush1.msra.mxu0 0.0
      %1894 = vmatprep.subr.mxu0 0.0
      %1895 = vmatpush1.msra.mxu0 0.0
      %1896 = vmatprep.subr.mxu0 0.0
      %1897 = vmatpush1.msra.mxu0 0.0
      %1898 = vmatprep.subr.mxu0 0.0
      %1899 = vmatpush1.msra.mxu0 0.0
      %1900 = vmatprep.subr.mxu0 0.0
      %1901 = vmatpush1.msra.mxu0 0.0
      %1902 = vmatprep.subr.mxu0 0.0
      %1903 = vmatpush1.msra.mxu0 0.0
      %1904 = vmatprep.subr.mxu0 0.0
      %1905 = vmatpush1.msra.mxu0 0.0
      %1906 = vmatprep.subr.mxu0 0.0
      %1907 = vmatpush1.msra.mxu0 0.0
      %1908 = vmatprep.subr.mxu0 0.0
      %1909 = vmatpush1.msra.mxu0 0.0
      %1910 = vmatprep.subr.mxu0 0.0
      %1911 = vmatpush1.msra.mxu0 0.0
      %1912 = vmatprep.mubr.f32.mxu0 0.0
      %1913 = vmatmul.mubr.f32.gmra.mrb[0].mxu0 %v1846
      %v1914 = vpop.f32.mrb[0].mxu0
      %v1915 = vadd.f32 %v1842, %v1914
      %v1916 = vpop.f32.mrb[0].mxu0
      %1917 = vdwg.mxu0
      %v1918 = vadd.f32 %v1915, %v1735
      %v1919 = vld [vmem:[%s18] sm:$0x1]
      %v1920 = vld [vmem:[%s19] sm:$0x1]
      %v1921 = vsel %vm696, %v1918, 0.0
      %1922 = vadd.xlane.f32.xlu0 %v1921
      %v1923 = vpop.xlane.xlu0 %1922
      %v1924 = vmul.f32 %v1923, %v700
      %v1925 = vsub.f32 %v1918, %v1924
      %v1926 = vmul.f32 %v1925, %v1925
      %v1927 = vsel %vm696, %v1926, 0.0
      %1928 = vadd.xlane.f32.xlu0 %v1927
      %v1929 = vpop.xlane.xlu0 %1928
      %v1930 = vmul.f32 %v1929, %v700
      %v1931 = vadd.f32 %v1930, 1e-05
      %v1932 = vrsqrt.pop %v1931
      %v1933 = vmul.f32 %v1925, %v1932
      %v1935 = vlaneseq
      %v1936 = vshrl.u32 %v1935, 7
      %v1937 = vsub.s32 0, %v1936
      %v1938 = vrot.slane %v1919, %v1937
      %v1940 = vmul.f32 %v1933, %v1938
      %v1942 = vlaneseq
      %v1943 = vshrl.u32 %v1942, 7
      %v1944 = vsub.s32 0, %v1943
      %v1945 = vrot.slane %v1920, %v1944
      %v1947 = vadd.f32 %v1940, %v1945
      %s1948 = scalar_lea.vmem %s4, 64
      %v1949 = vld [vmem:[%s1948] sm:$0xff]
      %v1950 = vld [vmem:[%s1948 + $0x8] sm:$0xff]
      %v1951 = vld [vmem:[%s1948 + $0x10] sm:$0xff]
      %v1952 = vld [vmem:[%s1948 + $0x18] sm:$0xff]
      %v1953 = vld [vmem:[%s1948 + $0x20] sm:$0xff]
      %v1954 = vld [vmem:[%s1948 + $0x28] sm:$0xff]
      %v1955 = vld [vmem:[%s1948 + $0x30] sm:$0xff]
      %v1956 = vld [vmem:[%s1948 + $0x38] sm:$0xff]
      %s1957 = scalar_lea.vmem %s5, 2
      %v1958 = vld [vmem:[%s1957] sm:$0x1]
      %v1959 = vld [vmem:[%s1957 + $0x1] sm:$0x1]
      %v1962 = vlaneseq
      %v1963 = vshrl.u32 %v1962, 7
      %v1964 = vsub.s32 0, %v1963
      %v1965 = vrot.slane %v1958, %v1964
      %v1966 = vlaneseq
      %v1967 = vshrl.u32 %v1966, 7
      %v1968 = vsub.s32 0, %v1967
      %v1969 = vrot.slane %v1959, %v1968
      %v1973 = vsel %vm696, %v1947, 0
      %1975 = vmatprep.subr.mxu0 0.0
      %1976 = vmatpush1.msra.mxu0 %v1949
      %1977 = vmatprep.subr.mxu0 0.0
      %1978 = vmatpush1.msra.mxu0 %v1950
      %1979 = vmatprep.subr.mxu0 0.0
      %1980 = vmatpush1.msra.mxu0 %v1951
      %1981 = vmatprep.subr.mxu0 0.0
      %1982 = vmatpush1.msra.mxu0 %v1952
      %1983 = vmatprep.subr.mxu0 0.0
      %1984 = vmatpush1.msra.mxu0 0.0
      %1985 = vmatprep.subr.mxu0 0.0
      %1986 = vmatpush1.msra.mxu0 0.0
      %1987 = vmatprep.subr.mxu0 0.0
      %1988 = vmatpush1.msra.mxu0 0.0
      %1989 = vmatprep.subr.mxu0 0.0
      %1990 = vmatpush1.msra.mxu0 0.0
      %1991 = vmatprep.subr.mxu0 0.0
      %1992 = vmatpush1.msra.mxu0 0.0
      %1993 = vmatprep.subr.mxu0 0.0
      %1994 = vmatpush1.msra.mxu0 0.0
      %1995 = vmatprep.subr.mxu0 0.0
      %1996 = vmatpush1.msra.mxu0 0.0
      %1997 = vmatprep.subr.mxu0 0.0
      %1998 = vmatpush1.msra.mxu0 0.0
      %1999 = vmatprep.subr.mxu0 0.0
      %2000 = vmatpush1.msra.mxu0 0.0
      %2001 = vmatprep.subr.mxu0 0.0
      %2002 = vmatpush1.msra.mxu0 0.0
      %2003 = vmatprep.subr.mxu0 0.0
      %2004 = vmatpush1.msra.mxu0 0.0
      %2005 = vmatprep.subr.mxu0 0.0
      %2006 = vmatpush1.msra.mxu0 0.0
      %2007 = vmatprep.subr.mxu0 0.0
      %2008 = vmatpush1.msra.mxu0 0.0
      %2009 = vmatprep.subr.mxu0 0.0
      %2010 = vmatpush1.msra.mxu0 0.0
      %2011 = vmatprep.subr.mxu0 0.0
      %2012 = vmatpush1.msra.mxu0 0.0
      %2013 = vmatprep.subr.mxu0 0.0
      %2014 = vmatpush1.msra.mxu0 0.0
      %2015 = vmatprep.subr.mxu0 0.0
      %2016 = vmatpush1.msra.mxu0 0.0
      %2017 = vmatprep.subr.mxu0 0.0
      %2018 = vmatpush1.msra.mxu0 0.0
      %2019 = vmatprep.subr.mxu0 0.0
      %2020 = vmatpush1.msra.mxu0 0.0
      %2021 = vmatprep.subr.mxu0 0.0
      %2022 = vmatpush1.msra.mxu0 0.0
      %2023 = vmatprep.subr.mxu0 0.0
      %2024 = vmatpush1.msra.mxu0 0.0
      %2025 = vmatprep.subr.mxu0 0.0
      %2026 = vmatpush1.msra.mxu0 0.0
      %2027 = vmatprep.subr.mxu0 0.0
      %2028 = vmatpush1.msra.mxu0 0.0
      %2029 = vmatprep.subr.mxu0 0.0
      %2030 = vmatpush1.msra.mxu0 0.0
      %2031 = vmatprep.subr.mxu0 0.0
      %2032 = vmatpush1.msra.mxu0 0.0
      %2033 = vmatprep.subr.mxu0 0.0
      %2034 = vmatpush1.msra.mxu0 0.0
      %2035 = vmatprep.subr.mxu0 0.0
      %2036 = vmatpush1.msra.mxu0 0.0
      %2037 = vmatprep.subr.mxu0 0.0
      %2038 = vmatpush1.msra.mxu0 0.0
      %2039 = vmatprep.mubr.f32.mxu0 0.0
      %2040 = vmatmul.mubr.f32.gmra.mrb[0].mxu0 %v1973
      %v2041 = vpop.f32.mrb[0].mxu0
      %v2042 = vadd.f32 %v1965, %v2041
      %v2043 = vpop.f32.mrb[0].mxu0
      %2044 = vdwg.mxu0
      %2045 = vmatprep.subr.mxu0 0.0
      %2046 = vmatpush1.msra.mxu0 %v1953
      %2047 = vmatprep.subr.mxu0 0.0
      %2048 = vmatpush1.msra.mxu0 %v1954
      %2049 = vmatprep.subr.mxu0 0.0
      %2050 = vmatpush1.msra.mxu0 %v1955
      %2051 = vmatprep.subr.mxu0 0.0
      %2052 = vmatpush1.msra.mxu0 %v1956
      %2053 = vmatprep.subr.mxu0 0.0
      %2054 = vmatpush1.msra.mxu0 0.0
      %2055 = vmatprep.subr.mxu0 0.0
      %2056 = vmatpush1.msra.mxu0 0.0
      %2057 = vmatprep.subr.mxu0 0.0
      %2058 = vmatpush1.msra.mxu0 0.0
      %2059 = vmatprep.subr.mxu0 0.0
      %2060 = vmatpush1.msra.mxu0 0.0
      %2061 = vmatprep.subr.mxu0 0.0
      %2062 = vmatpush1.msra.mxu0 0.0
      %2063 = vmatprep.subr.mxu0 0.0
      %2064 = vmatpush1.msra.mxu0 0.0
      %2065 = vmatprep.subr.mxu0 0.0
      %2066 = vmatpush1.msra.mxu0 0.0
      %2067 = vmatprep.subr.mxu0 0.0
      %2068 = vmatpush1.msra.mxu0 0.0
      %2069 = vmatprep.subr.mxu0 0.0
      %2070 = vmatpush1.msra.mxu0 0.0
      %2071 = vmatprep.subr.mxu0 0.0
      %2072 = vmatpush1.msra.mxu0 0.0
      %2073 = vmatprep.subr.mxu0 0.0
      %2074 = vmatpush1.msra.mxu0 0.0
      %2075 = vmatprep.subr.mxu0 0.0
      %2076 = vmatpush1.msra.mxu0 0.0
      %2077 = vmatprep.subr.mxu0 0.0
      %2078 = vmatpush1.msra.mxu0 0.0
      %2079 = vmatprep.subr.mxu0 0.0
      %2080 = vmatpush1.msra.mxu0 0.0
      %2081 = vmatprep.subr.mxu0 0.0
      %2082 = vmatpush1.msra.mxu0 0.0
      %2083 = vmatprep.subr.mxu0 0.0
      %2084 = vmatpush1.msra.mxu0 0.0
      %2085 = vmatprep.subr.mxu0 0.0
      %2086 = vmatpush1.msra.mxu0 0.0
      %2087 = vmatprep.subr.mxu0 0.0
      %2088 = vmatpush1.msra.mxu0 0.0
      %2089 = vmatprep.subr.mxu0 0.0
      %2090 = vmatpush1.msra.mxu0 0.0
      %2091 = vmatprep.subr.mxu0 0.0
      %2092 = vmatpush1.msra.mxu0 0.0
      %2093 = vmatprep.subr.mxu0 0.0
      %2094 = vmatpush1.msra.mxu0 0.0
      %2095 = vmatprep.subr.mxu0 0.0
      %2096 = vmatpush1.msra.mxu0 0.0
      %2097 = vmatprep.subr.mxu0 0.0
      %2098 = vmatpush1.msra.mxu0 0.0
      %2099 = vmatprep.subr.mxu0 0.0
      %2100 = vmatpush1.msra.mxu0 0.0
      %2101 = vmatprep.subr.mxu0 0.0
      %2102 = vmatpush1.msra.mxu0 0.0
      %2103 = vmatprep.subr.mxu0 0.0
      %2104 = vmatpush1.msra.mxu0 0.0
      %2105 = vmatprep.subr.mxu0 0.0
      %2106 = vmatpush1.msra.mxu0 0.0
      %2107 = vmatprep.subr.mxu0 0.0
      %2108 = vmatpush1.msra.mxu0 0.0
      %2109 = vmatprep.mubr.f32.mxu0 0.0
      %2110 = vmatmul.mubr.f32.gmra.mrb[0].mxu0 %v1973
      %v2111 = vpop.f32.mrb[0].mxu0
      %v2112 = vadd.f32 %v1969, %v2111
      %v2113 = vpop.f32.mrb[0].mxu0
      %2114 = vdwg.mxu0
      %s2115 = scalar_lea.vmem %s6, 64
      %v2116 = vld [vmem:[%s2115] sm:$0xff]
      %v2117 = vld [vmem:[%s2115 + $0x8] sm:$0xff]
      %v2118 = vld [vmem:[%s2115 + $0x10] sm:$0xff]
      %v2119 = vld [vmem:[%s2115 + $0x18] sm:$0xff]
      %v2120 = vld [vmem:[%s2115 + $0x20] sm:$0xff]
      %v2121 = vld [vmem:[%s2115 + $0x28] sm:$0xff]
      %v2122 = vld [vmem:[%s2115 + $0x30] sm:$0xff]
      %v2123 = vld [vmem:[%s2115 + $0x38] sm:$0xff]
      %s2124 = scalar_lea.vmem %s7, 2
      %v2125 = vld [vmem:[%s2124] sm:$0x1]
      %v2126 = vld [vmem:[%s2124 + $0x1] sm:$0x1]
      %v2129 = vlaneseq
      %v2130 = vshrl.u32 %v2129, 7
      %v2131 = vsub.s32 0, %v2130
      %v2132 = vrot.slane %v2125, %v2131
      %v2133 = vlaneseq
      %v2134 = vshrl.u32 %v2133, 7
      %v2135 = vsub.s32 0, %v2134
      %v2136 = vrot.slane %v2126, %v2135
      %2139 = vmatprep.subr.mxu0 0.0
      %2140 = vmatpush1.msra.mxu0 %v2116
      %2141 = vmatprep.subr.mxu0 0.0
      %2142 = vmatpush1.msra.mxu0 %v2117
      %2143 = vmatprep.subr.mxu0 0.0
      %2144 = vmatpush1.msra.mxu0 %v2118
      %2145 = vmatprep.subr.mxu0 0.0
      %2146 = vmatpush1.msra.mxu0 %v2119
      %2147 = vmatprep.subr.mxu0 0.0
      %2148 = vmatpush1.msra.mxu0 0.0
      %2149 = vmatprep.subr.mxu0 0.0
      %2150 = vmatpush1.msra.mxu0 0.0
      %2151 = vmatprep.subr.mxu0 0.0
      %2152 = vmatpush1.msra.mxu0 0.0
      %2153 = vmatprep.subr.mxu0 0.0
      %2154 = vmatpush1.msra.mxu0 0.0
      %2155 = vmatprep.subr.mxu0 0.0
      %2156 = vmatpush1.msra.mxu0 0.0
      %2157 = vmatprep.subr.mxu0 0.0
      %2158 = vmatpush1.msra.mxu0 0.0
      %2159 = vmatprep.subr.mxu0 0.0
      %2160 = vmatpush1.msra.mxu0 0.0
      %2161 = vmatprep.subr.mxu0 0.0
      %2162 = vmatpush1.msra.mxu0 0.0
      %2163 = vmatprep.subr.mxu0 0.0
      %2164 = vmatpush1.msra.mxu0 0.0
      %2165 = vmatprep.subr.mxu0 0.0
      %2166 = vmatpush1.msra.mxu0 0.0
      %2167 = vmatprep.subr.mxu0 0.0
      %2168 = vmatpush1.msra.mxu0 0.0
      %2169 = vmatprep.subr.mxu0 0.0
      %2170 = vmatpush1.msra.mxu0 0.0
      %2171 = vmatprep.subr.mxu0 0.0
      %2172 = vmatpush1.msra.mxu0 0.0
      %2173 = vmatprep.subr.mxu0 0.0
      %2174 = vmatpush1.msra.mxu0 0.0
      %2175 = vmatprep.subr.mxu0 0.0
      %2176 = vmatpush1.msra.mxu0 0.0
      %2177 = vmatprep.subr.mxu0 0.0
      %2178 = vmatpush1.msra.mxu0 0.0
      %2179 = vmatprep.subr.mxu0 0.0
      %2180 = vmatpush1.msra.mxu0 0.0
      %2181 = vmatprep.subr.mxu0 0.0
      %2182 = vmatpush1.msra.mxu0 0.0
      %2183 = vmatprep.subr.mxu0 0.0
      %2184 = vmatpush1.msra.mxu0 0.0
      %2185 = vmatprep.subr.mxu0 0.0
      %2186 = vmatpush1.msra.mxu0 0.0
      %2187 = vmatprep.subr.mxu0 0.0
      %2188 = vmatpush1.msra.mxu0 0.0
      %2189 = vmatprep.subr.mxu0 0.0
      %2190 = vmatpush1.msra.mxu0 0.0
      %2191 = vmatprep.subr.mxu0 0.0
      %2192 = vmatpush1.msra.mxu0 0.0
      %2193 = vmatprep.subr.mxu0 0.0
      %2194 = vmatpush1.msra.mxu0 0.0
      %2195 = vmatprep.subr.mxu0 0.0
      %2196 = vmatpush1.msra.mxu0 0.0
      %2197 = vmatprep.subr.mxu0 0.0
      %2198 = vmatpush1.msra.mxu0 0.0
      %2199 = vmatprep.subr.mxu0 0.0
      %2200 = vmatpush1.msra.mxu0 0.0
      %2201 = vmatprep.subr.mxu0 0.0
      %2202 = vmatpush1.msra.mxu0 0.0
      %2203 = vmatprep.mubr.f32.mxu0 0.0
      %2204 = vmatmul.mubr.f32.gmra.mrb[0].mxu0 %v1973
      %v2205 = vpop.f32.mrb[0].mxu0
      %v2206 = vadd.f32 %v2132, %v2205
      %v2207 = vpop.f32.mrb[0].mxu0
      %2208 = vdwg.mxu0
      %2209 = vmatprep.subr.mxu0 0.0
      %2210 = vmatpush1.msra.mxu0 %v2120
      %2211 = vmatprep.subr.mxu0 0.0
      %2212 = vmatpush1.msra.mxu0 %v2121
      %2213 = vmatprep.subr.mxu0 0.0
      %2214 = vmatpush1.msra.mxu0 %v2122
      %2215 = vmatprep.subr.mxu0 0.0
      %2216 = vmatpush1.msra.mxu0 %v2123
      %2217 = vmatprep.subr.mxu0 0.0
      %2218 = vmatpush1.msra.mxu0 0.0
      %2219 = vmatprep.subr.mxu0 0.0
      %2220 = vmatpush1.msra.mxu0 0.0
      %2221 = vmatprep.subr.mxu0 0.0
      %2222 = vmatpush1.msra.mxu0 0.0
      %2223 = vmatprep.subr.mxu0 0.0
      %2224 = vmatpush1.msra.mxu0 0.0
      %2225 = vmatprep.subr.mxu0 0.0
      %2226 = vmatpush1.msra.mxu0 0.0
      %2227 = vmatprep.subr.mxu0 0.0
      %2228 = vmatpush1.msra.mxu0 0.0
      %2229 = vmatprep.subr.mxu0 0.0
      %2230 = vmatpush1.msra.mxu0 0.0
      %2231 = vmatprep.subr.mxu0 0.0
      %2232 = vmatpush1.msra.mxu0 0.0
      %2233 = vmatprep.subr.mxu0 0.0
      %2234 = vmatpush1.msra.mxu0 0.0
      %2235 = vmatprep.subr.mxu0 0.0
      %2236 = vmatpush1.msra.mxu0 0.0
      %2237 = vmatprep.subr.mxu0 0.0
      %2238 = vmatpush1.msra.mxu0 0.0
      %2239 = vmatprep.subr.mxu0 0.0
      %2240 = vmatpush1.msra.mxu0 0.0
      %2241 = vmatprep.subr.mxu0 0.0
      %2242 = vmatpush1.msra.mxu0 0.0
      %2243 = vmatprep.subr.mxu0 0.0
      %2244 = vmatpush1.msra.mxu0 0.0
      %2245 = vmatprep.subr.mxu0 0.0
      %2246 = vmatpush1.msra.mxu0 0.0
      %2247 = vmatprep.subr.mxu0 0.0
      %2248 = vmatpush1.msra.mxu0 0.0
      %2249 = vmatprep.subr.mxu0 0.0
      %2250 = vmatpush1.msra.mxu0 0.0
      %2251 = vmatprep.subr.mxu0 0.0
      %2252 = vmatpush1.msra.mxu0 0.0
      %2253 = vmatprep.subr.mxu0 0.0
      %2254 = vmatpush1.msra.mxu0 0.0
      %2255 = vmatprep.subr.mxu0 0.0
      %2256 = vmatpush1.msra.mxu0 0.0
      %2257 = vmatprep.subr.mxu0 0.0
      %2258 = vmatpush1.msra.mxu0 0.0
      %2259 = vmatprep.subr.mxu0 0.0
      %2260 = vmatpush1.msra.mxu0 0.0
      %2261 = vmatprep.subr.mxu0 0.0
      %2262 = vmatpush1.msra.mxu0 0.0
      %2263 = vmatprep.subr.mxu0 0.0
      %2264 = vmatpush1.msra.mxu0 0.0
      %2265 = vmatprep.subr.mxu0 0.0
      %2266 = vmatpush1.msra.mxu0 0.0
      %2267 = vmatprep.subr.mxu0 0.0
      %2268 = vmatpush1.msra.mxu0 0.0
      %2269 = vmatprep.subr.mxu0 0.0
      %2270 = vmatpush1.msra.mxu0 0.0
      %2271 = vmatprep.subr.mxu0 0.0
      %2272 = vmatpush1.msra.mxu0 0.0
      %2273 = vmatprep.mubr.f32.mxu0 0.0
      %2274 = vmatmul.mubr.f32.gmra.mrb[0].mxu0 %v1973
      %v2275 = vpop.f32.mrb[0].mxu0
      %v2276 = vadd.f32 %v2136, %v2275
      %v2277 = vpop.f32.mrb[0].mxu0
      %2278 = vdwg.mxu0
      %s2279 = scalar_lea.vmem %s8, 64
      %v2280 = vld [vmem:[%s2279] sm:$0xff]
      %v2281 = vld [vmem:[%s2279 + $0x8] sm:$0xff]
      %v2282 = vld [vmem:[%s2279 + $0x10] sm:$0xff]
      %v2283 = vld [vmem:[%s2279 + $0x18] sm:$0xff]
      %v2284 = vld [vmem:[%s2279 + $0x20] sm:$0xff]
      %v2285 = vld [vmem:[%s2279 + $0x28] sm:$0xff]
      %v2286 = vld [vmem:[%s2279 + $0x30] sm:$0xff]
      %v2287 = vld [vmem:[%s2279 + $0x38] sm:$0xff]
      %s2288 = scalar_lea.vmem %s9, 2
      %v2289 = vld [vmem:[%s2288] sm:$0x1]
      %v2290 = vld [vmem:[%s2288 + $0x1] sm:$0x1]
      %v2293 = vlaneseq
      %v2294 = vshrl.u32 %v2293, 7
      %v2295 = vsub.s32 0, %v2294
      %v2296 = vrot.slane %v2289, %v2295
      %v2297 = vlaneseq
      %v2298 = vshrl.u32 %v2297, 7
      %v2299 = vsub.s32 0, %v2298
      %v2300 = vrot.slane %v2290, %v2299
      %2303 = vmatprep.subr.mxu0 0.0
      %2304 = vmatpush1.msra.mxu0 %v2280
      %2305 = vmatprep.subr.mxu0 0.0
      %2306 = vmatpush1.msra.mxu0 %v2281
      %2307 = vmatprep.subr.mxu0 0.0
      %2308 = vmatpush1.msra.mxu0 %v2282
      %2309 = vmatprep.subr.mxu0 0.0
      %2310 = vmatpush1.msra.mxu0 %v2283
      %2311 = vmatprep.subr.mxu0 0.0
      %2312 = vmatpush1.msra.mxu0 0.0
      %2313 = vmatprep.subr.mxu0 0.0
      %2314 = vmatpush1.msra.mxu0 0.0
      %2315 = vmatprep.subr.mxu0 0.0
      %2316 = vmatpush1.msra.mxu0 0.0
      %2317 = vmatprep.subr.mxu0 0.0
      %2318 = vmatpush1.msra.mxu0 0.0
      %2319 = vmatprep.subr.mxu0 0.0
      %2320 = vmatpush1.msra.mxu0 0.0
      %2321 = vmatprep.subr.mxu0 0.0
      %2322 = vmatpush1.msra.mxu0 0.0
      %2323 = vmatprep.subr.mxu0 0.0
      %2324 = vmatpush1.msra.mxu0 0.0
      %2325 = vmatprep.subr.mxu0 0.0
      %2326 = vmatpush1.msra.mxu0 0.0
      %2327 = vmatprep.subr.mxu0 0.0
      %2328 = vmatpush1.msra.mxu0 0.0
      %2329 = vmatprep.subr.mxu0 0.0
      %2330 = vmatpush1.msra.mxu0 0.0
      %2331 = vmatprep.subr.mxu0 0.0
      %2332 = vmatpush1.msra.mxu0 0.0
      %2333 = vmatprep.subr.mxu0 0.0
      %2334 = vmatpush1.msra.mxu0 0.0
      %2335 = vmatprep.subr.mxu0 0.0
      %2336 = vmatpush1.msra.mxu0 0.0
      %2337 = vmatprep.subr.mxu0 0.0
      %2338 = vmatpush1.msra.mxu0 0.0
      %2339 = vmatprep.subr.mxu0 0.0
      %2340 = vmatpush1.msra.mxu0 0.0
      %2341 = vmatprep.subr.mxu0 0.0
      %2342 = vmatpush1.msra.mxu0 0.0
      %2343 = vmatprep.subr.mxu0 0.0
      %2344 = vmatpush1.msra.mxu0 0.0
      %2345 = vmatprep.subr.mxu0 0.0
      %2346 = vmatpush1.msra.mxu0 0.0
      %2347 = vmatprep.subr.mxu0 0.0
      %2348 = vmatpush1.msra.mxu0 0.0
      %2349 = vmatprep.subr.mxu0 0.0
      %2350 = vmatpush1.msra.mxu0 0.0
      %2351 = vmatprep.subr.mxu0 0.0
      %2352 = vmatpush1.msra.mxu0 0.0
      %2353 = vmatprep.subr.mxu0 0.0
      %2354 = vmatpush1.msra.mxu0 0.0
      %2355 = vmatprep.subr.mxu0 0.0
      %2356 = vmatpush1.msra.mxu0 0.0
      %2357 = vmatprep.subr.mxu0 0.0
      %2358 = vmatpush1.msra.mxu0 0.0
      %2359 = vmatprep.subr.mxu0 0.0
      %2360 = vmatpush1.msra.mxu0 0.0
      %2361 = vmatprep.subr.mxu0 0.0
      %2362 = vmatpush1.msra.mxu0 0.0
      %2363 = vmatprep.subr.mxu0 0.0
      %2364 = vmatpush1.msra.mxu0 0.0
      %2365 = vmatprep.subr.mxu0 0.0
      %2366 = vmatpush1.msra.mxu0 0.0
      %2367 = vmatprep.mubr.f32.mxu0 0.0
      %2368 = vmatmul.mubr.f32.gmra.mrb[0].mxu0 %v1973
      %v2369 = vpop.f32.mrb[0].mxu0
      %v2370 = vadd.f32 %v2296, %v2369
      %v2371 = vpop.f32.mrb[0].mxu0
      %2372 = vdwg.mxu0
      %2373 = vmatprep.subr.mxu0 0.0
      %2374 = vmatpush1.msra.mxu0 %v2284
      %2375 = vmatprep.subr.mxu0 0.0
      %2376 = vmatpush1.msra.mxu0 %v2285
      %2377 = vmatprep.subr.mxu0 0.0
      %2378 = vmatpush1.msra.mxu0 %v2286
      %2379 = vmatprep.subr.mxu0 0.0
      %2380 = vmatpush1.msra.mxu0 %v2287
      %2381 = vmatprep.subr.mxu0 0.0
      %2382 = vmatpush1.msra.mxu0 0.0
      %2383 = vmatprep.subr.mxu0 0.0
      %2384 = vmatpush1.msra.mxu0 0.0
      %2385 = vmatprep.subr.mxu0 0.0
      %2386 = vmatpush1.msra.mxu0 0.0
      %2387 = vmatprep.subr.mxu0 0.0
      %2388 = vmatpush1.msra.mxu0 0.0
      %2389 = vmatprep.subr.mxu0 0.0
      %2390 = vmatpush1.msra.mxu0 0.0
      %2391 = vmatprep.subr.mxu0 0.0
      %2392 = vmatpush1.msra.mxu0 0.0
      %2393 = vmatprep.subr.mxu0 0.0
      %2394 = vmatpush1.msra.mxu0 0.0
      %2395 = vmatprep.subr.mxu0 0.0
      %2396 = vmatpush1.msra.mxu0 0.0
      %2397 = vmatprep.subr.mxu0 0.0
      %2398 = vmatpush1.msra.mxu0 0.0
      %2399 = vmatprep.subr.mxu0 0.0
      %2400 = vmatpush1.msra.mxu0 0.0
      %2401 = vmatprep.subr.mxu0 0.0
      %2402 = vmatpush1.msra.mxu0 0.0
      %2403 = vmatprep.subr.mxu0 0.0
      %2404 = vmatpush1.msra.mxu0 0.0
      %2405 = vmatprep.subr.mxu0 0.0
      %2406 = vmatpush1.msra.mxu0 0.0
      %2407 = vmatprep.subr.mxu0 0.0
      %2408 = vmatpush1.msra.mxu0 0.0
      %2409 = vmatprep.subr.mxu0 0.0
      %2410 = vmatpush1.msra.mxu0 0.0
      %2411 = vmatprep.subr.mxu0 0.0
      %2412 = vmatpush1.msra.mxu0 0.0
      %2413 = vmatprep.subr.mxu0 0.0
      %2414 = vmatpush1.msra.mxu0 0.0
      %2415 = vmatprep.subr.mxu0 0.0
      %2416 = vmatpush1.msra.mxu0 0.0
      %2417 = vmatprep.subr.mxu0 0.0
      %2418 = vmatpush1.msra.mxu0 0.0
      %2419 = vmatprep.subr.mxu0 0.0
      %2420 = vmatpush1.msra.mxu0 0.0
      %2421 = vmatprep.subr.mxu0 0.0
      %2422 = vmatpush1.msra.mxu0 0.0
      %2423 = vmatprep.subr.mxu0 0.0
      %2424 = vmatpush1.msra.mxu0 0.0
      %2425 = vmatprep.subr.mxu0 0.0
      %2426 = vmatpush1.msra.mxu0 0.0
      %2427 = vmatprep.subr.mxu0 0.0
      %2428 = vmatpush1.msra.mxu0 0.0
      %2429 = vmatprep.subr.mxu0 0.0
      %2430 = vmatpush1.msra.mxu0 0.0
      %2431 = vmatprep.subr.mxu0 0.0
      %2432 = vmatpush1.msra.mxu0 0.0
      %2433 = vmatprep.subr.mxu0 0.0
      %2434 = vmatpush1.msra.mxu0 0.0
      %2435 = vmatprep.subr.mxu0 0.0
      %2436 = vmatpush1.msra.mxu0 0.0
      %2437 = vmatprep.mubr.f32.mxu0 0.0
      %2438 = vmatmul.mubr.f32.gmra.mrb[0].mxu0 %v1973
      %v2439 = vpop.f32.mrb[0].mxu0
      %v2440 = vadd.f32 %v2300, %v2439
      %v2441 = vpop.f32.mrb[0].mxu0
      %2442 = vdwg.mxu0
      %v2444 = vsel %vm1215, %v2042, 0
      %v2447 = vsel %vm1215, %v2206, 0
      %2449 = vmatprep.subr.mxu0 0.0
      %2450 = vmatpush1.xpose.msra.mxu0 %v2447
      %2451 = vmatprep.subr.mxu0 0.0
      %2452 = vmatpush1.xpose.msra.mxu0 0.0
      %2453 = vmatprep.subr.mxu0 0.0
      %2454 = vmatpush1.xpose.msra.mxu0 0.0
      %2455 = vmatprep.subr.mxu0 0.0
      %2456 = vmatpush1.xpose.msra.mxu0 0.0
      %2457 = vmatprep.subr.mxu0 0.0
      %2458 = vmatpush1.xpose.msra.mxu0 0.0
      %2459 = vmatprep.subr.mxu0 0.0
      %2460 = vmatpush1.xpose.msra.mxu0 0.0
      %2461 = vmatprep.subr.mxu0 0.0
      %2462 = vmatpush1.xpose.msra.mxu0 0.0
      %2463 = vmatprep.subr.mxu0 0.0
      %2464 = vmatpush1.xpose.msra.mxu0 0.0
      %2465 = vmatprep.subr.mxu0 0.0
      %2466 = vmatpush1.xpose.msra.mxu0 0.0
      %2467 = vmatprep.subr.mxu0 0.0
      %2468 = vmatpush1.xpose.msra.mxu0 0.0
      %2469 = vmatprep.subr.mxu0 0.0
      %2470 = vmatpush1.xpose.msra.mxu0 0.0
      %2471 = vmatprep.subr.mxu0 0.0
      %2472 = vmatpush1.xpose.msra.mxu0 0.0
      %2473 = vmatprep.subr.mxu0 0.0
      %2474 = vmatpush1.xpose.msra.mxu0 0.0
      %2475 = vmatprep.subr.mxu0 0.0
      %2476 = vmatpush1.xpose.msra.mxu0 0.0
      %2477 = vmatprep.subr.mxu0 0.0
      %2478 = vmatpush1.xpose.msra.mxu0 0.0
      %2479 = vmatprep.subr.mxu0 0.0
      %2480 = vmatpush1.xpose.msra.mxu0 0.0
      %2481 = vmatprep.subr.mxu0 0.0
      %2482 = vmatpush1.xpose.msra.mxu0 0.0
      %2483 = vmatprep.subr.mxu0 0.0
      %2484 = vmatpush1.xpose.msra.mxu0 0.0
      %2485 = vmatprep.subr.mxu0 0.0
      %2486 = vmatpush1.xpose.msra.mxu0 0.0
      %2487 = vmatprep.subr.mxu0 0.0
      %2488 = vmatpush1.xpose.msra.mxu0 0.0
      %2489 = vmatprep.subr.mxu0 0.0
      %2490 = vmatpush1.xpose.msra.mxu0 0.0
      %2491 = vmatprep.subr.mxu0 0.0
      %2492 = vmatpush1.xpose.msra.mxu0 0.0
      %2493 = vmatprep.subr.mxu0 0.0
      %2494 = vmatpush1.xpose.msra.mxu0 0.0
      %2495 = vmatprep.subr.mxu0 0.0
      %2496 = vmatpush1.xpose.msra.mxu0 0.0
      %2497 = vmatprep.subr.mxu0 0.0
      %2498 = vmatpush1.xpose.msra.mxu0 0.0
      %2499 = vmatprep.subr.mxu0 0.0
      %2500 = vmatpush1.xpose.msra.mxu0 0.0
      %2501 = vmatprep.subr.mxu0 0.0
      %2502 = vmatpush1.xpose.msra.mxu0 0.0
      %2503 = vmatprep.subr.mxu0 0.0
      %2504 = vmatpush1.xpose.msra.mxu0 0.0
      %2505 = vmatprep.subr.mxu0 0.0
      %2506 = vmatpush1.xpose.msra.mxu0 0.0
      %2507 = vmatprep.subr.mxu0 0.0
      %2508 = vmatpush1.xpose.msra.mxu0 0.0
      %2509 = vmatprep.subr.mxu0 0.0
      %2510 = vmatpush1.xpose.msra.mxu0 0.0
      %2511 = vmatprep.subr.mxu0 0.0
      %2512 = vmatpush1.xpose.msra.mxu0 0.0
      %2513 = vmatprep.mubr.f32.mxu0 0.0
      %2514 = vmatmul.mubr.f32.gmra.mrb[0].mxu0 %v2444
      %v2515 = vpop.f32.mrb[0].mxu0
      %v2516 = vadd.f32 0.0, %v2515
      %v2517 = vpop.f32.mrb[0].mxu0
      %2518 = vdwg.mxu0
      %v2520 = vsel %vm1215, %v2112, 0
      %v2523 = vsel %vm1215, %v2276, 0
      %2525 = vmatprep.subr.mxu0 0.0
      %2526 = vmatpush1.xpose.msra.mxu0 %v2523
      %2527 = vmatprep.subr.mxu0 0.0
      %2528 = vmatpush1.xpose.msra.mxu0 0.0
      %2529 = vmatprep.subr.mxu0 0.0
      %2530 = vmatpush1.xpose.msra.mxu0 0.0
      %2531 = vmatprep.subr.mxu0 0.0
      %2532 = vmatpush1.xpose.msra.mxu0 0.0
      %2533 = vmatprep.subr.mxu0 0.0
      %2534 = vmatpush1.xpose.msra.mxu0 0.0
      %2535 = vmatprep.subr.mxu0 0.0
      %2536 = vmatpush1.xpose.msra.mxu0 0.0
      %2537 = vmatprep.subr.mxu0 0.0
      %2538 = vmatpush1.xpose.msra.mxu0 0.0
      %2539 = vmatprep.subr.mxu0 0.0
      %2540 = vmatpush1.xpose.msra.mxu0 0.0
      %2541 = vmatprep.subr.mxu0 0.0
      %2542 = vmatpush1.xpose.msra.mxu0 0.0
      %2543 = vmatprep.subr.mxu0 0.0
      %2544 = vmatpush1.xpose.msra.mxu0 0.0
      %2545 = vmatprep.subr.mxu0 0.0
      %2546 = vmatpush1.xpose.msra.mxu0 0.0
      %2547 = vmatprep.subr.mxu0 0.0
      %2548 = vmatpush1.xpose.msra.mxu0 0.0
      %2549 = vmatprep.subr.mxu0 0.0
      %2550 = vmatpush1.xpose.msra.mxu0 0.0
      %2551 = vmatprep.subr.mxu0 0.0
      %2552 = vmatpush1.xpose.msra.mxu0 0.0
      %2553 = vmatprep.subr.mxu0 0.0
      %2554 = vmatpush1.xpose.msra.mxu0 0.0
      %2555 = vmatprep.subr.mxu0 0.0
      %2556 = vmatpush1.xpose.msra.mxu0 0.0
      %2557 = vmatprep.subr.mxu0 0.0
      %2558 = vmatpush1.xpose.msra.mxu0 0.0
      %2559 = vmatprep.subr.mxu0 0.0
      %2560 = vmatpush1.xpose.msra.mxu0 0.0
      %2561 = vmatprep.subr.mxu0 0.0
      %2562 = vmatpush1.xpose.msra.mxu0 0.0
      %2563 = vmatprep.subr.mxu0 0.0
      %2564 = vmatpush1.xpose.msra.mxu0 0.0
      %2565 = vmatprep.subr.mxu0 0.0
      %2566 = vmatpush1.xpose.msra.mxu0 0.0
      %2567 = vmatprep.subr.mxu0 0.0
      %2568 = vmatpush1.xpose.msra.mxu0 0.0
      %2569 = vmatprep.subr.mxu0 0.0
      %2570 = vmatpush1.xpose.msra.mxu0 0.0
      %2571 = vmatprep.subr.mxu0 0.0
      %2572 = vmatpush1.xpose.msra.mxu0 0.0
      %2573 = vmatprep.subr.mxu0 0.0
      %2574 = vmatpush1.xpose.msra.mxu0 0.0
      %2575 = vmatprep.subr.mxu0 0.0
      %2576 = vmatpush1.xpose.msra.mxu0 0.0
      %2577 = vmatprep.subr.mxu0 0.0
      %2578 = vmatpush1.xpose.msra.mxu0 0.0
      %2579 = vmatprep.subr.mxu0 0.0
      %2580 = vmatpush1.xpose.msra.mxu0 0.0
      %2581 = vmatprep.subr.mxu0 0.0
      %2582 = vmatpush1.xpose.msra.mxu0 0.0
      %2583 = vmatprep.subr.mxu0 0.0
      %2584 = vmatpush1.xpose.msra.mxu0 0.0
      %2585 = vmatprep.subr.mxu0 0.0
      %2586 = vmatpush1.xpose.msra.mxu0 0.0
      %2587 = vmatprep.subr.mxu0 0.0
      %2588 = vmatpush1.xpose.msra.mxu0 0.0
      %2589 = vmatprep.mubr.f32.mxu0 0.0
      %2590 = vmatmul.mubr.f32.gmra.mrb[0].mxu0 %v2520
      %v2591 = vpop.f32.mrb[0].mxu0
      %v2592 = vadd.f32 0.0, %v2591
      %v2593 = vpop.f32.mrb[0].mxu0
      %2594 = vdwg.mxu0
      %v2595 = vmul.f32 %v2516, 0.25
      %v2596 = vmul.f32 %v2592, 0.25
      %v2597 = vadd.f32 %v2595, %v1374
      %v2598 = vadd.f32 %v2596, %v1374
      %v2599 = vsel %vm1378, %v2597, -inf
      %2600 = vmax.xlane.f32.xlu0 %v2599
      %v2601 = vpop.xlane.xlu0 %2600
      %v2602 = vsel %vm1378, %v2598, -inf
      %2603 = vmax.xlane.f32.xlu0 %v2602
      %v2604 = vpop.xlane.xlu0 %2603
      %v2605 = vsub.f32 %v2597, %v2601
      %v2606 = vsub.f32 %v2598, %v2604
      %v2607 = vmul.f32 %v2605, 1.442695
      %v2608 = vpow.pop %v2607
      %v2609 = vmul.f32 %v2606, 1.442695
      %v2610 = vpow.pop %v2609
      %v2611 = vsel %vm1378, %v2608, 0.0
      %2612 = vadd.xlane.f32.xlu0 %v2611
      %v2613 = vpop.xlane.xlu0 %2612
      %v2614 = vsel %vm1378, %v2610, 0.0
      %2615 = vadd.xlane.f32.xlu0 %v2614
      %v2616 = vpop.xlane.xlu0 %2615
      %v2617 = vrcp.pop %v2613
      %v2618 = vrcp.pop %v2616
      %v2619 = vmul.f32 %v2608, %v2617
      %v2620 = vmul.f32 %v2610, %v2618
      %v2622 = vsel %vm1378, %v2619, 0
      %2624 = vmatprep.subr.mxu0 0.0
      %2625 = vmatpush1.msra.mxu0 %v2370
      %2626 = vmatprep.subr.mxu0 0.0
      %2627 = vmatpush1.msra.mxu0 0.0
      %2628 = vmatprep.subr.mxu0 0.0
      %2629 = vmatpush1.msra.mxu0 0.0
      %2630 = vmatprep.subr.mxu0 0.0
      %2631 = vmatpush1.msra.mxu0 0.0
      %2632 = vmatprep.subr.mxu0 0.0
      %2633 = vmatpush1.msra.mxu0 0.0
      %2634 = vmatprep.subr.mxu0 0.0
      %2635 = vmatpush1.msra.mxu0 0.0
      %2636 = vmatprep.subr.mxu0 0.0
      %2637 = vmatpush1.msra.mxu0 0.0
      %2638 = vmatprep.subr.mxu0 0.0
      %2639 = vmatpush1.msra.mxu0 0.0
      %2640 = vmatprep.subr.mxu0 0.0
      %2641 = vmatpush1.msra.mxu0 0.0
      %2642 = vmatprep.subr.mxu0 0.0
      %2643 = vmatpush1.msra.mxu0 0.0
      %2644 = vmatprep.subr.mxu0 0.0
      %2645 = vmatpush1.msra.mxu0 0.0
      %2646 = vmatprep.subr.mxu0 0.0
      %2647 = vmatpush1.msra.mxu0 0.0
      %2648 = vmatprep.subr.mxu0 0.0
      %2649 = vmatpush1.msra.mxu0 0.0
      %2650 = vmatprep.subr.mxu0 0.0
      %2651 = vmatpush1.msra.mxu0 0.0
      %2652 = vmatprep.subr.mxu0 0.0
      %2653 = vmatpush1.msra.mxu0 0.0
      %2654 = vmatprep.subr.mxu0 0.0
      %2655 = vmatpush1.msra.mxu0 0.0
      %2656 = vmatprep.subr.mxu0 0.0
      %2657 = vmatpush1.msra.mxu0 0.0
      %2658 = vmatprep.subr.mxu0 0.0
      %2659 = vmatpush1.msra.mxu0 0.0
      %2660 = vmatprep.subr.mxu0 0.0
      %2661 = vmatpush1.msra.mxu0 0.0
      %2662 = vmatprep.subr.mxu0 0.0
      %2663 = vmatpush1.msra.mxu0 0.0
      %2664 = vmatprep.subr.mxu0 0.0
      %2665 = vmatpush1.msra.mxu0 0.0
      %2666 = vmatprep.subr.mxu0 0.0
      %2667 = vmatpush1.msra.mxu0 0.0
      %2668 = vmatprep.subr.mxu0 0.0
      %2669 = vmatpush1.msra.mxu0 0.0
      %2670 = vmatprep.subr.mxu0 0.0
      %2671 = vmatpush1.msra.mxu0 0.0
      %2672 = vmatprep.subr.mxu0 0.0
      %2673 = vmatpush1.msra.mxu0 0.0
      %2674 = vmatprep.subr.mxu0 0.0
      %2675 = vmatpush1.msra.mxu0 0.0
      %2676 = vmatprep.subr.mxu0 0.0
      %2677 = vmatpush1.msra.mxu0 0.0
      %2678 = vmatprep.subr.mxu0 0.0
      %2679 = vmatpush1.msra.mxu0 0.0
      %2680 = vmatprep.subr.mxu0 0.0
      %2681 = vmatpush1.msra.mxu0 0.0
      %2682 = vmatprep.subr.mxu0 0.0
      %2683 = vmatpush1.msra.mxu0 0.0
      %2684 = vmatprep.subr.mxu0 0.0
      %2685 = vmatpush1.msra.mxu0 0.0
      %2686 = vmatprep.subr.mxu0 0.0
      %2687 = vmatpush1.msra.mxu0 0.0
      %2688 = vmatprep.mubr.f32.mxu0 0.0
      %2689 = vmatmul.mubr.f32.gmra.mrb[0].mxu0 %v2622
      %v2690 = vpop.f32.mrb[0].mxu0
      %v2691 = vadd.f32 0.0, %v2690
      %v2692 = vpop.f32.mrb[0].mxu0
      %2693 = vdwg.mxu0
      %v2695 = vsel %vm1378, %v2620, 0
      %2697 = vmatprep.subr.mxu0 0.0
      %2698 = vmatpush1.msra.mxu0 %v2440
      %2699 = vmatprep.subr.mxu0 0.0
      %2700 = vmatpush1.msra.mxu0 0.0
      %2701 = vmatprep.subr.mxu0 0.0
      %2702 = vmatpush1.msra.mxu0 0.0
      %2703 = vmatprep.subr.mxu0 0.0
      %2704 = vmatpush1.msra.mxu0 0.0
      %2705 = vmatprep.subr.mxu0 0.0
      %2706 = vmatpush1.msra.mxu0 0.0
      %2707 = vmatprep.subr.mxu0 0.0
      %2708 = vmatpush1.msra.mxu0 0.0
      %2709 = vmatprep.subr.mxu0 0.0
      %2710 = vmatpush1.msra.mxu0 0.0
      %2711 = vmatprep.subr.mxu0 0.0
      %2712 = vmatpush1.msra.mxu0 0.0
      %2713 = vmatprep.subr.mxu0 0.0
      %2714 = vmatpush1.msra.mxu0 0.0
      %2715 = vmatprep.subr.mxu0 0.0
      %2716 = vmatpush1.msra.mxu0 0.0
      %2717 = vmatprep.subr.mxu0 0.0
      %2718 = vmatpush1.msra.mxu0 0.0
      %2719 = vmatprep.subr.mxu0 0.0
      %2720 = vmatpush1.msra.mxu0 0.0
      %2721 = vmatprep.subr.mxu0 0.0
      %2722 = vmatpush1.msra.mxu0 0.0
      %2723 = vmatprep.subr.mxu0 0.0
      %2724 = vmatpush1.msra.mxu0 0.0
      %2725 = vmatprep.subr.mxu0 0.0
      %2726 = vmatpush1.msra.mxu0 0.0
      %2727 = vmatprep.subr.mxu0 0.0
      %2728 = vmatpush1.msra.mxu0 0.0
      %2729 = vmatprep.subr.mxu0 0.0
      %2730 = vmatpush1.msra.mxu0 0.0
      %2731 = vmatprep.subr.mxu0 0.0
      %2732 = vmatpush1.msra.mxu0 0.0
      %2733 = vmatprep.subr.mxu0 0.0
      %2734 = vmatpush1.msra.mxu0 0.0
      %2735 = vmatprep.subr.mxu0 0.0
      %2736 = vmatpush1.msra.mxu0 0.0
      %2737 = vmatprep.subr.mxu0 0.0
      %2738 = vmatpush1.msra.mxu0 0.0
      %2739 = vmatprep.subr.mxu0 0.0
      %2740 = vmatpush1.msra.mxu0 0.0
      %2741 = vmatprep.subr.mxu0 0.0
      %2742 = vmatpush1.msra.mxu0 0.0
      %2743 = vmatprep.subr.mxu0 0.0
      %2744 = vmatpush1.msra.mxu0 0.0
      %2745 = vmatprep.subr.mxu0 0.0
      %2746 = vmatpush1.msra.mxu0 0.0
      %2747 = vmatprep.subr.mxu0 0.0
      %2748 = vmatpush1.msra.mxu0 0.0
      %2749 = vmatprep.subr.mxu0 0.0
      %2750 = vmatpush1.msra.mxu0 0.0
      %2751 = vmatprep.subr.mxu0 0.0
      %2752 = vmatpush1.msra.mxu0 0.0
      %2753 = vmatprep.subr.mxu0 0.0
      %2754 = vmatpush1.msra.mxu0 0.0
      %2755 = vmatprep.subr.mxu0 0.0
      %2756 = vmatpush1.msra.mxu0 0.0
      %2757 = vmatprep.subr.mxu0 0.0
      %2758 = vmatpush1.msra.mxu0 0.0
      %2759 = vmatprep.subr.mxu0 0.0
      %2760 = vmatpush1.msra.mxu0 0.0
      %2761 = vmatprep.mubr.f32.mxu0 0.0
      %2762 = vmatmul.mubr.f32.gmra.mrb[0].mxu0 %v2695
      %v2763 = vpop.f32.mrb[0].mxu0
      %v2764 = vadd.f32 0.0, %v2763
      %v2765 = vpop.f32.mrb[0].mxu0
      %2766 = vdwg.mxu0
      %s2767 = scalar_lea.vmem %s10, 32
      %v2768 = vld [vmem:[%s2767] sm:$0xff]
      %v2769 = vld [vmem:[%s2767 + $0x8] sm:$0xff]
      %v2770 = vld [vmem:[%s2767 + $0x10] sm:$0xff]
      %v2771 = vld [vmem:[%s2767 + $0x18] sm:$0xff]
      %v2773 = vsel %vm1215, %v2691, 0
      %2775 = vmatprep.subr.mxu0 0.0
      %2776 = vmatpush1.msra.mxu0 %v2768
      %2777 = vmatprep.subr.mxu0 0.0
      %2778 = vmatpush1.msra.mxu0 %v2769
      %2779 = vmatprep.subr.mxu0 0.0
      %2780 = vmatpush1.msra.mxu0 0.0
      %2781 = vmatprep.subr.mxu0 0.0
      %2782 = vmatpush1.msra.mxu0 0.0
      %2783 = vmatprep.subr.mxu0 0.0
      %2784 = vmatpush1.msra.mxu0 0.0
      %2785 = vmatprep.subr.mxu0 0.0
      %2786 = vmatpush1.msra.mxu0 0.0
      %2787 = vmatprep.subr.mxu0 0.0
      %2788 = vmatpush1.msra.mxu0 0.0
      %2789 = vmatprep.subr.mxu0 0.0
      %2790 = vmatpush1.msra.mxu0 0.0
      %2791 = vmatprep.subr.mxu0 0.0
      %2792 = vmatpush1.msra.mxu0 0.0
      %2793 = vmatprep.subr.mxu0 0.0
      %2794 = vmatpush1.msra.mxu0 0.0
      %2795 = vmatprep.subr.mxu0 0.0
      %2796 = vmatpush1.msra.mxu0 0.0
      %2797 = vmatprep.subr.mxu0 0.0
      %2798 = vmatpush1.msra.mxu0 0.0
      %2799 = vmatprep.subr.mxu0 0.0
      %2800 = vmatpush1.msra.mxu0 0.0
      %2801 = vmatprep.subr.mxu0 0.0
      %2802 = vmatpush1.msra.mxu0 0.0
      %2803 = vmatprep.subr.mxu0 0.0
      %2804 = vmatpush1.msra.mxu0 0.0
      %2805 = vmatprep.subr.mxu0 0.0
      %2806 = vmatpush1.msra.mxu0 0.0
      %2807 = vmatprep.subr.mxu0 0.0
      %2808 = vmatpush1.msra.mxu0 0.0
      %2809 = vmatprep.subr.mxu0 0.0
      %2810 = vmatpush1.msra.mxu0 0.0
      %2811 = vmatprep.subr.mxu0 0.0
      %2812 = vmatpush1.msra.mxu0 0.0
      %2813 = vmatprep.subr.mxu0 0.0
      %2814 = vmatpush1.msra.mxu0 0.0
      %2815 = vmatprep.subr.mxu0 0.0
      %2816 = vmatpush1.msra.mxu0 0.0
      %2817 = vmatprep.subr.mxu0 0.0
      %2818 = vmatpush1.msra.mxu0 0.0
      %2819 = vmatprep.subr.mxu0 0.0
      %2820 = vmatpush1.msra.mxu0 0.0
      %2821 = vmatprep.subr.mxu0 0.0
      %2822 = vmatpush1.msra.mxu0 0.0
      %2823 = vmatprep.subr.mxu0 0.0
      %2824 = vmatpush1.msra.mxu0 0.0
      %2825 = vmatprep.subr.mxu0 0.0
      %2826 = vmatpush1.msra.mxu0 0.0
      %2827 = vmatprep.subr.mxu0 0.0
      %2828 = vmatpush1.msra.mxu0 0.0
      %2829 = vmatprep.subr.mxu0 0.0
      %2830 = vmatpush1.msra.mxu0 0.0
      %2831 = vmatprep.subr.mxu0 0.0
      %2832 = vmatpush1.msra.mxu0 0.0
      %2833 = vmatprep.subr.mxu0 0.0
      %2834 = vmatpush1.msra.mxu0 0.0
      %2835 = vmatprep.subr.mxu0 0.0
      %2836 = vmatpush1.msra.mxu0 0.0
      %2837 = vmatprep.subr.mxu0 0.0
      %2838 = vmatpush1.msra.mxu0 0.0
      %2839 = vmatprep.mubr.f32.mxu0 0.0
      %2840 = vmatmul.mubr.f32.gmra.mrb[0].mxu0 %v2773
      %v2841 = vpop.f32.mrb[0].mxu0
      %v2842 = vadd.f32 0.0, %v2841
      %v2843 = vpop.f32.mrb[0].mxu0
      %2844 = vdwg.mxu0
      %v2846 = vsel %vm1215, %v2764, 0
      %2848 = vmatprep.subr.mxu0 0.0
      %2849 = vmatpush1.msra.mxu0 %v2770
      %2850 = vmatprep.subr.mxu0 0.0
      %2851 = vmatpush1.msra.mxu0 %v2771
      %2852 = vmatprep.subr.mxu0 0.0
      %2853 = vmatpush1.msra.mxu0 0.0
      %2854 = vmatprep.subr.mxu0 0.0
      %2855 = vmatpush1.msra.mxu0 0.0
      %2856 = vmatprep.subr.mxu0 0.0
      %2857 = vmatpush1.msra.mxu0 0.0
      %2858 = vmatprep.subr.mxu0 0.0
      %2859 = vmatpush1.msra.mxu0 0.0
      %2860 = vmatprep.subr.mxu0 0.0
      %2861 = vmatpush1.msra.mxu0 0.0
      %2862 = vmatprep.subr.mxu0 0.0
      %2863 = vmatpush1.msra.mxu0 0.0
      %2864 = vmatprep.subr.mxu0 0.0
      %2865 = vmatpush1.msra.mxu0 0.0
      %2866 = vmatprep.subr.mxu0 0.0
      %2867 = vmatpush1.msra.mxu0 0.0
      %2868 = vmatprep.subr.mxu0 0.0
      %2869 = vmatpush1.msra.mxu0 0.0
      %2870 = vmatprep.subr.mxu0 0.0
      %2871 = vmatpush1.msra.mxu0 0.0
      %2872 = vmatprep.subr.mxu0 0.0
      %2873 = vmatpush1.msra.mxu0 0.0
      %2874 = vmatprep.subr.mxu0 0.0
      %2875 = vmatpush1.msra.mxu0 0.0
      %2876 = vmatprep.subr.mxu0 0.0
      %2877 = vmatpush1.msra.mxu0 0.0
      %2878 = vmatprep.subr.mxu0 0.0
      %2879 = vmatpush1.msra.mxu0 0.0
      %2880 = vmatprep.subr.mxu0 0.0
      %2881 = vmatpush1.msra.mxu0 0.0
      %2882 = vmatprep.subr.mxu0 0.0
      %2883 = vmatpush1.msra.mxu0 0.0
      %2884 = vmatprep.subr.mxu0 0.0
      %2885 = vmatpush1.msra.mxu0 0.0
      %2886 = vmatprep.subr.mxu0 0.0
      %2887 = vmatpush1.msra.mxu0 0.0
      %2888 = vmatprep.subr.mxu0 0.0
      %2889 = vmatpush1.msra.mxu0 0.0
      %2890 = vmatprep.subr.mxu0 0.0
      %2891 = vmatpush1.msra.mxu0 0.0
      %2892 = vmatprep.subr.mxu0 0.0
      %2893 = vmatpush1.msra.mxu0 0.0
      %2894 = vmatprep.subr.mxu0 0.0
      %2895 = vmatpush1.msra.mxu0 0.0
      %2896 = vmatprep.subr.mxu0 0.0
      %2897 = vmatpush1.msra.mxu0 0.0
      %2898 = vmatprep.subr.mxu0 0.0
      %2899 = vmatpush1.msra.mxu0 0.0
      %2900 = vmatprep.subr.mxu0 0.0
      %2901 = vmatpush1.msra.mxu0 0.0
      %2902 = vmatprep.subr.mxu0 0.0
      %2903 = vmatpush1.msra.mxu0 0.0
      %2904 = vmatprep.subr.mxu0 0.0
      %2905 = vmatpush1.msra.mxu0 0.0
      %2906 = vmatprep.subr.mxu0 0.0
      %2907 = vmatpush1.msra.mxu0 0.0
      %2908 = vmatprep.subr.mxu0 0.0
      %2909 = vmatpush1.msra.mxu0 0.0
      %2910 = vmatprep.subr.mxu0 0.0
      %2911 = vmatpush1.msra.mxu0 0.0
      %2912 = vmatprep.mubr.f32.mxu0 0.0
      %2913 = vmatmul.mubr.f32.gmra.mrb[0].mxu0 %v2846
      %v2914 = vpop.f32.mrb[0].mxu0
      %v2915 = vadd.f32 0.0, %v2914
      %v2916 = vpop.f32.mrb[0].mxu0
      %2917 = vdwg.mxu0
      %v2918 = vadd.f32 %v2842, %v2915
      %s2919 = scalar_lea.vmem %s11, 1
      %v2920 = vld [vmem:[%s2919] sm:$0x1]
      %v2922 = vlaneseq
      %v2923 = vshrl.u32 %v2922, 7
      %v2924 = vsub.s32 0, %v2923
      %v2925 = vrot.slane %v2920, %v2924
      %v2927 = vadd.f32 %v2918, %v2925
      %v2928 = vadd.f32 %v2927, %v1947
      %s2929 = scalar_lea.vmem %s12, 1
      %v2930 = vld [vmem:[%s2929] sm:$0x1]
      %s2931 = scalar_lea.vmem %s13, 1
      %v2932 = vld [vmem:[%s2931] sm:$0x1]
      %v2933 = vsel %vm696, %v2928, 0.0
      %2934 = vadd.xlane.f32.xlu0 %v2933
      %v2935 = vpop.xlane.xlu0 %2934
      %v2936 = vmul.f32 %v2935, %v700
      %v2937 = vsub.f32 %v2928, %v2936
      %v2938 = vmul.f32 %v2937, %v2937
      %v2939 = vsel %vm696, %v2938, 0.0
      %2940 = vadd.xlane.f32.xlu0 %v2939
      %v2941 = vpop.xlane.xlu0 %2940
      %v2942 = vmul.f32 %v2941, %v700
      %v2943 = vadd.f32 %v2942, 1e-05
      %v2944 = vrsqrt.pop %v2943
      %v2945 = vmul.f32 %v2937, %v2944
      %v2947 = vlaneseq
      %v2948 = vshrl.u32 %v2947, 7
      %v2949 = vsub.s32 0, %v2948
      %v2950 = vrot.slane %v2930, %v2949
      %v2952 = vmul.f32 %v2945, %v2950
      %v2954 = vlaneseq
      %v2955 = vshrl.u32 %v2954, 7
      %v2956 = vsub.s32 0, %v2955
      %v2957 = vrot.slane %v2932, %v2956
      %v2959 = vadd.f32 %v2952, %v2957
      %s2960 = scalar_lea.vmem %s14, 32
      %v2961 = vld [vmem:[%s2960] sm:$0xff]
      %v2962 = vld [vmem:[%s2960 + $0x8] sm:$0xff]
      %v2963 = vld [vmem:[%s2960 + $0x10] sm:$0xff]
      %v2964 = vld [vmem:[%s2960 + $0x18] sm:$0xff]
      %s2965 = scalar_lea.vmem %s15, 1
      %v2966 = vld [vmem:[%s2965] sm:$0x1]
      %v2968 = vlaneseq
      %v2969 = vshrl.u32 %v2968, 7
      %v2970 = vsub.s32 0, %v2969
      %v2971 = vrot.slane %v2966, %v2970
      %v2974 = vsel %vm696, %v2959, 0
      %2976 = vmatprep.subr.mxu0 0.0
      %2977 = vmatpush1.msra.mxu0 %v2961
      %2978 = vmatprep.subr.mxu0 0.0
      %2979 = vmatpush1.msra.mxu0 %v2962
      %2980 = vmatprep.subr.mxu0 0.0
      %2981 = vmatpush1.msra.mxu0 %v2963
      %2982 = vmatprep.subr.mxu0 0.0
      %2983 = vmatpush1.msra.mxu0 %v2964
      %2984 = vmatprep.subr.mxu0 0.0
      %2985 = vmatpush1.msra.mxu0 0.0
      %2986 = vmatprep.subr.mxu0 0.0
      %2987 = vmatpush1.msra.mxu0 0.0
      %2988 = vmatprep.subr.mxu0 0.0
      %2989 = vmatpush1.msra.mxu0 0.0
      %2990 = vmatprep.subr.mxu0 0.0
      %2991 = vmatpush1.msra.mxu0 0.0
      %2992 = vmatprep.subr.mxu0 0.0
      %2993 = vmatpush1.msra.mxu0 0.0
      %2994 = vmatprep.subr.mxu0 0.0
      %2995 = vmatpush1.msra.mxu0 0.0
      %2996 = vmatprep.subr.mxu0 0.0
      %2997 = vmatpush1.msra.mxu0 0.0
      %2998 = vmatprep.subr.mxu0 0.0
      %2999 = vmatpush1.msra.mxu0 0.0
      %3000 = vmatprep.subr.mxu0 0.0
      %3001 = vmatpush1.msra.mxu0 0.0
      %3002 = vmatprep.subr.mxu0 0.0
      %3003 = vmatpush1.msra.mxu0 0.0
      %3004 = vmatprep.subr.mxu0 0.0
      %3005 = vmatpush1.msra.mxu0 0.0
      %3006 = vmatprep.subr.mxu0 0.0
      %3007 = vmatpush1.msra.mxu0 0.0
      %3008 = vmatprep.subr.mxu0 0.0
      %3009 = vmatpush1.msra.mxu0 0.0
      %3010 = vmatprep.subr.mxu0 0.0
      %3011 = vmatpush1.msra.mxu0 0.0
      %3012 = vmatprep.subr.mxu0 0.0
      %3013 = vmatpush1.msra.mxu0 0.0
      %3014 = vmatprep.subr.mxu0 0.0
      %3015 = vmatpush1.msra.mxu0 0.0
      %3016 = vmatprep.subr.mxu0 0.0
      %3017 = vmatpush1.msra.mxu0 0.0
      %3018 = vmatprep.subr.mxu0 0.0
      %3019 = vmatpush1.msra.mxu0 0.0
      %3020 = vmatprep.subr.mxu0 0.0
      %3021 = vmatpush1.msra.mxu0 0.0
      %3022 = vmatprep.subr.mxu0 0.0
      %3023 = vmatpush1.msra.mxu0 0.0
      %3024 = vmatprep.subr.mxu0 0.0
      %3025 = vmatpush1.msra.mxu0 0.0
      %3026 = vmatprep.subr.mxu0 0.0
      %3027 = vmatpush1.msra.mxu0 0.0
      %3028 = vmatprep.subr.mxu0 0.0
      %3029 = vmatpush1.msra.mxu0 0.0
      %3030 = vmatprep.subr.mxu0 0.0
      %3031 = vmatpush1.msra.mxu0 0.0
      %3032 = vmatprep.subr.mxu0 0.0
      %3033 = vmatpush1.msra.mxu0 0.0
      %3034 = vmatprep.subr.mxu0 0.0
      %3035 = vmatpush1.msra.mxu0 0.0
      %3036 = vmatprep.subr.mxu0 0.0
      %3037 = vmatpush1.msra.mxu0 0.0
      %3038 = vmatprep.subr.mxu0 0.0
      %3039 = vmatpush1.msra.mxu0 0.0
      %3040 = vmatprep.mubr.f32.mxu0 0.0
      %3041 = vmatmul.mubr.f32.gmra.mrb[0].mxu0 %v2974
      %v3042 = vpop.f32.mrb[0].mxu0
      %v3043 = vadd.f32 %v2971, %v3042
      %v3044 = vpop.f32.mrb[0].mxu0
      %3045 = vdwg.mxu0
      %v3046 = vmul.f32 %v3043, 0.5
      %v3047 = vmul.f32 %v3043, 0.044715
      %v3048 = vmul.f32 %v3047, %v3043
      %v3049 = vmul.f32 %v3048, %v3043
      %v3050 = vadd.f32 %v3043, %v3049
      %v3051 = vmul.f32 %v3050, 0.7978846
      %v3052 = vtanh.pop %v3051
      %v3053 = vadd.f32 %v3052, 1.0
      %v3054 = vmul.f32 %v3046, %v3053
      %s3055 = scalar_lea.vmem %s16, 64
      %v3056 = vld [vmem:[%s3055] sm:$0xff]
      %v3057 = vld [vmem:[%s3055 + $0x8] sm:$0xff]
      %v3058 = vld [vmem:[%s3055 + $0x10] sm:$0xff]
      %v3059 = vld [vmem:[%s3055 + $0x18] sm:$0xff]
      %v3060 = vld [vmem:[%s3055 + $0x20] sm:$0xff]
      %v3061 = vld [vmem:[%s3055 + $0x28] sm:$0xff]
      %v3062 = vld [vmem:[%s3055 + $0x30] sm:$0xff]
      %v3063 = vld [vmem:[%s3055 + $0x38] sm:$0xff]
      %s3064 = scalar_lea.vmem %s17, 1
      %v3065 = vld [vmem:[%s3064] sm:$0x1]
      %v3067 = vlaneseq
      %v3068 = vshrl.u32 %v3067, 7
      %v3069 = vsub.s32 0, %v3068
      %v3070 = vrot.slane %v3065, %v3069
      %v3073 = vsel %vm1844, %v3054, 0
      %3075 = vmatprep.subr.mxu0 0.0
      %3076 = vmatpush1.msra.mxu0 %v3056
      %3077 = vmatprep.subr.mxu0 0.0
      %3078 = vmatpush1.msra.mxu0 %v3057
      %3079 = vmatprep.subr.mxu0 0.0
      %3080 = vmatpush1.msra.mxu0 %v3058
      %3081 = vmatprep.subr.mxu0 0.0
      %3082 = vmatpush1.msra.mxu0 %v3059
      %3083 = vmatprep.subr.mxu0 0.0
      %3084 = vmatpush1.msra.mxu0 %v3060
      %3085 = vmatprep.subr.mxu0 0.0
      %3086 = vmatpush1.msra.mxu0 %v3061
      %3087 = vmatprep.subr.mxu0 0.0
      %3088 = vmatpush1.msra.mxu0 %v3062
      %3089 = vmatprep.subr.mxu0 0.0
      %3090 = vmatpush1.msra.mxu0 %v3063
      %3091 = vmatprep.subr.mxu0 0.0
      %3092 = vmatpush1.msra.mxu0 0.0
      %3093 = vmatprep.subr.mxu0 0.0
      %3094 = vmatpush1.msra.mxu0 0.0
      %3095 = vmatprep.subr.mxu0 0.0
      %3096 = vmatpush1.msra.mxu0 0.0
      %3097 = vmatprep.subr.mxu0 0.0
      %3098 = vmatpush1.msra.mxu0 0.0
      %3099 = vmatprep.subr.mxu0 0.0
      %3100 = vmatpush1.msra.mxu0 0.0
      %3101 = vmatprep.subr.mxu0 0.0
      %3102 = vmatpush1.msra.mxu0 0.0
      %3103 = vmatprep.subr.mxu0 0.0
      %3104 = vmatpush1.msra.mxu0 0.0
      %3105 = vmatprep.subr.mxu0 0.0
      %3106 = vmatpush1.msra.mxu0 0.0
      %3107 = vmatprep.subr.mxu0 0.0
      %3108 = vmatpush1.msra.mxu0 0.0
      %3109 = vmatprep.subr.mxu0 0.0
      %3110 = vmatpush1.msra.mxu0 0.0
      %3111 = vmatprep.subr.mxu0 0.0
      %3112 = vmatpush1.msra.mxu0 0.0
      %3113 = vmatprep.subr.mxu0 0.0
      %3114 = vmatpush1.msra.mxu0 0.0
      %3115 = vmatprep.subr.mxu0 0.0
      %3116 = vmatpush1.msra.mxu0 0.0
      %3117 = vmatprep.subr.mxu0 0.0
      %3118 = vmatpush1.msra.mxu0 0.0
      %3119 = vmatprep.subr.mxu0 0.0
      %3120 = vmatpush1.msra.mxu0 0.0
      %3121 = vmatprep.subr.mxu0 0.0
      %3122 = vmatpush1.msra.mxu0 0.0
      %3123 = vmatprep.subr.mxu0 0.0
      %3124 = vmatpush1.msra.mxu0 0.0
      %3125 = vmatprep.subr.mxu0 0.0
      %3126 = vmatpush1.msra.mxu0 0.0
      %3127 = vmatprep.subr.mxu0 0.0
      %3128 = vmatpush1.msra.mxu0 0.0
      %3129 = vmatprep.subr.mxu0 0.0
      %3130 = vmatpush1.msra.mxu0 0.0
      %3131 = vmatprep.subr.mxu0 0.0
      %3132 = vmatpush1.msra.mxu0 0.0
      %3133 = vmatprep.subr.mxu0 0.0
      %3134 = vmatpush1.msra.mxu0 0.0
      %3135 = vmatprep.subr.mxu0 0.0
      %3136 = vmatpush1.msra.mxu0 0.0
      %3137 = vmatprep.subr.mxu0 0.0
      %3138 = vmatpush1.msra.mxu0 0.0
      %3139 = vmatprep.mubr.f32.mxu0 0.0
      %3140 = vmatmul.mubr.f32.gmra.mrb[0].mxu0 %v3073
      %v3141 = vpop.f32.mrb[0].mxu0
      %v3142 = vadd.f32 %v3070, %v3141
      %v3143 = vpop.f32.mrb[0].mxu0
      %3144 = vdwg.mxu0
      %v3145 = vadd.f32 %v3142, %v2959
      %s3146 = scalar_lea.vmem %s18, 1
      %v3147 = vld [vmem:[%s3146] sm:$0x1]
      %s3148 = scalar_lea.vmem %s19, 1
      %v3149 = vld [vmem:[%s3148] sm:$0x1]
      %v3150 = vsel %vm696, %v3145, 0.0
      %3151 = vadd.xlane.f32.xlu0 %v3150
      %v3152 = vpop.xlane.xlu0 %3151
      %v3153 = vmul.f32 %v3152, %v700
      %v3154 = vsub.f32 %v3145, %v3153
      %v3155 = vmul.f32 %v3154, %v3154
      %v3156 = vsel %vm696, %v3155, 0.0
      %3157 = vadd.xlane.f32.xlu0 %v3156
      %v3158 = vpop.xlane.xlu0 %3157
      %v3159 = vmul.f32 %v3158, %v700
      %v3160 = vadd.f32 %v3159, 1e-05
      %v3161 = vrsqrt.pop %v3160
      %v3162 = vmul.f32 %v3154, %v3161
      %v3164 = vlaneseq
      %v3165 = vshrl.u32 %v3164, 7
      %v3166 = vsub.s32 0, %v3165
      %v3167 = vrot.slane %v3147, %v3166
      %v3169 = vmul.f32 %v3162, %v3167
      %v3171 = vlaneseq
      %v3172 = vshrl.u32 %v3171, 7
      %v3173 = vsub.s32 0, %v3172
      %v3174 = vrot.slane %v3149, %v3173
      %v3176 = vadd.f32 %v3169, %v3174
      %v3177 = vld [vmem:[%s20] sm:$0xff]
      %v3178 = vld [vmem:[%s20 + $0x8] sm:$0xff]
      %v3179 = vld [vmem:[%s20 + $0x10] sm:$0xff]
      %v3180 = vld [vmem:[%s20 + $0x18] sm:$0xff]
      %v3181 = vld [vmem:[%s21] sm:$0x1]
      %v3183 = vlaneseq
      %v3184 = vshrl.u32 %v3183, 7
      %v3185 = vsub.s32 0, %v3184
      %v3186 = vrot.slane %v3181, %v3185
      %v3189 = vsel %vm696, %v3176, 0
      %3191 = vmatprep.subr.mxu0 0.0
      %3192 = vmatpush1.msra.mxu0 %v3177
      %3193 = vmatprep.subr.mxu0 0.0
      %3194 = vmatpush1.msra.mxu0 %v3178
      %3195 = vmatprep.subr.mxu0 0.0
      %3196 = vmatpush1.msra.mxu0 %v3179
      %3197 = vmatprep.subr.mxu0 0.0
      %3198 = vmatpush1.msra.mxu0 %v3180
      %3199 = vmatprep.subr.mxu0 0.0
      %3200 = vmatpush1.msra.mxu0 0.0
      %3201 = vmatprep.subr.mxu0 0.0
      %3202 = vmatpush1.msra.mxu0 0.0
      %3203 = vmatprep.subr.mxu0 0.0
      %3204 = vmatpush1.msra.mxu0 0.0
      %3205 = vmatprep.subr.mxu0 0.0
      %3206 = vmatpush1.msra.mxu0 0.0
      %3207 = vmatprep.subr.mxu0 0.0
      %3208 = vmatpush1.msra.mxu0 0.0
      %3209 = vmatprep.subr.mxu0 0.0
      %3210 = vmatpush1.msra.mxu0 0.0
      %3211 = vmatprep.subr.mxu0 0.0
      %3212 = vmatpush1.msra.mxu0 0.0
      %3213 = vmatprep.subr.mxu0 0.0
      %3214 = vmatpush1.msra.mxu0 0.0
      %3215 = vmatprep.subr.mxu0 0.0
      %3216 = vmatpush1.msra.mxu0 0.0
      %3217 = vmatprep.subr.mxu0 0.0
      %3218 = vmatpush1.msra.mxu0 0.0
      %3219 = vmatprep.subr.mxu0 0.0
      %3220 = vmatpush1.msra.mxu0 0.0
      %3221 = vmatprep.subr.mxu0 0.0
      %3222 = vmatpush1.msra.mxu0 0.0
      %3223 = vmatprep.subr.mxu0 0.0
      %3224 = vmatpush1.msra.mxu0 0.0
      %3225 = vmatprep.subr.mxu0 0.0
      %3226 = vmatpush1.msra.mxu0 0.0
      %3227 = vmatprep.subr.mxu0 0.0
      %3228 = vmatpush1.msra.mxu0 0.0
      %3229 = vmatprep.subr.mxu0 0.0
      %3230 = vmatpush1.msra.mxu0 0.0
      %3231 = vmatprep.subr.mxu0 0.0
      %3232 = vmatpush1.msra.mxu0 0.0
      %3233 = vmatprep.subr.mxu0 0.0
      %3234 = vmatpush1.msra.mxu0 0.0
      %3235 = vmatprep.subr.mxu0 0.0
      %3236 = vmatpush1.msra.mxu0 0.0
      %3237 = vmatprep.subr.mxu0 0.0
      %3238 = vmatpush1.msra.mxu0 0.0
      %3239 = vmatprep.subr.mxu0 0.0
      %3240 = vmatpush1.msra.mxu0 0.0
      %3241 = vmatprep.subr.mxu0 0.0
      %3242 = vmatpush1.msra.mxu0 0.0
      %3243 = vmatprep.subr.mxu0 0.0
      %3244 = vmatpush1.msra.mxu0 0.0
      %3245 = vmatprep.subr.mxu0 0.0
      %3246 = vmatpush1.msra.mxu0 0.0
      %3247 = vmatprep.subr.mxu0 0.0
      %3248 = vmatpush1.msra.mxu0 0.0
      %3249 = vmatprep.subr.mxu0 0.0
      %3250 = vmatpush1.msra.mxu0 0.0
      %3251 = vmatprep.subr.mxu0 0.0
      %3252 = vmatpush1.msra.mxu0 0.0
      %3253 = vmatprep.subr.mxu0 0.0
      %3254 = vmatpush1.msra.mxu0 0.0
      %3255 = vmatprep.mubr.f32.mxu0 0.0
      %3256 = vmatmul.mubr.f32.gmra.mrb[0].mxu0 %v3189
      %v3257 = vpop.f32.mrb[0].mxu0
      %v3258 = vadd.f32 %v3186, %v3257
      %v3259 = vpop.f32.mrb[0].mxu0
      %3260 = vdwg.mxu0
      %3261 = vst [vmem:[%s692] sm:$0xff] %v3258
      %p3262 = scmp.lt.s32.totalorder %s33, 1
      %s3263 = scalar_select %p3262, %s33, 1
      %s3264 = smul.addr %s3263, 8
      %s3265 = scalar_lea.vmem %s22, %s3264
      // Predicated region
      $region109: #{camembert_pos_forward.1} parent=107 // pred_check
        %p3266 = pneg %p523
      $region110: #{camembert_pos_forward.1} parent=107 // pred_check_branch
        %3268 = sbr.rel (%p3266) target = $region112
      $region111: #{camembert_pos_forward.1} parent=107 // pred_region
        _
      $region112: #{camembert_pos_forward.1} parent=107 // pred_fallthru
        _
    $region108: #{camembert_pos_forward.1} parent=5 // pred_fallthru
      _
    %p3269 = scmp.le.s32.totalorder 2, %s28
    // Predicated region
    $region113: #{camembert_pos_forward.1} parent=5 // pred_check
      %p3270 = pneg %p3269
    $region114: #{camembert_pos_forward.1} parent=5 // pred_check_branch
      %3272 = sbr.rel (%p3270) target = $region116
    $region115: #{camembert_pos_forward.1} parent=5 // pred_region
      %s3273 = ssub.s32 %s28, 2
      // Predicated region
      $region117: #{camembert_pos_forward.1} parent=115 // pred_check
        %p3274 = pneg %p529
      $region118: #{camembert_pos_forward.1} parent=115 // pred_check_branch
        %3276 = sbr.rel (%p3274) target = $region120
      $region119: #{camembert_pos_forward.1} parent=115 // pred_region
        %p3277 = scmp.lt.s32.totalorder %s34, 1
        %s3278 = scalar_select %p3277, %s34, 1
        %s3279 = smul.addr %s3278, 8
        %s3280 = scalar_lea.vmem %s22, %s3279
      $region120: #{camembert_pos_forward.1} parent=115 // pred_fallthru
        _
    $region116: #{camembert_pos_forward.1} parent=5 // pred_fallthru
      _
  $region6: #{camembert_pos_forward.1} parent=0 // loop_footer
    %s32 = sadd.s32 1, %s28
  $region7: #{camembert_pos_forward.1} parent=0 // loop_footer_branch
    %27 = sbr.rel target = $region3
  $region8: #{camembert_pos_forward.1} parent=0 // loop_exit
    _

</llo_original>
